<compile_context>
chip_gen: v5e
topology: v5e:2x2
jax: 0.10.0
libtpu: 0.0.40
codegen_flags: <defaults>
</compile_context>

<pallas_src>
import jax
import jax.numpy as jnp
from jax.experimental import pallas as pl
from jax.experimental.pallas import tpu as pltpu


# --------------------------------------------------------------------------
# Fused Pallas kernel: whole InferenceNet forward in one call
# --------------------------------------------------------------------------
def _inference_kernel(alpha_ref, p_ref, q_ref,
                      m1_ref, cb1_ref, e1_ref, d1_ref,
                      m2_ref, cb2_ref, e2_ref, d2_ref,
                      m3_ref, cb3_ref,
                      fc1w_ref, fc1b_ref, fc2w_ref, fc2b_ref,
                      outw_ref, outb_ref,
                      o_ref):
    f32 = jnp.float32
    bf16 = jnp.bfloat16

    def dot(a, b):
        return jnp.dot(a, b, preferred_element_type=f32)

    # ---- Stage 0: 10x10 avg-pool of the (280,280) alpha plane + /255, done
    # as two bf16 0/1 selection matmuls; the scale is applied once in f32.
    x = dot(dot(p_ref[...], alpha_ref[...]).astype(bf16), q_ref[...])   # (28, 28)
    x = (x * (1.0 / (100.0 * 255.0))).astype(bf16)

    # ---- Valid conv (stride 1) + ReLU on an (H, C*W) slab via 4 band matmuls:
    #      y (Ho, O*Wo) = relu(sum_ky x[ky:ky+Ho, :] @ M[ky] + bias_row)
    def conv_relu(x2d, m_ref, bias_ref):
        ho = x2d.shape[0] - 4 + 1
        acc = None
        for ky in range(4):
            t = dot(x2d[ky:ky + ho, :], m_ref[ky])
            acc = t if acc is None else acc + t
        return jnp.maximum(acc + bias_ref[...], 0.0).astype(bf16)

    # ---- 2x2/2 max-pool (floor mode): one stacked row-selection matmul + max
    # of the two row halves, one stacked lane-selection matmul + max of the
    # two lane halves.
    def maxpool(x2d, e_ref, d_ref, h2, cw2):
        xh = dot(e_ref[...], x2d)                                   # (2*H2, C*W)
        xh = jnp.maximum(xh[:h2, :], xh[h2:, :]).astype(bf16)       # (H2,  C*W)
        xw = dot(xh, d_ref[...])                                    # (H2, 2*C*W2)
        return jnp.maximum(xw[:, :cw2], xw[:, cw2:]).astype(bf16)   # (H2,  C*W2)

    x = conv_relu(x, m1_ref, cb1_ref)          # (25, 8*25=200)
    x = maxpool(x, e1_ref, d1_ref, 12, 96)     # (12, 8*12= 96)
    x = conv_relu(x, m2_ref, cb2_ref)          # ( 9, 16*9=144)
    x = maxpool(x, e2_ref, d2_ref, 4, 64)      # ( 4, 16*4= 64)
    x = conv_relu(x, m3_ref, cb3_ref)          # ( 1, 32)  == flattened features

    # ---- Row-oriented FC stack (weights pre-transposed to (in, out)).
    x = jnp.maximum(dot(x, fc1w_ref[...]) + fc1b_ref[...], 0.0).astype(bf16)   # (1, 320)
    x = jnp.maximum(dot(x, fc2w_ref[...]) + fc2b_ref[...], 0.0).astype(bf16)   # (1, 640)
    logits = dot(x, outw_ref[...]) + outb_ref[...]                              # (1, 10)

    # ---- softmax over lanes (exact division so probabilities sum to 1).
    m = jnp.max(logits, axis=-1, keepdims=True)
    e = jnp.exp(logits - m)
    o_ref[...] = (e / jnp.sum(e, axis=-1, keepdims=True)).astype(o_ref.dtype)


_PARAM_ORDER = ("P", "Q", "M1", "cb1", "E1", "D1", "M2", "cb2", "E2", "D2",
                "M3", "cb3", "fc1_wT", "fc1_b", "fc2_wT", "fc2_b",
                "out_wT", "out_b")


def inference_net(img, params):
    """img: (280, 280, 4) float32 with values in [0, 255)."""
    # Drop the unused RGB channels BEFORE the kernel DMA and feed bf16.
    alpha = img.reshape(280, 280, 4)[:, :, 3].astype(jnp.bfloat16)   # (280, 280)
    operands = (alpha,) + tuple(params[k] for k in _PARAM_ORDER)
    return pl.pallas_call(
        _inference_kernel,
        out_shape=jax.ShapeDtypeStruct((1, 10), jnp.float32),
        in_specs=[pl.BlockSpec(memory_space=pltpu.MemorySpace.VMEM)] * len(operands),
        out_specs=pl.BlockSpec(memory_space=pltpu.MemorySpace.VMEM),
    )(*operands)


# --------------------------------------------------------------------------
# One-time (init) construction of kernel-ready constant matrices
# --------------------------------------------------------------------------
def _stage0_mats():
    """0/1 height/width window-sum matrices for the (280, 280) alpha plane."""
    h = jnp.arange(280)
    i = jnp.arange(28)
    P = ((h[None, :] // 10) == i[:, None]).astype(jnp.bfloat16)    # (28, 280)
    Q = ((h[:, None] // 10) == i[None, :]).astype(jnp.bfloat16)    # (280, 28)
    return P, Q


def _conv_right_mats(w, W):
    """PyTorch conv weight (O, C, K, K) -> right-multiply band matrices
    M (K, C*W, O*Wo) such that, with the activation stored as x2d (H, C*W)
    (lane index = c*W + px):
        y2d (Ho, O*Wo) = sum_ky x2d[ky:ky+Ho, :] @ M[ky]
    implements the valid stride-1 cross-correlation conv."""
    O, C, K, _ = w.shape
    Wo = W - K + 1
    r = jnp.arange(C * W)                    # input lane index
    s = jnp.arange(O * Wo)                   # output lane index
    c, q = r // W, r % W
    o, px = s // Wo, s % Wo
    kx = q[:, None] - px[None, :]                                  # (C*W, O*Wo)
    valid = (kx >= 0) & (kx < K)
    kxc = jnp.clip(kx, 0, K - 1)
    c2 = jnp.broadcast_to(c[:, None], kx.shape)
    o2 = jnp.broadcast_to(o[None, :], kx.shape)
    mats = []
    for ky in range(K):
        wk = w[:, :, ky, :]                                        # (O, C, K)
        g = wk[o2, c2, kxc]                                        # (C*W, O*Wo)
        mats.append(jnp.where(valid, g, 0.0))
    return jnp.stack(mats).astype(jnp.bfloat16)                    # (K, C*W, O*Wo)


def _pool_mats(C, H, W):
    """2x2/2 max-pool (floor mode) selection matrices for an (H, C*W) slab:
       E_cat (2*H2, H): rows [di*H2+i] select input row 2i+di,
       D_cat (C*W, 2*C*W2): cols [dj*C*W2 + c*W2 + j] select lane c*W + 2j+dj.
       pooled = max over halves of (E_cat @ x) then of (that @ D_cat)."""
    H2, W2 = H // 2, W // 2
    hi = jnp.arange(H)
    i = jnp.arange(H2)
    E_cat = jnp.concatenate(
        [(hi[None, :] == (2 * i + di)[:, None]).astype(jnp.float32)
         for di in (0, 1)], axis=0)                                # (2*H2, H)
    li = jnp.arange(C * W)
    c_in, x_in = li // W, li % W
    so = jnp.arange(C * W2)
    c_out, j = so // W2, so % W2
    D_cat = jnp.concatenate(
        [((c_in[:, None] == c_out[None, :]) &
          (x_in[:, None] == 2 * j[None, :] + dj)).astype(jnp.float32)
         for dj in (0, 1)], axis=1)                                # (C*W, 2*C*W2)
    return E_cat.astype(jnp.bfloat16), D_cat.astype(jnp.bfloat16)


def init_params(key):
    """Deterministic synthetic weights (PyTorch-default-style uniform init)."""
    def uni(k, shape, fan_in):
        bound = 1.0 / float(fan_in) ** 0.5
        return jax.random.uniform(k, shape, jnp.float32, -bound, bound)

    ks = jax.random.split(key, 12)
    return {
        "conv1_w": uni(ks[0], (8, 1, 4, 4), 1 * 4 * 4),
        "conv1_b": uni(ks[1], (8,), 1 * 4 * 4),
        "conv2_w": uni(ks[2], (16, 8, 4, 4), 8 * 4 * 4),
        "conv2_b": uni(ks[3], (16,), 8 * 4 * 4),
        "conv3_w": uni(ks[4], (32, 16, 4, 4), 16 * 4 * 4),
        "conv3_b": uni(ks[5], (32,), 16 * 4 * 4),
        "fc1_w": uni(ks[6], (320, 32), 32),
        "fc1_b": uni(ks[7], (320,), 32),
        "fc2_w": uni(ks[8], (640, 320), 320),
        "fc2_b": uni(ks[9], (640,), 320),
        "out_w": uni(ks[10], (10, 640), 640),
        "out_b": uni(ks[11], (10,), 640),
    }


def prepare_inference_params(raw):
    """Turn raw PyTorch-layout weights into the kernel-ready constant set
    (bf16 matmul operands, f32 bias rows, fc weights pre-transposed)."""
    bf16, f32 = jnp.bfloat16, jnp.float32
    P, Q = _stage0_mats()
    E1, D1 = _pool_mats(C=8, H=25, W=25)
    E2, D2 = _pool_mats(C=16, H=9, W=9)
    return {
        "P": P, "Q": Q,
        "M1": _conv_right_mats(raw["conv1_w"], W=28),              # (4,  28, 200)
        "cb1": jnp.repeat(raw["conv1_b"], 25)[None, :].astype(f32),    # (1, 200)
        "E1": E1, "D1": D1,                                        # (24,25),(200,192)
        "M2": _conv_right_mats(raw["conv2_w"], W=12),              # (4,  96, 144)
        "cb2": jnp.repeat(raw["conv2_b"], 9)[None, :].astype(f32),     # (1, 144)
        "E2": E2, "D2": D2,                                        # (8,9), (144,128)
        "M3": _conv_right_mats(raw["conv3_w"], W=4),               # (4,  64,  32)
        "cb3": raw["conv3_b"][None, :].astype(f32),                    # (1,  32)
        "fc1_wT": raw["fc1_w"].T.astype(bf16), "fc1_b": raw["fc1_b"][None, :].astype(f32),
        "fc2_wT": raw["fc2_w"].T.astype(bf16), "fc2_b": raw["fc2_b"][None, :].astype(f32),
        "out_wT": raw["out_w"].T.astype(bf16), "out_b": raw["out_b"][None, :].astype(f32),
    }


# --------------------------------------------------------------------------
# Pure-JAX reference (f32) for a sanity check against the fused kernel
# --------------------------------------------------------------------------
def reference_forward(img, raw):
    alpha = img.reshape(280, 280, 4)[:, :, 3]
    x = alpha.reshape(28, 10, 28, 10).mean(axis=(1, 3)) / 255.0
    x = x[None, None]                                              # (1,1,28,28)

    def conv(x, w, b):
        y = jax.lax.conv_general_dilated(
            x, w, window_strides=(1, 1), padding="VALID",
            dimension_numbers=("NCHW", "OIHW", "NCHW"))
        return jax.nn.relu(y + b[None, :, None, None])

    def pool(x):
        return jax.lax.reduce_window(x, -jnp.inf, jax.lax.max,
                                     (1, 1, 2, 2), (1, 1, 2, 2), "VALID")

    x = pool(conv(x, raw["conv1_w"], raw["conv1_b"]))
    x = pool(conv(x, raw["conv2_w"], raw["conv2_b"]))
    x = conv(x, raw["conv3_w"], raw["conv3_b"])
    x = x.reshape(1, 32)
    x = jax.nn.relu(x @ raw["fc1_w"].T + raw["fc1_b"])
    x = jax.nn.relu(x @ raw["fc2_w"].T + raw["fc2_b"])
    x = x @ raw["out_w"].T + raw["out_b"]
    return jax.nn.softmax(x, axis=-1)


if __name__ == "__main__":
    key = jax.random.PRNGKey(0)
    pkey, xkey = jax.random.split(key)
    raw = init_params(pkey)
    params = prepare_inference_params(raw)
    # 280*280*4 pixel values in [0, 255), as InferenceNet.forward expects.
    img = jax.random.uniform(xkey, (280, 280, 4), jnp.float32, 0.0, 255.0)

    out = jax.jit(inference_net)(img, params)
    out = jax.block_until_ready(out)
    ref = jax.block_until_ready(jax.jit(reference_forward)(img, raw))

    assert out.shape == (1, 10)
    assert bool(jnp.isfinite(out).all())
    assert abs(float(out.sum()) - 1.0) < 1e-4          # softmax rows sum to 1
    assert bool(jnp.allclose(out, ref, rtol=0.0, atol=2e-2))
    print("KERNEL_OK")
</pallas_src>

<mosaic_0001>
module attributes {stable_mosaic.version = 11 : i64} {
  func.func @_inference_kernel(%arg0: memref<280x280xbf16, #tpu.memory_space<vmem>>, %arg1: memref<28x280xbf16, #tpu.memory_space<vmem>>, %arg2: memref<280x28xbf16, #tpu.memory_space<vmem>>, %arg3: memref<4x28x200xbf16, #tpu.memory_space<vmem>>, %arg4: memref<1x200xf32, #tpu.memory_space<vmem>>, %arg5: memref<24x25xbf16, #tpu.memory_space<vmem>>, %arg6: memref<200x192xbf16, #tpu.memory_space<vmem>>, %arg7: memref<4x96x144xbf16, #tpu.memory_space<vmem>>, %arg8: memref<1x144xf32, #tpu.memory_space<vmem>>, %arg9: memref<8x9xbf16, #tpu.memory_space<vmem>>, %arg10: memref<144x128xbf16, #tpu.memory_space<vmem>>, %arg11: memref<4x64x32xbf16, #tpu.memory_space<vmem>>, %arg12: memref<1x32xf32, #tpu.memory_space<vmem>>, %arg13: memref<32x320xbf16, #tpu.memory_space<vmem>>, %arg14: memref<1x320xf32, #tpu.memory_space<vmem>>, %arg15: memref<320x640xbf16, #tpu.memory_space<vmem>>, %arg16: memref<1x640xf32, #tpu.memory_space<vmem>>, %arg17: memref<640x10xbf16, #tpu.memory_space<vmem>>, %arg18: memref<1x10xf32, #tpu.memory_space<vmem>>, %arg19: memref<1x10xf32, #tpu.memory_space<vmem>>) attributes {dimension_semantics = [], scalar_prefetch = 0 : i64, scratch_operands = 0 : i64, tpu.core_type = #tpu.core_type<tc>} {
    %c0 = arith.constant 0 : index
    %c0_0 = arith.constant 0 : index
    %0 = vector.load %arg1[%c0, %c0_0] : memref<28x280xbf16, #tpu.memory_space<vmem>>, vector<28x280xbf16>
    %c0_1 = arith.constant 0 : index
    %c0_2 = arith.constant 0 : index
    %1 = vector.load %arg0[%c0_1, %c0_2] : memref<280x280xbf16, #tpu.memory_space<vmem>>, vector<280x280xbf16>
    %cst = arith.constant dense<0.000000e+00> : vector<28x280xf32>
    %2 = tpu.matmul %0, %1, %cst {dimension_numbers = #tpu.dot_dimension_numbers<[1], [0], [0], [1], [0, 0, 1, 1], [], []>} : vector<28x280xbf16>, vector<280x280xbf16>, vector<28x280xf32> -> vector<28x280xf32>
    %3 = arith.truncf %2 : vector<28x280xf32> to vector<28x280xbf16>
    %c0_3 = arith.constant 0 : index
    %c0_4 = arith.constant 0 : index
    %4 = vector.load %arg2[%c0_3, %c0_4] : memref<280x28xbf16, #tpu.memory_space<vmem>>, vector<280x28xbf16>
    %cst_5 = arith.constant dense<0.000000e+00> : vector<28x28xf32>
    %5 = tpu.matmul %3, %4, %cst_5 {dimension_numbers = #tpu.dot_dimension_numbers<[1], [0], [0], [1], [0, 0, 1, 1], [], []>} : vector<28x280xbf16>, vector<280x28xbf16>, vector<28x28xf32> -> vector<28x28xf32>
    %cst_6 = arith.constant 3.92156871E-5 : f32
    %6 = vector.broadcast %cst_6 : f32 to vector<28x28xf32>
    %7 = arith.mulf %5, %6 : vector<28x28xf32>
    %8 = arith.truncf %7 : vector<28x28xf32> to vector<28x28xbf16>
    %9 = vector.extract_strided_slice %8 {offsets = [0, 0], sizes = [25, 28], strides = [1, 1]} : vector<28x28xbf16> to vector<25x28xbf16>
    %c0_7 = arith.constant 0 : index
    %c0_8 = arith.constant 0 : index
    %c0_9 = arith.constant 0 : index
    %10 = vector.load %arg3[%c0_7, %c0_8, %c0_9] : memref<4x28x200xbf16, #tpu.memory_space<vmem>>, vector<1x28x200xbf16>
    %11 = vector.shape_cast %10 : vector<1x28x200xbf16> to vector<28x200xbf16>
    %cst_10 = arith.constant dense<0.000000e+00> : vector<25x200xf32>
    %12 = tpu.matmul %9, %11, %cst_10 {dimension_numbers = #tpu.dot_dimension_numbers<[1], [0], [0], [1], [0, 0, 1, 1], [], []>} : vector<25x28xbf16>, vector<28x200xbf16>, vector<25x200xf32> -> vector<25x200xf32>
    %13 = vector.extract_strided_slice %8 {offsets = [1, 0], sizes = [25, 28], strides = [1, 1]} : vector<28x28xbf16> to vector<25x28xbf16>
    %c1 = arith.constant 1 : index
    %c0_11 = arith.constant 0 : index
    %c0_12 = arith.constant 0 : index
    %14 = vector.load %arg3[%c1, %c0_11, %c0_12] : memref<4x28x200xbf16, #tpu.memory_space<vmem>>, vector<1x28x200xbf16>
    %15 = vector.shape_cast %14 : vector<1x28x200xbf16> to vector<28x200xbf16>
    %cst_13 = arith.constant dense<0.000000e+00> : vector<25x200xf32>
    %16 = tpu.matmul %13, %15, %cst_13 {dimension_numbers = #tpu.dot_dimension_numbers<[1], [0], [0], [1], [0, 0, 1, 1], [], []>} : vector<25x28xbf16>, vector<28x200xbf16>, vector<25x200xf32> -> vector<25x200xf32>
    %17 = arith.addf %12, %16 : vector<25x200xf32>
    %18 = vector.extract_strided_slice %8 {offsets = [2, 0], sizes = [25, 28], strides = [1, 1]} : vector<28x28xbf16> to vector<25x28xbf16>
    %c2 = arith.constant 2 : index
    %c0_14 = arith.constant 0 : index
    %c0_15 = arith.constant 0 : index
    %19 = vector.load %arg3[%c2, %c0_14, %c0_15] : memref<4x28x200xbf16, #tpu.memory_space<vmem>>, vector<1x28x200xbf16>
    %20 = vector.shape_cast %19 : vector<1x28x200xbf16> to vector<28x200xbf16>
    %cst_16 = arith.constant dense<0.000000e+00> : vector<25x200xf32>
    %21 = tpu.matmul %18, %20, %cst_16 {dimension_numbers = #tpu.dot_dimension_numbers<[1], [0], [0], [1], [0, 0, 1, 1], [], []>} : vector<25x28xbf16>, vector<28x200xbf16>, vector<25x200xf32> -> vector<25x200xf32>
    %22 = arith.addf %17, %21 : vector<25x200xf32>
    %23 = vector.extract_strided_slice %8 {offsets = [3, 0], sizes = [25, 28], strides = [1, 1]} : vector<28x28xbf16> to vector<25x28xbf16>
    %c3 = arith.constant 3 : index
    %c0_17 = arith.constant 0 : index
    %c0_18 = arith.constant 0 : index
    %24 = vector.load %arg3[%c3, %c0_17, %c0_18] : memref<4x28x200xbf16, #tpu.memory_space<vmem>>, vector<1x28x200xbf16>
    %25 = vector.shape_cast %24 : vector<1x28x200xbf16> to vector<28x200xbf16>
    %cst_19 = arith.constant dense<0.000000e+00> : vector<25x200xf32>
    %26 = tpu.matmul %23, %25, %cst_19 {dimension_numbers = #tpu.dot_dimension_numbers<[1], [0], [0], [1], [0, 0, 1, 1], [], []>} : vector<25x28xbf16>, vector<28x200xbf16>, vector<25x200xf32> -> vector<25x200xf32>
    %27 = arith.addf %22, %26 : vector<25x200xf32>
    %c0_20 = arith.constant 0 : index
    %c0_21 = arith.constant 0 : index
    %28 = vector.load %arg4[%c0_20, %c0_21] : memref<1x200xf32, #tpu.memory_space<vmem>>, vector<1x200xf32>
    %29 = vector.broadcast %28 : vector<1x200xf32> to vector<25x200xf32>
    %30 = arith.addf %27, %29 : vector<25x200xf32>
    %cst_22 = arith.constant 0.000000e+00 : f32
    %31 = vector.broadcast %cst_22 : f32 to vector<25x200xf32>
    %32 = arith.maximumf %30, %31 : vector<25x200xf32>
    %33 = arith.truncf %32 : vector<25x200xf32> to vector<25x200xbf16>
    %c0_23 = arith.constant 0 : index
    %c0_24 = arith.constant 0 : index
    %34 = vector.load %arg5[%c0_23, %c0_24] : memref<24x25xbf16, #tpu.memory_space<vmem>>, vector<24x25xbf16>
    %cst_25 = arith.constant dense<0.000000e+00> : vector<24x200xf32>
    %35 = tpu.matmul %34, %33, %cst_25 {dimension_numbers = #tpu.dot_dimension_numbers<[1], [0], [0], [1], [0, 0, 1, 1], [], []>} : vector<24x25xbf16>, vector<25x200xbf16>, vector<24x200xf32> -> vector<24x200xf32>
    %36 = vector.extract_strided_slice %35 {offsets = [0, 0], sizes = [12, 200], strides = [1, 1]} : vector<24x200xf32> to vector<12x200xf32>
    %37 = vector.extract_strided_slice %35 {offsets = [12, 0], sizes = [12, 200], strides = [1, 1]} : vector<24x200xf32> to vector<12x200xf32>
    %38 = arith.maximumf %36, %37 : vector<12x200xf32>
    %39 = arith.truncf %38 : vector<12x200xf32> to vector<12x200xbf16>
    %c0_26 = arith.constant 0 : index
    %c0_27 = arith.constant 0 : index
    %40 = vector.load %arg6[%c0_26, %c0_27] : memref<200x192xbf16, #tpu.memory_space<vmem>>, vector<200x192xbf16>
    %cst_28 = arith.constant dense<0.000000e+00> : vector<12x192xf32>
    %41 = tpu.matmul %39, %40, %cst_28 {dimension_numbers = #tpu.dot_dimension_numbers<[1], [0], [0], [1], [0, 0, 1, 1], [], []>} : vector<12x200xbf16>, vector<200x192xbf16>, vector<12x192xf32> -> vector<12x192xf32>
    %42 = vector.extract_strided_slice %41 {offsets = [0, 0], sizes = [12, 96], strides = [1, 1]} : vector<12x192xf32> to vector<12x96xf32>
    %43 = vector.extract_strided_slice %41 {offsets = [0, 96], sizes = [12, 96], strides = [1, 1]} : vector<12x192xf32> to vector<12x96xf32>
    %44 = arith.maximumf %42, %43 : vector<12x96xf32>
    %45 = arith.truncf %44 : vector<12x96xf32> to vector<12x96xbf16>
    %46 = vector.extract_strided_slice %45 {offsets = [0, 0], sizes = [9, 96], strides = [1, 1]} : vector<12x96xbf16> to vector<9x96xbf16>
    %c0_29 = arith.constant 0 : index
    %c0_30 = arith.constant 0 : index
    %c0_31 = arith.constant 0 : index
    %47 = vector.load %arg7[%c0_29, %c0_30, %c0_31] : memref<4x96x144xbf16, #tpu.memory_space<vmem>>, vector<1x96x144xbf16>
    %48 = vector.shape_cast %47 : vector<1x96x144xbf16> to vector<96x144xbf16>
    %cst_32 = arith.constant dense<0.000000e+00> : vector<9x144xf32>
    %49 = tpu.matmul %46, %48, %cst_32 {dimension_numbers = #tpu.dot_dimension_numbers<[1], [0], [0], [1], [0, 0, 1, 1], [], []>} : vector<9x96xbf16>, vector<96x144xbf16>, vector<9x144xf32> -> vector<9x144xf32>
    %50 = vector.extract_strided_slice %45 {offsets = [1, 0], sizes = [9, 96], strides = [1, 1]} : vector<12x96xbf16> to vector<9x96xbf16>
    %c1_33 = arith.constant 1 : index
    %c0_34 = arith.constant 0 : index
    %c0_35 = arith.constant 0 : index
    %51 = vector.load %arg7[%c1_33, %c0_34, %c0_35] : memref<4x96x144xbf16, #tpu.memory_space<vmem>>, vector<1x96x144xbf16>
    %52 = vector.shape_cast %51 : vector<1x96x144xbf16> to vector<96x144xbf16>
    %cst_36 = arith.constant dense<0.000000e+00> : vector<9x144xf32>
    %53 = tpu.matmul %50, %52, %cst_36 {dimension_numbers = #tpu.dot_dimension_numbers<[1], [0], [0], [1], [0, 0, 1, 1], [], []>} : vector<9x96xbf16>, vector<96x144xbf16>, vector<9x144xf32> -> vector<9x144xf32>
    %54 = arith.addf %49, %53 : vector<9x144xf32>
    %55 = vector.extract_strided_slice %45 {offsets = [2, 0], sizes = [9, 96], strides = [1, 1]} : vector<12x96xbf16> to vector<9x96xbf16>
    %c2_37 = arith.constant 2 : index
    %c0_38 = arith.constant 0 : index
    %c0_39 = arith.constant 0 : index
    %56 = vector.load %arg7[%c2_37, %c0_38, %c0_39] : memref<4x96x144xbf16, #tpu.memory_space<vmem>>, vector<1x96x144xbf16>
    %57 = vector.shape_cast %56 : vector<1x96x144xbf16> to vector<96x144xbf16>
    %cst_40 = arith.constant dense<0.000000e+00> : vector<9x144xf32>
    %58 = tpu.matmul %55, %57, %cst_40 {dimension_numbers = #tpu.dot_dimension_numbers<[1], [0], [0], [1], [0, 0, 1, 1], [], []>} : vector<9x96xbf16>, vector<96x144xbf16>, vector<9x144xf32> -> vector<9x144xf32>
    %59 = arith.addf %54, %58 : vector<9x144xf32>
    %60 = vector.extract_strided_slice %45 {offsets = [3, 0], sizes = [9, 96], strides = [1, 1]} : vector<12x96xbf16> to vector<9x96xbf16>
    %c3_41 = arith.constant 3 : index
    %c0_42 = arith.constant 0 : index
    %c0_43 = arith.constant 0 : index
    %61 = vector.load %arg7[%c3_41, %c0_42, %c0_43] : memref<4x96x144xbf16, #tpu.memory_space<vmem>>, vector<1x96x144xbf16>
    %62 = vector.shape_cast %61 : vector<1x96x144xbf16> to vector<96x144xbf16>
    %cst_44 = arith.constant dense<0.000000e+00> : vector<9x144xf32>
    %63 = tpu.matmul %60, %62, %cst_44 {dimension_numbers = #tpu.dot_dimension_numbers<[1], [0], [0], [1], [0, 0, 1, 1], [], []>} : vector<9x96xbf16>, vector<96x144xbf16>, vector<9x144xf32> -> vector<9x144xf32>
    %64 = arith.addf %59, %63 : vector<9x144xf32>
    %c0_45 = arith.constant 0 : index
    %c0_46 = arith.constant 0 : index
    %65 = vector.load %arg8[%c0_45, %c0_46] : memref<1x144xf32, #tpu.memory_space<vmem>>, vector<1x144xf32>
    %66 = vector.broadcast %65 : vector<1x144xf32> to vector<9x144xf32>
    %67 = arith.addf %64, %66 : vector<9x144xf32>
    %cst_47 = arith.constant 0.000000e+00 : f32
    %68 = vector.broadcast %cst_47 : f32 to vector<9x144xf32>
    %69 = arith.maximumf %67, %68 : vector<9x144xf32>
    %70 = arith.truncf %69 : vector<9x144xf32> to vector<9x144xbf16>
    %c0_48 = arith.constant 0 : index
    %c0_49 = arith.constant 0 : index
    %71 = vector.load %arg9[%c0_48, %c0_49] : memref<8x9xbf16, #tpu.memory_space<vmem>>, vector<8x9xbf16>
    %cst_50 = arith.constant dense<0.000000e+00> : vector<8x144xf32>
    %72 = tpu.matmul %71, %70, %cst_50 {dimension_numbers = #tpu.dot_dimension_numbers<[1], [0], [0], [1], [0, 0, 1, 1], [], []>} : vector<8x9xbf16>, vector<9x144xbf16>, vector<8x144xf32> -> vector<8x144xf32>
    %73 = vector.extract_strided_slice %72 {offsets = [0, 0], sizes = [4, 144], strides = [1, 1]} : vector<8x144xf32> to vector<4x144xf32>
    %74 = vector.extract_strided_slice %72 {offsets = [4, 0], sizes = [4, 144], strides = [1, 1]} : vector<8x144xf32> to vector<4x144xf32>
    %75 = arith.maximumf %73, %74 : vector<4x144xf32>
    %76 = arith.truncf %75 : vector<4x144xf32> to vector<4x144xbf16>
    %c0_51 = arith.constant 0 : index
    %c0_52 = arith.constant 0 : index
    %77 = vector.load %arg10[%c0_51, %c0_52] : memref<144x128xbf16, #tpu.memory_space<vmem>>, vector<144x128xbf16>
    %cst_53 = arith.constant dense<0.000000e+00> : vector<4x128xf32>
    %78 = tpu.matmul %76, %77, %cst_53 {dimension_numbers = #tpu.dot_dimension_numbers<[1], [0], [0], [1], [0, 0, 1, 1], [], []>} : vector<4x144xbf16>, vector<144x128xbf16>, vector<4x128xf32> -> vector<4x128xf32>
    %79 = vector.extract_strided_slice %78 {offsets = [0, 0], sizes = [4, 64], strides = [1, 1]} : vector<4x128xf32> to vector<4x64xf32>
    %80 = vector.extract_strided_slice %78 {offsets = [0, 64], sizes = [4, 64], strides = [1, 1]} : vector<4x128xf32> to vector<4x64xf32>
    %81 = arith.maximumf %79, %80 : vector<4x64xf32>
    %82 = arith.truncf %81 : vector<4x64xf32> to vector<4x64xbf16>
    %83 = vector.extract_strided_slice %82 {offsets = [0, 0], sizes = [1, 64], strides = [1, 1]} : vector<4x64xbf16> to vector<1x64xbf16>
    %c0_54 = arith.constant 0 : index
    %c0_55 = arith.constant 0 : index
    %c0_56 = arith.constant 0 : index
    %84 = vector.load %arg11[%c0_54, %c0_55, %c0_56] : memref<4x64x32xbf16, #tpu.memory_space<vmem>>, vector<1x64x32xbf16>
    %85 = vector.shape_cast %84 : vector<1x64x32xbf16> to vector<64x32xbf16>
    %cst_57 = arith.constant dense<0.000000e+00> : vector<1x32xf32>
    %86 = tpu.matmul %83, %85, %cst_57 {dimension_numbers = #tpu.dot_dimension_numbers<[1], [0], [0], [1], [0, 0, 1, 1], [], []>} : vector<1x64xbf16>, vector<64x32xbf16>, vector<1x32xf32> -> vector<1x32xf32>
    %87 = vector.extract_strided_slice %82 {offsets = [1, 0], sizes = [1, 64], strides = [1, 1]} : vector<4x64xbf16> to vector<1x64xbf16>
    %c1_58 = arith.constant 1 : index
    %c0_59 = arith.constant 0 : index
    %c0_60 = arith.constant 0 : index
    %88 = vector.load %arg11[%c1_58, %c0_59, %c0_60] : memref<4x64x32xbf16, #tpu.memory_space<vmem>>, vector<1x64x32xbf16>
    %89 = vector.shape_cast %88 : vector<1x64x32xbf16> to vector<64x32xbf16>
    %cst_61 = arith.constant dense<0.000000e+00> : vector<1x32xf32>
    %90 = tpu.matmul %87, %89, %cst_61 {dimension_numbers = #tpu.dot_dimension_numbers<[1], [0], [0], [1], [0, 0, 1, 1], [], []>} : vector<1x64xbf16>, vector<64x32xbf16>, vector<1x32xf32> -> vector<1x32xf32>
    %91 = arith.addf %86, %90 : vector<1x32xf32>
    %92 = vector.extract_strided_slice %82 {offsets = [2, 0], sizes = [1, 64], strides = [1, 1]} : vector<4x64xbf16> to vector<1x64xbf16>
    %c2_62 = arith.constant 2 : index
    %c0_63 = arith.constant 0 : index
    %c0_64 = arith.constant 0 : index
    %93 = vector.load %arg11[%c2_62, %c0_63, %c0_64] : memref<4x64x32xbf16, #tpu.memory_space<vmem>>, vector<1x64x32xbf16>
    %94 = vector.shape_cast %93 : vector<1x64x32xbf16> to vector<64x32xbf16>
    %cst_65 = arith.constant dense<0.000000e+00> : vector<1x32xf32>
    %95 = tpu.matmul %92, %94, %cst_65 {dimension_numbers = #tpu.dot_dimension_numbers<[1], [0], [0], [1], [0, 0, 1, 1], [], []>} : vector<1x64xbf16>, vector<64x32xbf16>, vector<1x32xf32> -> vector<1x32xf32>
    %96 = arith.addf %91, %95 : vector<1x32xf32>
    %97 = vector.extract_strided_slice %82 {offsets = [3, 0], sizes = [1, 64], strides = [1, 1]} : vector<4x64xbf16> to vector<1x64xbf16>
    %c3_66 = arith.constant 3 : index
    %c0_67 = arith.constant 0 : index
    %c0_68 = arith.constant 0 : index
    %98 = vector.load %arg11[%c3_66, %c0_67, %c0_68] : memref<4x64x32xbf16, #tpu.memory_space<vmem>>, vector<1x64x32xbf16>
    %99 = vector.shape_cast %98 : vector<1x64x32xbf16> to vector<64x32xbf16>
    %cst_69 = arith.constant dense<0.000000e+00> : vector<1x32xf32>
    %100 = tpu.matmul %97, %99, %cst_69 {dimension_numbers = #tpu.dot_dimension_numbers<[1], [0], [0], [1], [0, 0, 1, 1], [], []>} : vector<1x64xbf16>, vector<64x32xbf16>, vector<1x32xf32> -> vector<1x32xf32>
    %101 = arith.addf %96, %100 : vector<1x32xf32>
    %c0_70 = arith.constant 0 : index
    %c0_71 = arith.constant 0 : index
    %102 = vector.load %arg12[%c0_70, %c0_71] : memref<1x32xf32, #tpu.memory_space<vmem>>, vector<1x32xf32>
    %103 = arith.addf %101, %102 : vector<1x32xf32>
    %cst_72 = arith.constant 0.000000e+00 : f32
    %104 = vector.broadcast %cst_72 : f32 to vector<1x32xf32>
    %105 = arith.maximumf %103, %104 : vector<1x32xf32>
    %106 = arith.truncf %105 : vector<1x32xf32> to vector<1x32xbf16>
    %c0_73 = arith.constant 0 : index
    %c0_74 = arith.constant 0 : index
    %107 = vector.load %arg13[%c0_73, %c0_74] : memref<32x320xbf16, #tpu.memory_space<vmem>>, vector<32x320xbf16>
    %cst_75 = arith.constant dense<0.000000e+00> : vector<1x320xf32>
    %108 = tpu.matmul %106, %107, %cst_75 {dimension_numbers = #tpu.dot_dimension_numbers<[1], [0], [0], [1], [0, 0, 1, 1], [], []>} : vector<1x32xbf16>, vector<32x320xbf16>, vector<1x320xf32> -> vector<1x320xf32>
    %c0_76 = arith.constant 0 : index
    %c0_77 = arith.constant 0 : index
    %109 = vector.load %arg14[%c0_76, %c0_77] : memref<1x320xf32, #tpu.memory_space<vmem>>, vector<1x320xf32>
    %110 = arith.addf %108, %109 : vector<1x320xf32>
    %cst_78 = arith.constant 0.000000e+00 : f32
    %111 = vector.broadcast %cst_78 : f32 to vector<1x320xf32>
    %112 = arith.maximumf %110, %111 : vector<1x320xf32>
    %113 = arith.truncf %112 : vector<1x320xf32> to vector<1x320xbf16>
    %c0_79 = arith.constant 0 : index
    %c0_80 = arith.constant 0 : index
    %114 = vector.load %arg15[%c0_79, %c0_80] : memref<320x640xbf16, #tpu.memory_space<vmem>>, vector<320x640xbf16>
    %cst_81 = arith.constant dense<0.000000e+00> : vector<1x640xf32>
    %115 = tpu.matmul %113, %114, %cst_81 {dimension_numbers = #tpu.dot_dimension_numbers<[1], [0], [0], [1], [0, 0, 1, 1], [], []>} : vector<1x320xbf16>, vector<320x640xbf16>, vector<1x640xf32> -> vector<1x640xf32>
    %c0_82 = arith.constant 0 : index
    %c0_83 = arith.constant 0 : index
    %116 = vector.load %arg16[%c0_82, %c0_83] : memref<1x640xf32, #tpu.memory_space<vmem>>, vector<1x640xf32>
    %117 = arith.addf %115, %116 : vector<1x640xf32>
    %cst_84 = arith.constant 0.000000e+00 : f32
    %118 = vector.broadcast %cst_84 : f32 to vector<1x640xf32>
    %119 = arith.maximumf %117, %118 : vector<1x640xf32>
    %120 = arith.truncf %119 : vector<1x640xf32> to vector<1x640xbf16>
    %c0_85 = arith.constant 0 : index
    %c0_86 = arith.constant 0 : index
    %121 = vector.load %arg17[%c0_85, %c0_86] : memref<640x10xbf16, #tpu.memory_space<vmem>>, vector<640x10xbf16>
    %cst_87 = arith.constant dense<0.000000e+00> : vector<1x10xf32>
    %122 = tpu.matmul %120, %121, %cst_87 {dimension_numbers = #tpu.dot_dimension_numbers<[1], [0], [0], [1], [0, 0, 1, 1], [], []>} : vector<1x640xbf16>, vector<640x10xbf16>, vector<1x10xf32> -> vector<1x10xf32>
    %c0_88 = arith.constant 0 : index
    %c0_89 = arith.constant 0 : index
    %123 = vector.load %arg18[%c0_88, %c0_89] : memref<1x10xf32, #tpu.memory_space<vmem>>, vector<1x10xf32>
    %124 = arith.addf %122, %123 : vector<1x10xf32>
    %cst_90 = arith.constant dense<0xFF800000> : vector<1xf32>
    %125 = vector.multi_reduction <maximumf>, %124, %cst_90 [1] : vector<1x10xf32> to vector<1xf32>
    %126 = vector.shape_cast %125 : vector<1xf32> to vector<1x1xf32>
    %127 = vector.broadcast %126 : vector<1x1xf32> to vector<1x10xf32>
    %128 = arith.subf %124, %127 : vector<1x10xf32>
    %129 = math.exp %128 : vector<1x10xf32>
    %cst_91 = arith.constant dense<0.000000e+00> : vector<1xf32>
    %130 = vector.multi_reduction <add>, %129, %cst_91 [1] : vector<1x10xf32> to vector<1xf32>
    %131 = vector.shape_cast %130 : vector<1xf32> to vector<1x1xf32>
    %132 = vector.broadcast %131 : vector<1x1xf32> to vector<1x10xf32>
    %133 = arith.divf %129, %132 : vector<1x10xf32>
    %c0_92 = arith.constant 0 : index
    %c0_93 = arith.constant 0 : index
    %134 = vector.load %arg19[%c0_92, %c0_93] : memref<1x10xf32, #tpu.memory_space<vmem>>, vector<1x10xf32>
    tpu.vector_store %arg19[%c0_92, %c0_93], %133 {strides = array<i32>} : memref<1x10xf32, #tpu.memory_space<vmem>>, vector<1x10xf32>,
    return
  }
}

</mosaic_0001>

<llo_original>
// kernel: inference_net.1
$region0: #{inference_net.1}
  #allocation0 [shape = 'u32[]', space=smem, size = 0x4, offset = 0x4, fixed_abs, tag = 'smem constant byte address 0x4 - core index']
  #allocation1 [shape = 'u32[72,128]{1,0:T(1,128)}', space=vmem, size = 0x9000, scoped, tag = 'internal scratch']
  %s0 = inlined_call_operand.vmem [shape: bf16[280,280], index: 0, kind: input, shape index: {}]
  %s1 = inlined_call_operand.vmem [shape: bf16[28,280], index: 1, kind: input, shape index: {}]
  %s2 = inlined_call_operand.vmem [shape: bf16[280,28], index: 2, kind: input, shape index: {}]
  %s3 = inlined_call_operand.vmem [shape: bf16[4,28,200], index: 3, kind: input, shape index: {}]
  %s4 = inlined_call_operand.vmem [shape: f32[1,200], index: 4, kind: input, shape index: {}]
  %s5 = inlined_call_operand.vmem [shape: bf16[24,25], index: 5, kind: input, shape index: {}]
  %s6 = inlined_call_operand.vmem [shape: bf16[200,192], index: 6, kind: input, shape index: {}]
  %s7 = inlined_call_operand.vmem [shape: bf16[4,96,144], index: 7, kind: input, shape index: {}]
  %s8 = inlined_call_operand.vmem [shape: f32[1,144], index: 8, kind: input, shape index: {}]
  %s9 = inlined_call_operand.vmem [shape: bf16[8,9], index: 9, kind: input, shape index: {}]
  %s10 = inlined_call_operand.vmem [shape: bf16[144,128], index: 10, kind: input, shape index: {}]
  %s11 = inlined_call_operand.vmem [shape: bf16[4,64,32], index: 11, kind: input, shape index: {}]
  %s12 = inlined_call_operand.vmem [shape: f32[1,32], index: 12, kind: input, shape index: {}]
  %s13 = inlined_call_operand.vmem [shape: bf16[32,320], index: 13, kind: input, shape index: {}]
  %s14 = inlined_call_operand.vmem [shape: f32[1,320], index: 14, kind: input, shape index: {}]
  %s15 = inlined_call_operand.vmem [shape: bf16[320,640], index: 15, kind: input, shape index: {}]
  %s16 = inlined_call_operand.vmem [shape: f32[1,640], index: 16, kind: input, shape index: {}]
  %s17 = inlined_call_operand.vmem [shape: bf16[640,10], index: 17, kind: input, shape index: {}]
  %s18 = inlined_call_operand.vmem [shape: f32[1,10], index: 18, kind: input, shape index: {}]
  %s19 = inlined_call_operand.hbm [shape: f32[1,10], index: 19, kind: output, shape index: {}]
  %s20 = sld [smem:[#allocation0]]
  $region86: #{inference_net.1} parent=0
    _
  %s22 = ssub.s32 1, %s20
  %s23 = scalar_select 0, %s22, %s20
  $region1: #{inference_net.1} parent=0
    #allocation2 [shape = 'u8[512]{0}', space=vmem, size = 0x400, scoped, tag = 'output window, operand 0, single buffered']
    #allocation3 [shape = 's32[1]{0}', space=sflag, size = 0x4, scoped, tag = 'scoped memory for inference_net.1']
    %24 = vsyncpa [#allocation3], 0
    // Predicated region
    $region2: #{inference_net.1} parent=1 // pred_check
      _
    $region3: #{inference_net.1} parent=1 // pred_check_branch
      %26 = sbr.rel (0) target = $region5
    $region4: #{inference_net.1} parent=1 // pred_region
      _
    $region5: #{inference_net.1} parent=1 // pred_fallthru
      _
    // Predicated region
    $region6: #{inference_net.1} parent=1 // pred_check
      _
    $region7: #{inference_net.1} parent=1 // pred_check_branch
      %28 = sbr.rel (0) target = $region9
    $region8: #{inference_net.1} parent=1 // pred_region
      _
    $region9: #{inference_net.1} parent=1 // pred_fallthru
      _
    // Predicated region
    $region10: #{inference_net.1} parent=1 // pred_check
      _
    $region11: #{inference_net.1} parent=1 // pred_check_branch
      %30 = sbr.rel (0) target = $region13
    $region12: #{inference_net.1} parent=1 // pred_region
      _
    $region13: #{inference_net.1} parent=1 // pred_fallthru
      _
    // Predicated region
    $region14: #{inference_net.1} parent=1 // pred_check
      _
    $region15: #{inference_net.1} parent=1 // pred_check_branch
      %32 = sbr.rel (0) target = $region17
    $region16: #{inference_net.1} parent=1 // pred_region
      _
    $region17: #{inference_net.1} parent=1 // pred_fallthru
      _
    // Predicated region
    $region18: #{inference_net.1} parent=1 // pred_check
      _
    $region19: #{inference_net.1} parent=1 // pred_check_branch
      %34 = sbr.rel (0) target = $region21
    $region20: #{inference_net.1} parent=1 // pred_region
      _
    $region21: #{inference_net.1} parent=1 // pred_fallthru
      _
    // Predicated region
    $region22: #{inference_net.1} parent=1 // pred_check
      _
    $region23: #{inference_net.1} parent=1 // pred_check_branch
      %36 = sbr.rel (0) target = $region25
    $region24: #{inference_net.1} parent=1 // pred_region
      _
    $region25: #{inference_net.1} parent=1 // pred_fallthru
      _
    // Predicated region
    $region26: #{inference_net.1} parent=1 // pred_check
      _
    $region27: #{inference_net.1} parent=1 // pred_check_branch
      %38 = sbr.rel (0) target = $region29
    $region28: #{inference_net.1} parent=1 // pred_region
      _
    $region29: #{inference_net.1} parent=1 // pred_fallthru
      _
    // Predicated region
    $region30: #{inference_net.1} parent=1 // pred_check
      _
    $region31: #{inference_net.1} parent=1 // pred_check_branch
      %40 = sbr.rel (0) target = $region33
    $region32: #{inference_net.1} parent=1 // pred_region
      _
    $region33: #{inference_net.1} parent=1 // pred_fallthru
      _
    // Predicated region
    $region34: #{inference_net.1} parent=1 // pred_check
      _
    $region35: #{inference_net.1} parent=1 // pred_check_branch
      %42 = sbr.rel (0) target = $region37
    $region36: #{inference_net.1} parent=1 // pred_region
      _
    $region37: #{inference_net.1} parent=1 // pred_fallthru
      _
    // Predicated region
    $region38: #{inference_net.1} parent=1 // pred_check
      _
    $region39: #{inference_net.1} parent=1 // pred_check_branch
      %44 = sbr.rel (0) target = $region41
    $region40: #{inference_net.1} parent=1 // pred_region
      _
    $region41: #{inference_net.1} parent=1 // pred_fallthru
      _
    // Predicated region
    $region42: #{inference_net.1} parent=1 // pred_check
      _
    $region43: #{inference_net.1} parent=1 // pred_check_branch
      %46 = sbr.rel (0) target = $region45
    $region44: #{inference_net.1} parent=1 // pred_region
      _
    $region45: #{inference_net.1} parent=1 // pred_fallthru
      _
    // Predicated region
    $region46: #{inference_net.1} parent=1 // pred_check
      _
    $region47: #{inference_net.1} parent=1 // pred_check_branch
      %48 = sbr.rel (0) target = $region49
    $region48: #{inference_net.1} parent=1 // pred_region
      _
    $region49: #{inference_net.1} parent=1 // pred_fallthru
      _
    // Predicated region
    $region50: #{inference_net.1} parent=1 // pred_check
      _
    $region51: #{inference_net.1} parent=1 // pred_check_branch
      %50 = sbr.rel (0) target = $region53
    $region52: #{inference_net.1} parent=1 // pred_region
      _
    $region53: #{inference_net.1} parent=1 // pred_fallthru
      _
    // Predicated region
    $region54: #{inference_net.1} parent=1 // pred_check
      _
    $region55: #{inference_net.1} parent=1 // pred_check_branch
      %52 = sbr.rel (0) target = $region57
    $region56: #{inference_net.1} parent=1 // pred_region
      _
    $region57: #{inference_net.1} parent=1 // pred_fallthru
      _
    // Predicated region
    $region58: #{inference_net.1} parent=1 // pred_check
      _
    $region59: #{inference_net.1} parent=1 // pred_check_branch
      %54 = sbr.rel (0) target = $region61
    $region60: #{inference_net.1} parent=1 // pred_region
      _
    $region61: #{inference_net.1} parent=1 // pred_fallthru
      _
    // Predicated region
    $region62: #{inference_net.1} parent=1 // pred_check
      _
    $region63: #{inference_net.1} parent=1 // pred_check_branch
      %56 = sbr.rel (0) target = $region65
    $region64: #{inference_net.1} parent=1 // pred_region
      _
    $region65: #{inference_net.1} parent=1 // pred_fallthru
      _
    // Predicated region
    $region66: #{inference_net.1} parent=1 // pred_check
      _
    $region67: #{inference_net.1} parent=1 // pred_check_branch
      %58 = sbr.rel (0) target = $region69
    $region68: #{inference_net.1} parent=1 // pred_region
      _
    $region69: #{inference_net.1} parent=1 // pred_fallthru
      _
    // Predicated region
    $region70: #{inference_net.1} parent=1 // pred_check
      _
    $region71: #{inference_net.1} parent=1 // pred_check_branch
      %60 = sbr.rel (0) target = $region73
    $region72: #{inference_net.1} parent=1 // pred_region
      _
    $region73: #{inference_net.1} parent=1 // pred_fallthru
      _
    // Predicated region
    $region74: #{inference_net.1} parent=1 // pred_check
      _
    $region75: #{inference_net.1} parent=1 // pred_check_branch
      %62 = sbr.rel (0) target = $region77
    $region76: #{inference_net.1} parent=1 // pred_region
      _
    $region77: #{inference_net.1} parent=1 // pred_fallthru
      _
    %v64 = vld [vmem:[%s1] sm:$0xff]
    %v65 = vld [vmem:[%s1 + $0x8] sm:$0xf]
    %v66 = vld [vmem:[%s1 + $0xc] sm:$0xff]
    %v67 = vld [vmem:[%s1 + $0x14] sm:$0xf]
    %v68 = vld [vmem:[%s1 + $0x18] sm:$0xff]
    %v69 = vld [vmem:[%s1 + $0x20] sm:$0xf]
    %v70 = vld [vmem:[%s1 + $0x24] sm:$0x33]
    %v71 = vld [vmem:[%s1 + $0x2c] sm:$0x3]
    %v72 = vld [vmem:[%s0] sm:$0xff]
    %v73 = vld [vmem:[%s0 + $0x8] sm:$0xf]
    %v74 = vld [vmem:[%s0 + $0xc] sm:$0xff]
    %v75 = vld [vmem:[%s0 + $0x14] sm:$0xf]
    %v76 = vld [vmem:[%s0 + $0x18] sm:$0xff]
    %v77 = vld [vmem:[%s0 + $0x20] sm:$0xf]
    %v78 = vld [vmem:[%s0 + $0x24] sm:$0xff]
    %v79 = vld [vmem:[%s0 + $0x2c] sm:$0xf]
    %v80 = vld [vmem:[%s0 + $0x30] sm:$0xff]
    %v81 = vld [vmem:[%s0 + $0x38] sm:$0xf]
    %v82 = vld [vmem:[%s0 + $0x3c] sm:$0xff]
    %v83 = vld [vmem:[%s0 + $0x44] sm:$0xf]
    %v84 = vld [vmem:[%s0 + $0x48] sm:$0xff]
    %v85 = vld [vmem:[%s0 + $0x50] sm:$0xf]
    %v86 = vld [vmem:[%s0 + $0x54] sm:$0xff]
    %v87 = vld [vmem:[%s0 + $0x5c] sm:$0xf]
    %v88 = vld [vmem:[%s0 + $0x60] sm:$0xff]
    %v89 = vld [vmem:[%s0 + $0x68] sm:$0xf]
    %v90 = vld [vmem:[%s0 + $0x6c] sm:$0xff]
    %v91 = vld [vmem:[%s0 + $0x74] sm:$0xf]
    %v92 = vld [vmem:[%s0 + $0x78] sm:$0xff]
    %v93 = vld [vmem:[%s0 + $0x80] sm:$0xf]
    %v94 = vld [vmem:[%s0 + $0x84] sm:$0xff]
    %v95 = vld [vmem:[%s0 + $0x8c] sm:$0xf]
    %v96 = vld [vmem:[%s0 + $0x90] sm:$0xff]
    %v97 = vld [vmem:[%s0 + $0x98] sm:$0xf]
    %v98 = vld [vmem:[%s0 + $0x9c] sm:$0xff]
    %v99 = vld [vmem:[%s0 + $0xa4] sm:$0xf]
    %v100 = vld [vmem:[%s0 + $0xa8] sm:$0xff]
    %v101 = vld [vmem:[%s0 + $0xb0] sm:$0xf]
    %v102 = vld [vmem:[%s0 + $0xb4] sm:$0xff]
    %v103 = vld [vmem:[%s0 + $0xbc] sm:$0xf]
    %v104 = vld [vmem:[%s0 + $0xc0] sm:$0xff]
    %v105 = vld [vmem:[%s0 + $0xc8] sm:$0xf]
    %v106 = vld [vmem:[%s0 + $0xcc] sm:$0xff]
    %v107 = vld [vmem:[%s0 + $0xd4] sm:$0xf]
    %v108 = vld [vmem:[%s0 + $0xd8] sm:$0xff]
    %v109 = vld [vmem:[%s0 + $0xe0] sm:$0xf]
    %v110 = vld [vmem:[%s0 + $0xe4] sm:$0xff]
    %v111 = vld [vmem:[%s0 + $0xec] sm:$0xf]
    %v112 = vld [vmem:[%s0 + $0xf0] sm:$0xff]
    %v113 = vld [vmem:[%s0 + $0xf8] sm:$0xf]
    %v114 = vld [vmem:[%s0 + $0xfc] sm:$0xff]
    %v115 = vld [vmem:[%s0 + $0x104] sm:$0xf]
    %v116 = vld [vmem:[%s0 + $0x108] sm:$0xff]
    %v117 = vld [vmem:[%s0 + $0x110] sm:$0xf]
    %v118 = vld [vmem:[%s0 + $0x114] sm:$0xff]
    %v119 = vld [vmem:[%s0 + $0x11c] sm:$0xf]
    %v120 = vld [vmem:[%s0 + $0x120] sm:$0xff]
    %v121 = vld [vmem:[%s0 + $0x128] sm:$0xf]
    %v122 = vld [vmem:[%s0 + $0x12c] sm:$0xff]
    %v123 = vld [vmem:[%s0 + $0x134] sm:$0xf]
    %v124 = vld [vmem:[%s0 + $0x138] sm:$0xff]
    %v125 = vld [vmem:[%s0 + $0x140] sm:$0xf]
    %v126 = vld [vmem:[%s0 + $0x144] sm:$0xff]
    %v127 = vld [vmem:[%s0 + $0x14c] sm:$0xf]
    %v128 = vld [vmem:[%s0 + $0x150] sm:$0xff]
    %v129 = vld [vmem:[%s0 + $0x158] sm:$0xf]
    %v130 = vld [vmem:[%s0 + $0x15c] sm:$0xff]
    %v131 = vld [vmem:[%s0 + $0x164] sm:$0xf]
    %v132 = vld [vmem:[%s0 + $0x168] sm:$0xff]
    %v133 = vld [vmem:[%s0 + $0x170] sm:$0xf]
    %v134 = vld [vmem:[%s0 + $0x174] sm:$0xff]
    %v135 = vld [vmem:[%s0 + $0x17c] sm:$0xf]
    %v136 = vld [vmem:[%s0 + $0x180] sm:$0xff]
    %v137 = vld [vmem:[%s0 + $0x188] sm:$0xf]
    %v138 = vld [vmem:[%s0 + $0x18c] sm:$0xff]
    %v139 = vld [vmem:[%s0 + $0x194] sm:$0xf]
    %v140 = vld [vmem:[%s0 + $0x198] sm:$0xff]
    %v141 = vld [vmem:[%s0 + $0x1a0] sm:$0xf]
    %v150 = vunpack.c.l.b16 %v64
    %v151 = vunpack.c.h.b16 %v64
    %v152 = vunpack.c.l.b16 %v65
    %v153 = vunpack.c.l.b16 %v66
    %v154 = vunpack.c.h.b16 %v66
    %v155 = vunpack.c.l.b16 %v67
    %v156 = vunpack.c.l.b16 %v68
    %v157 = vunpack.c.h.b16 %v68
    %v158 = vunpack.c.l.b16 %v69
    %v159 = vunpack.c.l.b16 %v70
    %v160 = vunpack.c.h.b16 %v70
    %v161 = vunpack.c.l.b16 %v71
    %v162 = vpack.c.b16 %v153, %v150
    %v163 = vpack.c.b16 %v154, %v151
    %v164 = vpack.c.b16 %v155, %v152
    %v165 = vpack.c.b16 %v159, %v156
    %v166 = vpack.c.b16 %v160, %v157
    %v167 = vpack.c.b16 %v161, %v158
    %v242 = vunpack.c.l.b16 %v72
    %v243 = vunpack.c.h.b16 %v72
    %v244 = vunpack.c.l.b16 %v73
    %v245 = vunpack.c.l.b16 %v74
    %v246 = vunpack.c.h.b16 %v74
    %v247 = vunpack.c.l.b16 %v75
    %v248 = vunpack.c.l.b16 %v76
    %v249 = vunpack.c.h.b16 %v76
    %v250 = vunpack.c.l.b16 %v77
    %v251 = vunpack.c.l.b16 %v78
    %v252 = vunpack.c.h.b16 %v78
    %v253 = vunpack.c.l.b16 %v79
    %v254 = vunpack.c.l.b16 %v80
    %v255 = vunpack.c.h.b16 %v80
    %v256 = vunpack.c.l.b16 %v81
    %v257 = vunpack.c.l.b16 %v82
    %v258 = vunpack.c.h.b16 %v82
    %v259 = vunpack.c.l.b16 %v83
    %v260 = vunpack.c.l.b16 %v84
    %v261 = vunpack.c.h.b16 %v84
    %v262 = vunpack.c.l.b16 %v85
    %v263 = vunpack.c.l.b16 %v86
    %v264 = vunpack.c.h.b16 %v86
    %v265 = vunpack.c.l.b16 %v87
    %v266 = vunpack.c.l.b16 %v88
    %v267 = vunpack.c.h.b16 %v88
    %v268 = vunpack.c.l.b16 %v89
    %v269 = vunpack.c.l.b16 %v90
    %v270 = vunpack.c.h.b16 %v90
    %v271 = vunpack.c.l.b16 %v91
    %v272 = vunpack.c.l.b16 %v92
    %v273 = vunpack.c.h.b16 %v92
    %v274 = vunpack.c.l.b16 %v93
    %v275 = vunpack.c.l.b16 %v94
    %v276 = vunpack.c.h.b16 %v94
    %v277 = vunpack.c.l.b16 %v95
    %v278 = vunpack.c.l.b16 %v96
    %v279 = vunpack.c.h.b16 %v96
    %v280 = vunpack.c.l.b16 %v97
    %v281 = vunpack.c.l.b16 %v98
    %v282 = vunpack.c.h.b16 %v98
    %v283 = vunpack.c.l.b16 %v99
    %v284 = vunpack.c.l.b16 %v100
    %v285 = vunpack.c.h.b16 %v100
    %v286 = vunpack.c.l.b16 %v101
    %v287 = vunpack.c.l.b16 %v102
    %v288 = vunpack.c.h.b16 %v102
    %v289 = vunpack.c.l.b16 %v103
    %v290 = vunpack.c.l.b16 %v104
    %v291 = vunpack.c.h.b16 %v104
    %v292 = vunpack.c.l.b16 %v105
    %v293 = vunpack.c.l.b16 %v106
    %v294 = vunpack.c.h.b16 %v106
    %v295 = vunpack.c.l.b16 %v107
    %v296 = vunpack.c.l.b16 %v108
    %v297 = vunpack.c.h.b16 %v108
    %v298 = vunpack.c.l.b16 %v109
    %v299 = vunpack.c.l.b16 %v110
    %v300 = vunpack.c.h.b16 %v110
    %v301 = vunpack.c.l.b16 %v111
    %v302 = vunpack.c.l.b16 %v112
    %v303 = vunpack.c.h.b16 %v112
    %v304 = vunpack.c.l.b16 %v113
    %v305 = vunpack.c.l.b16 %v114
    %v306 = vunpack.c.h.b16 %v114
    %v307 = vunpack.c.l.b16 %v115
    %v308 = vunpack.c.l.b16 %v116
    %v309 = vunpack.c.h.b16 %v116
    %v310 = vunpack.c.l.b16 %v117
    %v311 = vunpack.c.l.b16 %v118
    %v312 = vunpack.c.h.b16 %v118
    %v313 = vunpack.c.l.b16 %v119
    %v314 = vunpack.c.l.b16 %v120
    %v315 = vunpack.c.h.b16 %v120
    %v316 = vunpack.c.l.b16 %v121
    %v317 = vunpack.c.l.b16 %v122
    %v318 = vunpack.c.h.b16 %v122
    %v319 = vunpack.c.l.b16 %v123
    %v320 = vunpack.c.l.b16 %v124
    %v321 = vunpack.c.h.b16 %v124
    %v322 = vunpack.c.l.b16 %v125
    %v323 = vunpack.c.l.b16 %v126
    %v324 = vunpack.c.h.b16 %v126
    %v325 = vunpack.c.l.b16 %v127
    %v326 = vunpack.c.l.b16 %v128
    %v327 = vunpack.c.h.b16 %v128
    %v328 = vunpack.c.l.b16 %v129
    %v329 = vunpack.c.l.b16 %v130
    %v330 = vunpack.c.h.b16 %v130
    %v331 = vunpack.c.l.b16 %v131
    %v332 = vunpack.c.l.b16 %v132
    %v333 = vunpack.c.h.b16 %v132
    %v334 = vunpack.c.l.b16 %v133
    %v335 = vunpack.c.l.b16 %v134
    %v336 = vunpack.c.h.b16 %v134
    %v337 = vunpack.c.l.b16 %v135
    %v338 = vunpack.c.l.b16 %v136
    %v339 = vunpack.c.h.b16 %v136
    %v340 = vunpack.c.l.b16 %v137
    %v341 = vunpack.c.l.b16 %v138
    %v342 = vunpack.c.h.b16 %v138
    %v343 = vunpack.c.l.b16 %v139
    %v344 = vunpack.c.l.b16 %v140
    %v345 = vunpack.c.h.b16 %v140
    %v346 = vunpack.c.l.b16 %v141
    %v347 = vpack.c.b16 %v245, %v242
    %v348 = vpack.c.b16 %v246, %v243
    %v349 = vpack.c.b16 %v247, %v244
    %v350 = vpack.c.b16 %v251, %v248
    %v351 = vpack.c.b16 %v252, %v249
    %v352 = vpack.c.b16 %v253, %v250
    %v353 = vpack.c.b16 %v257, %v254
    %v354 = vpack.c.b16 %v258, %v255
    %v355 = vpack.c.b16 %v259, %v256
    %v356 = vpack.c.b16 %v263, %v260
    %v357 = vpack.c.b16 %v264, %v261
    %v358 = vpack.c.b16 %v265, %v262
    %v359 = vpack.c.b16 %v269, %v266
    %v360 = vpack.c.b16 %v270, %v267
    %v361 = vpack.c.b16 %v271, %v268
    %v362 = vpack.c.b16 %v275, %v272
    %v363 = vpack.c.b16 %v276, %v273
    %v364 = vpack.c.b16 %v277, %v274
    %v365 = vpack.c.b16 %v281, %v278
    %v366 = vpack.c.b16 %v282, %v279
    %v367 = vpack.c.b16 %v283, %v280
    %v368 = vpack.c.b16 %v287, %v284
    %v369 = vpack.c.b16 %v288, %v285
    %v370 = vpack.c.b16 %v289, %v286
    %v371 = vpack.c.b16 %v293, %v290
    %v372 = vpack.c.b16 %v294, %v291
    %v373 = vpack.c.b16 %v295, %v292
    %v374 = vpack.c.b16 %v299, %v296
    %v375 = vpack.c.b16 %v300, %v297
    %v376 = vpack.c.b16 %v301, %v298
    %v377 = vpack.c.b16 %v305, %v302
    %v378 = vpack.c.b16 %v306, %v303
    %v379 = vpack.c.b16 %v307, %v304
    %v380 = vpack.c.b16 %v311, %v308
    %v381 = vpack.c.b16 %v312, %v309
    %v382 = vpack.c.b16 %v313, %v310
    %v383 = vpack.c.b16 %v317, %v314
    %v384 = vpack.c.b16 %v318, %v315
    %v385 = vpack.c.b16 %v319, %v316
    %v386 = vpack.c.b16 %v323, %v320
    %v387 = vpack.c.b16 %v324, %v321
    %v388 = vpack.c.b16 %v325, %v322
    %v389 = vpack.c.b16 %v329, %v326
    %v390 = vpack.c.b16 %v330, %v327
    %v391 = vpack.c.b16 %v331, %v328
    %v392 = vpack.c.b16 %v335, %v332
    %v393 = vpack.c.b16 %v336, %v333
    %v394 = vpack.c.b16 %v337, %v334
    %v395 = vpack.c.b16 %v341, %v338
    %v396 = vpack.c.b16 %v342, %v339
    %v397 = vpack.c.b16 %v343, %v340
    %v398 = vpack.c.b16 %v344, %v344
    %v399 = vpack.c.b16 %v345, %v345
    %v400 = vpack.c.b16 %v346, %v346
    %vm452 = vcmask 195584
    %v454 = vsel %vm452, %v164, 0
    %v457 = vsel %vm452, %v167, 0
    %vm459 = vcmask 1043456
    %v461 = vsel %vm459, %v398, 0
    %v464 = vsel %vm459, %v399, 0
    %v467 = vsel %vm459, %v400, 0
    %469 = vmatpush.bf16.msra.mxu0 %v368
    %470 = vmatpush.bf16.msra.mxu0 %v365
    %471 = vmatpush.bf16.msra.mxu0 %v362
    %472 = vmatpush.bf16.msra.mxu0 %v359
    %473 = vmatpush.bf16.msra.mxu0 %v356
    %474 = vmatpush.bf16.msra.mxu0 %v353
    %475 = vmatpush.bf16.msra.mxu0 %v350
    %476 = vmatpush.bf16.msra.mxu0 %v347
    %477 = vmatmul.bf16.gmra.mxu0 %v162
    %v478 = vpop.f32.mrf.mxu0
    %v479 = vadd.f32 0.0, %v478
    %v480 = vpop.f32.mrf.mxu0
    %v481 = vadd.f32 0.0, %v480
    %482 = vmatmul.bf16.gmra.mxu0 %v165
    %v483 = vpop.f32.mrf.mxu0
    %v484 = vadd.f32 0.0, %v483
    %v485 = vpop.f32.mrf.mxu0
    %v486 = vadd.f32 0.0, %v485
    %487 = vdwg.mxu0
    %488 = vmatpush.bf16.msra.mxu0 %v392
    %489 = vmatpush.bf16.msra.mxu0 %v389
    %490 = vmatpush.bf16.msra.mxu0 %v386
    %491 = vmatpush.bf16.msra.mxu0 %v383
    %492 = vmatpush.bf16.msra.mxu0 %v380
    %493 = vmatpush.bf16.msra.mxu0 %v377
    %494 = vmatpush.bf16.msra.mxu0 %v374
    %495 = vmatpush.bf16.msra.mxu0 %v371
    %496 = vmatmul.bf16.gmra.mxu0 %v163
    %v497 = vpop.f32.mrf.mxu0
    %v498 = vadd.f32 %v479, %v497
    %v499 = vpop.f32.mrf.mxu0
    %v500 = vadd.f32 %v481, %v499
    %501 = vmatmul.bf16.gmra.mxu0 %v166
    %v502 = vpop.f32.mrf.mxu0
    %v503 = vadd.f32 %v484, %v502
    %v504 = vpop.f32.mrf.mxu0
    %v505 = vadd.f32 %v486, %v504
    %506 = vdwg.mxu0
    %507 = vmatpush.bf16.msra.mxu0 0
    %508 = vmatpush.bf16.msra.mxu0 0
    %509 = vmatpush.bf16.msra.mxu0 0
    %510 = vmatpush.bf16.msra.mxu0 0
    %511 = vmatpush.bf16.msra.mxu0 0
    %512 = vmatpush.bf16.msra.mxu0 0
    %513 = vmatpush.bf16.msra.mxu0 %v461
    %514 = vmatpush.bf16.msra.mxu0 %v395
    %515 = vmatmul.bf16.gmra.mxu0 %v454
    %v516 = vpop.f32.mrf.mxu0
    %v517 = vadd.f32 %v498, %v516
    %v518 = vpop.f32.mrf.mxu0
    %v519 = vadd.f32 %v500, %v518
    %520 = vmatmul.bf16.gmra.mxu0 %v457
    %v521 = vpop.f32.mrf.mxu0
    %v522 = vadd.f32 %v503, %v521
    %v523 = vpop.f32.mrf.mxu0
    %v524 = vadd.f32 %v505, %v523
    %525 = vdwg.mxu0
    %526 = vmatpush.bf16.msra.mxu0 %v369
    %527 = vmatpush.bf16.msra.mxu0 %v366
    %528 = vmatpush.bf16.msra.mxu0 %v363
    %529 = vmatpush.bf16.msra.mxu0 %v360
    %530 = vmatpush.bf16.msra.mxu0 %v357
    %531 = vmatpush.bf16.msra.mxu0 %v354
    %532 = vmatpush.bf16.msra.mxu0 %v351
    %533 = vmatpush.bf16.msra.mxu0 %v348
    %534 = vmatmul.bf16.gmra.mxu0 %v162
    %v535 = vpop.f32.mrf.mxu0
    %v536 = vadd.f32 0.0, %v535
    %v537 = vpop.f32.mrf.mxu0
    %v538 = vadd.f32 0.0, %v537
    %539 = vmatmul.bf16.gmra.mxu0 %v165
    %v540 = vpop.f32.mrf.mxu0
    %v541 = vadd.f32 0.0, %v540
    %v542 = vpop.f32.mrf.mxu0
    %v543 = vadd.f32 0.0, %v542
    %544 = vdwg.mxu0
    %545 = vmatpush.bf16.msra.mxu0 %v393
    %546 = vmatpush.bf16.msra.mxu0 %v390
    %547 = vmatpush.bf16.msra.mxu0 %v387
    %548 = vmatpush.bf16.msra.mxu0 %v384
    %549 = vmatpush.bf16.msra.mxu0 %v381
    %550 = vmatpush.bf16.msra.mxu0 %v378
    %551 = vmatpush.bf16.msra.mxu0 %v375
    %552 = vmatpush.bf16.msra.mxu0 %v372
    %553 = vmatmul.bf16.gmra.mxu0 %v163
    %v554 = vpop.f32.mrf.mxu0
    %v555 = vadd.f32 %v536, %v554
    %v556 = vpop.f32.mrf.mxu0
    %v557 = vadd.f32 %v538, %v556
    %558 = vmatmul.bf16.gmra.mxu0 %v166
    %v559 = vpop.f32.mrf.mxu0
    %v560 = vadd.f32 %v541, %v559
    %v561 = vpop.f32.mrf.mxu0
    %v562 = vadd.f32 %v543, %v561
    %563 = vdwg.mxu0
    %564 = vmatpush.bf16.msra.mxu0 0
    %565 = vmatpush.bf16.msra.mxu0 0
    %566 = vmatpush.bf16.msra.mxu0 0
    %567 = vmatpush.bf16.msra.mxu0 0
    %568 = vmatpush.bf16.msra.mxu0 0
    %569 = vmatpush.bf16.msra.mxu0 0
    %570 = vmatpush.bf16.msra.mxu0 %v464
    %571 = vmatpush.bf16.msra.mxu0 %v396
    %572 = vmatmul.bf16.gmra.mxu0 %v454
    %v573 = vpop.f32.mrf.mxu0
    %v574 = vadd.f32 %v555, %v573
    %v575 = vpop.f32.mrf.mxu0
    %v576 = vadd.f32 %v557, %v575
    %577 = vmatmul.bf16.gmra.mxu0 %v457
    %v578 = vpop.f32.mrf.mxu0
    %v579 = vadd.f32 %v560, %v578
    %v580 = vpop.f32.mrf.mxu0
    %v581 = vadd.f32 %v562, %v580
    %582 = vdwg.mxu0
    %583 = vmatpush.bf16.msra.mxu0 %v370
    %584 = vmatpush.bf16.msra.mxu0 %v367
    %585 = vmatpush.bf16.msra.mxu0 %v364
    %586 = vmatpush.bf16.msra.mxu0 %v361
    %587 = vmatpush.bf16.msra.mxu0 %v358
    %588 = vmatpush.bf16.msra.mxu0 %v355
    %589 = vmatpush.bf16.msra.mxu0 %v352
    %590 = vmatpush.bf16.msra.mxu0 %v349
    %591 = vmatmul.bf16.gmra.mxu0 %v162
    %v592 = vpop.f32.mrf.mxu0
    %v593 = vadd.f32 0.0, %v592
    %v594 = vpop.f32.mrf.mxu0
    %v595 = vadd.f32 0.0, %v594
    %596 = vmatmul.bf16.gmra.mxu0 %v165
    %v597 = vpop.f32.mrf.mxu0
    %v598 = vadd.f32 0.0, %v597
    %v599 = vpop.f32.mrf.mxu0
    %v600 = vadd.f32 0.0, %v599
    %601 = vdwg.mxu0
    %602 = vmatpush.bf16.msra.mxu0 %v394
    %603 = vmatpush.bf16.msra.mxu0 %v391
    %604 = vmatpush.bf16.msra.mxu0 %v388
    %605 = vmatpush.bf16.msra.mxu0 %v385
    %606 = vmatpush.bf16.msra.mxu0 %v382
    %607 = vmatpush.bf16.msra.mxu0 %v379
    %608 = vmatpush.bf16.msra.mxu0 %v376
    %609 = vmatpush.bf16.msra.mxu0 %v373
    %610 = vmatmul.bf16.gmra.mxu0 %v163
    %v611 = vpop.f32.mrf.mxu0
    %v612 = vadd.f32 %v593, %v611
    %v613 = vpop.f32.mrf.mxu0
    %v614 = vadd.f32 %v595, %v613
    %615 = vmatmul.bf16.gmra.mxu0 %v166
    %v616 = vpop.f32.mrf.mxu0
    %v617 = vadd.f32 %v598, %v616
    %v618 = vpop.f32.mrf.mxu0
    %v619 = vadd.f32 %v600, %v618
    %620 = vdwg.mxu0
    %621 = vmatpush.bf16.msra.mxu0 0
    %622 = vmatpush.bf16.msra.mxu0 0
    %623 = vmatpush.bf16.msra.mxu0 0
    %624 = vmatpush.bf16.msra.mxu0 0
    %625 = vmatpush.bf16.msra.mxu0 0
    %626 = vmatpush.bf16.msra.mxu0 0
    %627 = vmatpush.bf16.msra.mxu0 %v467
    %628 = vmatpush.bf16.msra.mxu0 %v397
    %629 = vmatmul.bf16.gmra.mxu0 %v454
    %v630 = vpop.f32.mrf.mxu0
    %v631 = vadd.f32 %v612, %v630
    %v632 = vpop.f32.mrf.mxu0
    %v633 = vadd.f32 %v614, %v632
    %634 = vmatmul.bf16.gmra.mxu0 %v457
    %v635 = vpop.f32.mrf.mxu0
    %v636 = vadd.f32 %v617, %v635
    %v637 = vpop.f32.mrf.mxu0
    %v638 = vadd.f32 %v619, %v637
    %639 = vdwg.mxu0
    %v640 = vpack.c.bf16 %v519, %v517
    %v641 = vpack.c.bf16 %v576, %v574
    %v642 = vpack.c.bf16 %v633, %v631
    %v643 = vpack.c.bf16 %v524, %v522
    %v644 = vpack.c.bf16 %v581, %v579
    %v645 = vpack.c.bf16 %v638, %v636
    %v646 = vld [vmem:[%s2] sm:$0xf]
    %v647 = vld [vmem:[%s2 + $0x4] sm:$0xf]
    %v648 = vld [vmem:[%s2 + $0x8] sm:$0xf]
    %v649 = vld [vmem:[%s2 + $0xc] sm:$0xf]
    %v650 = vld [vmem:[%s2 + $0x10] sm:$0xf]
    %v651 = vld [vmem:[%s2 + $0x14] sm:$0xf]
    %v652 = vld [vmem:[%s2 + $0x18] sm:$0xf]
    %v653 = vld [vmem:[%s2 + $0x1c] sm:$0xf]
    %v654 = vld [vmem:[%s2 + $0x20] sm:$0xf]
    %v655 = vld [vmem:[%s2 + $0x24] sm:$0xf]
    %v656 = vld [vmem:[%s2 + $0x28] sm:$0xf]
    %v657 = vld [vmem:[%s2 + $0x2c] sm:$0xf]
    %v658 = vld [vmem:[%s2 + $0x30] sm:$0xf]
    %v659 = vld [vmem:[%s2 + $0x34] sm:$0xf]
    %v660 = vld [vmem:[%s2 + $0x38] sm:$0xf]
    %v661 = vld [vmem:[%s2 + $0x3c] sm:$0xf]
    %v662 = vld [vmem:[%s2 + $0x40] sm:$0xf]
    %v663 = vld [vmem:[%s2 + $0x44] sm:$0xf]
    %v664 = vld [vmem:[%s2 + $0x48] sm:$0xf]
    %v665 = vld [vmem:[%s2 + $0x4c] sm:$0xf]
    %v666 = vld [vmem:[%s2 + $0x50] sm:$0xf]
    %v667 = vld [vmem:[%s2 + $0x54] sm:$0xf]
    %v668 = vld [vmem:[%s2 + $0x58] sm:$0xf]
    %v669 = vld [vmem:[%s2 + $0x5c] sm:$0xf]
    %v670 = vld [vmem:[%s2 + $0x60] sm:$0xf]
    %v671 = vld [vmem:[%s2 + $0x64] sm:$0xf]
    %v672 = vld [vmem:[%s2 + $0x68] sm:$0xf]
    %v673 = vld [vmem:[%s2 + $0x6c] sm:$0xf]
    %v674 = vld [vmem:[%s2 + $0x70] sm:$0xf]
    %v675 = vld [vmem:[%s2 + $0x74] sm:$0xf]
    %v676 = vld [vmem:[%s2 + $0x78] sm:$0xf]
    %v677 = vld [vmem:[%s2 + $0x7c] sm:$0xf]
    %v678 = vld [vmem:[%s2 + $0x80] sm:$0xf]
    %v679 = vld [vmem:[%s2 + $0x84] sm:$0xf]
    %v680 = vld [vmem:[%s2 + $0x88] sm:$0xf]
    %v716 = vunpack.c.l.b16 %v646
    %v717 = vunpack.c.l.b16 %v647
    %v718 = vunpack.c.l.b16 %v648
    %v719 = vunpack.c.l.b16 %v649
    %v720 = vunpack.c.l.b16 %v650
    %v721 = vunpack.c.l.b16 %v651
    %v722 = vunpack.c.l.b16 %v652
    %v723 = vunpack.c.l.b16 %v653
    %v724 = vunpack.c.l.b16 %v654
    %v725 = vunpack.c.l.b16 %v655
    %v726 = vunpack.c.l.b16 %v656
    %v727 = vunpack.c.l.b16 %v657
    %v728 = vunpack.c.l.b16 %v658
    %v729 = vunpack.c.l.b16 %v659
    %v730 = vunpack.c.l.b16 %v660
    %v731 = vunpack.c.l.b16 %v661
    %v732 = vunpack.c.l.b16 %v662
    %v733 = vunpack.c.l.b16 %v663
    %v734 = vunpack.c.l.b16 %v664
    %v735 = vunpack.c.l.b16 %v665
    %v736 = vunpack.c.l.b16 %v666
    %v737 = vunpack.c.l.b16 %v667
    %v738 = vunpack.c.l.b16 %v668
    %v739 = vunpack.c.l.b16 %v669
    %v740 = vunpack.c.l.b16 %v670
    %v741 = vunpack.c.l.b16 %v671
    %v742 = vunpack.c.l.b16 %v672
    %v743 = vunpack.c.l.b16 %v673
    %v744 = vunpack.c.l.b16 %v674
    %v745 = vunpack.c.l.b16 %v675
    %v746 = vunpack.c.l.b16 %v676
    %v747 = vunpack.c.l.b16 %v677
    %v748 = vunpack.c.l.b16 %v678
    %v749 = vunpack.c.l.b16 %v679
    %v750 = vunpack.c.l.b16 %v680
    %v751 = vpack.c.b16 %v717, %v716
    %v752 = vpack.c.b16 %v719, %v718
    %v753 = vpack.c.b16 %v721, %v720
    %v754 = vpack.c.b16 %v723, %v722
    %v755 = vpack.c.b16 %v725, %v724
    %v756 = vpack.c.b16 %v727, %v726
    %v757 = vpack.c.b16 %v729, %v728
    %v758 = vpack.c.b16 %v731, %v730
    %v759 = vpack.c.b16 %v733, %v732
    %v760 = vpack.c.b16 %v735, %v734
    %v761 = vpack.c.b16 %v737, %v736
    %v762 = vpack.c.b16 %v739, %v738
    %v763 = vpack.c.b16 %v741, %v740
    %v764 = vpack.c.b16 %v743, %v742
    %v765 = vpack.c.b16 %v745, %v744
    %v766 = vpack.c.b16 %v747, %v746
    %v767 = vpack.c.b16 %v749, %v748
    %v768 = vpack.c.b16 %v750, %v750
    %v787 = vsel %vm452, %v642, 0
    %v790 = vsel %vm452, %v645, 0
    %v793 = vsel %vm459, %v768, 0
    %795 = vmatpush.bf16.msra.mxu0 %v758
    %796 = vmatpush.bf16.msra.mxu0 %v757
    %797 = vmatpush.bf16.msra.mxu0 %v756
    %798 = vmatpush.bf16.msra.mxu0 %v755
    %799 = vmatpush.bf16.msra.mxu0 %v754
    %800 = vmatpush.bf16.msra.mxu0 %v753
    %801 = vmatpush.bf16.msra.mxu0 %v752
    %802 = vmatpush.bf16.msra.mxu0 %v751
    %803 = vmatmul.bf16.gmra.mxu0 %v640
    %v804 = vpop.f32.mrf.mxu0
    %v805 = vadd.f32 0.0, %v804
    %v806 = vpop.f32.mrf.mxu0
    %v807 = vadd.f32 0.0, %v806
    %808 = vmatmul.bf16.gmra.mxu0 %v643
    %v809 = vpop.f32.mrf.mxu0
    %v810 = vadd.f32 0.0, %v809
    %v811 = vpop.f32.mrf.mxu0
    %v812 = vadd.f32 0.0, %v811
    %813 = vdwg.mxu0
    %814 = vmatpush.bf16.msra.mxu0 %v766
    %815 = vmatpush.bf16.msra.mxu0 %v765
    %816 = vmatpush.bf16.msra.mxu0 %v764
    %817 = vmatpush.bf16.msra.mxu0 %v763
    %818 = vmatpush.bf16.msra.mxu0 %v762
    %819 = vmatpush.bf16.msra.mxu0 %v761
    %820 = vmatpush.bf16.msra.mxu0 %v760
    %821 = vmatpush.bf16.msra.mxu0 %v759
    %822 = vmatmul.bf16.gmra.mxu0 %v641
    %v823 = vpop.f32.mrf.mxu0
    %v824 = vadd.f32 %v805, %v823
    %v825 = vpop.f32.mrf.mxu0
    %v826 = vadd.f32 %v807, %v825
    %827 = vmatmul.bf16.gmra.mxu0 %v644
    %v828 = vpop.f32.mrf.mxu0
    %v829 = vadd.f32 %v810, %v828
    %v830 = vpop.f32.mrf.mxu0
    %v831 = vadd.f32 %v812, %v830
    %832 = vdwg.mxu0
    %833 = vmatpush.bf16.msra.mxu0 0
    %834 = vmatpush.bf16.msra.mxu0 0
    %835 = vmatpush.bf16.msra.mxu0 0
    %836 = vmatpush.bf16.msra.mxu0 0
    %837 = vmatpush.bf16.msra.mxu0 0
    %838 = vmatpush.bf16.msra.mxu0 0
    %839 = vmatpush.bf16.msra.mxu0 %v793
    %840 = vmatpush.bf16.msra.mxu0 %v767
    %841 = vmatmul.bf16.gmra.mxu0 %v787
    %v842 = vpop.f32.mrf.mxu0
    %v843 = vadd.f32 %v824, %v842
    %v844 = vpop.f32.mrf.mxu0
    %v845 = vadd.f32 %v826, %v844
    %846 = vmatmul.bf16.gmra.mxu0 %v790
    %v847 = vpop.f32.mrf.mxu0
    %v848 = vadd.f32 %v829, %v847
    %v849 = vpop.f32.mrf.mxu0
    %v850 = vadd.f32 %v831, %v849
    %851 = vdwg.mxu0
    %v852 = vmul.f32 %v843, 3.9215687e-05
    %v853 = vmul.f32 %v845, 3.9215687e-05
    %v854 = vmul.f32 %v848, 3.9215687e-05
    %v855 = vmul.f32 %v850, 3.9215687e-05
    %v856 = vpack.c.bf16 %v852, %v852
    %v857 = vpack.c.bf16 %v853, %v853
    %v858 = vpack.c.bf16 %v854, %v854
    %v859 = vpack.c.bf16 %v855, %v855
    %v860 = vld [vmem:[%s3] sm:$0xff]
    %v861 = vld [vmem:[%s3 + $0x8] sm:$0xff]
    %v862 = vld [vmem:[%s3 + $0x10] sm:$0xff]
    %v863 = vld [vmem:[%s3 + $0x18] sm:$0x33]
    %s864 = scalar_lea.vmem %s3, 32
    %v865 = vld [vmem:[%s864] sm:$0xff]
    %v866 = vld [vmem:[%s864 + $0x8] sm:$0xff]
    %v867 = vld [vmem:[%s864 + $0x10] sm:$0xff]
    %v868 = vld [vmem:[%s864 + $0x18] sm:$0x33]
    %v873 = vunpack.c.l.b16 %v856
    %v874 = vunpack.c.l.b16 %v857
    %v875 = vunpack.c.l.b16 %v858
    %v876 = vunpack.c.l.b16 %v859
    %v877 = vpack.c.b16 %v874, %v873
    %v878 = vpack.c.b16 %v876, %v875
    %vm879 = vsmask.f32 7424
    %v881 = vshrl.u32 %v877, 16
    %v883 = vshll.u32 %v877, 16
    %v885 = vrot.slane %v883, 1
    %v886 = vor.u32 %v881, %v885
    %v888 = vshll.u32 %v878, 16
    %v890 = vrot.slane %v888, 1
    %v891 = vsel %vm879, %v886, %v890
    %v892 = vshrl.u32 %v878, 16
    %v894 = vor.u32 %v892, %v890
    %v899 = vunpack.c.l.b16 %v865
    %v900 = vunpack.c.h.b16 %v865
    %v901 = vunpack.c.l.b16 %v866
    %v902 = vunpack.c.h.b16 %v866
    %v903 = vunpack.c.l.b16 %v867
    %v904 = vunpack.c.h.b16 %v867
    %v905 = vunpack.c.l.b16 %v868
    %v906 = vunpack.c.h.b16 %v868
    %v907 = vpack.c.b16 %v901, %v899
    %v908 = vpack.c.b16 %v902, %v900
    %v909 = vpack.c.b16 %v905, %v903
    %v910 = vpack.c.b16 %v906, %v904
    %vm913 = vcmask 228352
    %v915 = vsel %vm913, %v891, 0
    %v918 = vsel %vm913, %v894, 0
    %vm920 = vcmask 1045504
    %v922 = vsel %vm920, %v909, 0
    %v925 = vsel %vm920, %v910, 0
    %927 = vmatpush.bf16.msra.mxu0 0
    %928 = vmatpush.bf16.msra.mxu0 0
    %929 = vmatpush.bf16.msra.mxu0 0
    %930 = vmatpush.bf16.msra.mxu0 0
    %931 = vmatpush.bf16.msra.mxu0 0
    %932 = vmatpush.bf16.msra.mxu0 0
    %933 = vmatpush.bf16.msra.mxu0 %v922
    %934 = vmatpush.bf16.msra.mxu0 %v907
    %935 = vmatmul.bf16.gmra.mxu0 %v915
    %v936 = vpop.f32.mrf.mxu0
    %v937 = vadd.f32 0.0, %v936
    %v938 = vpop.f32.mrf.mxu0
    %v939 = vadd.f32 0.0, %v938
    %940 = vmatmul.bf16.gmra.mxu0 %v918
    %v941 = vpop.f32.mrf.mxu0
    %v942 = vadd.f32 0.0, %v941
    %v943 = vpop.f32.mrf.mxu0
    %v944 = vadd.f32 0.0, %v943
    %945 = vdwg.mxu0
    %946 = vmatpush.bf16.msra.mxu0 0
    %947 = vmatpush.bf16.msra.mxu0 0
    %948 = vmatpush.bf16.msra.mxu0 0
    %949 = vmatpush.bf16.msra.mxu0 0
    %950 = vmatpush.bf16.msra.mxu0 0
    %951 = vmatpush.bf16.msra.mxu0 0
    %952 = vmatpush.bf16.msra.mxu0 %v925
    %953 = vmatpush.bf16.msra.mxu0 %v908
    %954 = vmatmul.bf16.gmra.mxu0 %v915
    %v955 = vpop.f32.mrf.mxu0
    %v956 = vadd.f32 0.0, %v955
    %v957 = vpop.f32.mrf.mxu0
    %v958 = vadd.f32 0.0, %v957
    %959 = vmatmul.bf16.gmra.mxu0 %v918
    %v960 = vpop.f32.mrf.mxu0
    %v961 = vadd.f32 0.0, %v960
    %v962 = vpop.f32.mrf.mxu0
    %v963 = vadd.f32 0.0, %v962
    %964 = vdwg.mxu0
    %v969 = vunpack.c.l.b16 %v860
    %v970 = vunpack.c.h.b16 %v860
    %v971 = vunpack.c.l.b16 %v861
    %v972 = vunpack.c.h.b16 %v861
    %v973 = vunpack.c.l.b16 %v862
    %v974 = vunpack.c.h.b16 %v862
    %v975 = vunpack.c.l.b16 %v863
    %v976 = vunpack.c.h.b16 %v863
    %v977 = vpack.c.b16 %v971, %v969
    %v978 = vpack.c.b16 %v972, %v970
    %v979 = vpack.c.b16 %v975, %v973
    %v980 = vpack.c.b16 %v976, %v974
    %v983 = vsel %vm913, %v877, 0
    %v985 = vsel %vm913, %v878, 0
    %v988 = vsel %vm920, %v979, 0
    %v991 = vsel %vm920, %v980, 0
    %993 = vmatpush.bf16.msra.mxu0 0
    %994 = vmatpush.bf16.msra.mxu0 0
    %995 = vmatpush.bf16.msra.mxu0 0
    %996 = vmatpush.bf16.msra.mxu0 0
    %997 = vmatpush.bf16.msra.mxu0 0
    %998 = vmatpush.bf16.msra.mxu0 0
    %999 = vmatpush.bf16.msra.mxu0 %v988
    %1000 = vmatpush.bf16.msra.mxu0 %v977
    %1001 = vmatmul.bf16.gmra.mxu0 %v983
    %v1002 = vpop.f32.mrf.mxu0
    %v1003 = vadd.f32 %v937, %v1002
    %v1004 = vpop.f32.mrf.mxu0
    %v1005 = vadd.f32 %v939, %v1004
    %1006 = vmatmul.bf16.gmra.mxu0 %v985
    %v1007 = vpop.f32.mrf.mxu0
    %v1008 = vadd.f32 %v942, %v1007
    %v1009 = vpop.f32.mrf.mxu0
    %v1010 = vadd.f32 %v944, %v1009
    %1011 = vdwg.mxu0
    %1012 = vmatpush.bf16.msra.mxu0 0
    %1013 = vmatpush.bf16.msra.mxu0 0
    %1014 = vmatpush.bf16.msra.mxu0 0
    %1015 = vmatpush.bf16.msra.mxu0 0
    %1016 = vmatpush.bf16.msra.mxu0 0
    %1017 = vmatpush.bf16.msra.mxu0 0
    %1018 = vmatpush.bf16.msra.mxu0 %v991
    %1019 = vmatpush.bf16.msra.mxu0 %v978
    %1020 = vmatmul.bf16.gmra.mxu0 %v983
    %v1021 = vpop.f32.mrf.mxu0
    %v1022 = vadd.f32 %v956, %v1021
    %v1023 = vpop.f32.mrf.mxu0
    %v1024 = vadd.f32 %v958, %v1023
    %1025 = vmatmul.bf16.gmra.mxu0 %v985
    %v1026 = vpop.f32.mrf.mxu0
    %v1027 = vadd.f32 %v961, %v1026
    %v1028 = vpop.f32.mrf.mxu0
    %v1029 = vadd.f32 %v963, %v1028
    %1030 = vdwg.mxu0
    %s1031 = scalar_lea.vmem %s3, 64
    %v1032 = vld [vmem:[%s1031] sm:$0xff]
    %v1033 = vld [vmem:[%s1031 + $0x8] sm:$0xff]
    %v1034 = vld [vmem:[%s1031 + $0x10] sm:$0xff]
    %v1035 = vld [vmem:[%s1031 + $0x18] sm:$0x33]
    %vm1036 = vcmask 1046528
    %v1037 = vrot.slane %v877, 1
    %v1038 = vrot.slane %v878, 1
    %v1039 = vsel %vm1036, %v1037, %v1038
    %v1044 = vunpack.c.l.b16 %v1032
    %v1045 = vunpack.c.h.b16 %v1032
    %v1046 = vunpack.c.l.b16 %v1033
    %v1047 = vunpack.c.h.b16 %v1033
    %v1048 = vunpack.c.l.b16 %v1034
    %v1049 = vunpack.c.h.b16 %v1034
    %v1050 = vunpack.c.l.b16 %v1035
    %v1051 = vunpack.c.h.b16 %v1035
    %v1052 = vpack.c.b16 %v1046, %v1044
    %v1053 = vpack.c.b16 %v1047, %v1045
    %v1054 = vpack.c.b16 %v1050, %v1048
    %v1055 = vpack.c.b16 %v1051, %v1049
    %v1059 = vsel %vm913, %v1039, 0
    %v1062 = vsel %vm913, %v1038, 0
    %v1065 = vsel %vm920, %v1054, 0
    %v1068 = vsel %vm920, %v1055, 0
    %1070 = vmatpush.bf16.msra.mxu0 0
    %1071 = vmatpush.bf16.msra.mxu0 0
    %1072 = vmatpush.bf16.msra.mxu0 0
    %1073 = vmatpush.bf16.msra.mxu0 0
    %1074 = vmatpush.bf16.msra.mxu0 0
    %1075 = vmatpush.bf16.msra.mxu0 0
    %1076 = vmatpush.bf16.msra.mxu0 %v1065
    %1077 = vmatpush.bf16.msra.mxu0 %v1052
    %1078 = vmatmul.bf16.gmra.mxu0 %v1059
    %v1079 = vpop.f32.mrf.mxu0
    %v1080 = vadd.f32 0.0, %v1079
    %v1081 = vpop.f32.mrf.mxu0
    %v1082 = vadd.f32 0.0, %v1081
    %1083 = vmatmul.bf16.gmra.mxu0 %v1062
    %v1084 = vpop.f32.mrf.mxu0
    %v1085 = vadd.f32 0.0, %v1084
    %v1086 = vpop.f32.mrf.mxu0
    %v1087 = vadd.f32 0.0, %v1086
    %1088 = vdwg.mxu0
    %1089 = vmatpush.bf16.msra.mxu0 0
    %1090 = vmatpush.bf16.msra.mxu0 0
    %1091 = vmatpush.bf16.msra.mxu0 0
    %1092 = vmatpush.bf16.msra.mxu0 0
    %1093 = vmatpush.bf16.msra.mxu0 0
    %1094 = vmatpush.bf16.msra.mxu0 0
    %1095 = vmatpush.bf16.msra.mxu0 %v1068
    %1096 = vmatpush.bf16.msra.mxu0 %v1053
    %1097 = vmatmul.bf16.gmra.mxu0 %v1059
    %v1098 = vpop.f32.mrf.mxu0
    %v1099 = vadd.f32 0.0, %v1098
    %v1100 = vpop.f32.mrf.mxu0
    %v1101 = vadd.f32 0.0, %v1100
    %1102 = vmatmul.bf16.gmra.mxu0 %v1062
    %v1103 = vpop.f32.mrf.mxu0
    %v1104 = vadd.f32 0.0, %v1103
    %v1105 = vpop.f32.mrf.mxu0
    %v1106 = vadd.f32 0.0, %v1105
    %1107 = vdwg.mxu0
    %v1108 = vadd.f32 %v1003, %v1080
    %v1109 = vadd.f32 %v1022, %v1099
    %v1110 = vadd.f32 %v1005, %v1082
    %v1111 = vadd.f32 %v1024, %v1101
    %v1112 = vadd.f32 %v1008, %v1085
    %v1113 = vadd.f32 %v1027, %v1104
    %v1114 = vadd.f32 %v1010, %v1087
    %v1115 = vadd.f32 %v1029, %v1106
    %s1116 = scalar_lea.vmem %s3, 96
    %v1117 = vld [vmem:[%s1116] sm:$0xff]
    %v1118 = vld [vmem:[%s1116 + $0x8] sm:$0xff]
    %v1119 = vld [vmem:[%s1116 + $0x10] sm:$0xff]
    %v1120 = vld [vmem:[%s1116 + $0x18] sm:$0x33]
    %vm1121 = vsmask.f32 6400
    %v1122 = vrot.slane %v881, 1
    %v1123 = vrot.slane %v883, 2
    %v1124 = vor.u32 %v1122, %v1123
    %v1125 = vrot.slane %v892, 1
    %v1126 = vrot.slane %v888, 2
    %v1127 = vor.u32 %v1125, %v1126
    %v1128 = vsel %vm1121, %v1124, %v1127
    %v1133 = vunpack.c.l.b16 %v1117
    %v1134 = vunpack.c.h.b16 %v1117
    %v1135 = vunpack.c.l.b16 %v1118
    %v1136 = vunpack.c.h.b16 %v1118
    %v1137 = vunpack.c.l.b16 %v1119
    %v1138 = vunpack.c.h.b16 %v1119
    %v1139 = vunpack.c.l.b16 %v1120
    %v1140 = vunpack.c.h.b16 %v1120
    %v1141 = vpack.c.b16 %v1135, %v1133
    %v1142 = vpack.c.b16 %v1136, %v1134
    %v1143 = vpack.c.b16 %v1139, %v1137
    %v1144 = vpack.c.b16 %v1140, %v1138
    %v1148 = vsel %vm913, %v1128, 0
    %v1151 = vsel %vm913, %v1127, 0
    %v1154 = vsel %vm920, %v1143, 0
    %v1157 = vsel %vm920, %v1144, 0
    %1159 = vmatpush.bf16.msra.mxu0 0
    %1160 = vmatpush.bf16.msra.mxu0 0
    %1161 = vmatpush.bf16.msra.mxu0 0
    %1162 = vmatpush.bf16.msra.mxu0 0
    %1163 = vmatpush.bf16.msra.mxu0 0
    %1164 = vmatpush.bf16.msra.mxu0 0
    %1165 = vmatpush.bf16.msra.mxu0 %v1154
    %1166 = vmatpush.bf16.msra.mxu0 %v1141
    %1167 = vmatmul.bf16.gmra.mxu0 %v1148
    %v1168 = vpop.f32.mrf.mxu0
    %v1169 = vadd.f32 0.0, %v1168
    %v1170 = vpop.f32.mrf.mxu0
    %v1171 = vadd.f32 0.0, %v1170
    %1172 = vmatmul.bf16.gmra.mxu0 %v1151
    %v1173 = vpop.f32.mrf.mxu0
    %v1174 = vadd.f32 0.0, %v1173
    %v1175 = vpop.f32.mrf.mxu0
    %v1176 = vadd.f32 0.0, %v1175
    %1177 = vdwg.mxu0
    %1178 = vmatpush.bf16.msra.mxu0 0
    %1179 = vmatpush.bf16.msra.mxu0 0
    %1180 = vmatpush.bf16.msra.mxu0 0
    %1181 = vmatpush.bf16.msra.mxu0 0
    %1182 = vmatpush.bf16.msra.mxu0 0
    %1183 = vmatpush.bf16.msra.mxu0 0
    %1184 = vmatpush.bf16.msra.mxu0 %v1157
    %1185 = vmatpush.bf16.msra.mxu0 %v1142
    %1186 = vmatmul.bf16.gmra.mxu0 %v1148
    %v1187 = vpop.f32.mrf.mxu0
    %v1188 = vadd.f32 0.0, %v1187
    %v1189 = vpop.f32.mrf.mxu0
    %v1190 = vadd.f32 0.0, %v1189
    %1191 = vmatmul.bf16.gmra.mxu0 %v1151
    %v1192 = vpop.f32.mrf.mxu0
    %v1193 = vadd.f32 0.0, %v1192
    %v1194 = vpop.f32.mrf.mxu0
    %v1195 = vadd.f32 0.0, %v1194
    %1196 = vdwg.mxu0
    %v1197 = vadd.f32 %v1108, %v1169
    %v1198 = vadd.f32 %v1109, %v1188
    %v1199 = vadd.f32 %v1110, %v1171
    %v1200 = vadd.f32 %v1111, %v1190
    %v1201 = vadd.f32 %v1112, %v1174
    %v1202 = vadd.f32 %v1113, %v1193
    %v1203 = vadd.f32 %v1114, %v1176
    %v1204 = vadd.f32 %v1115, %v1195
    %v1205 = vld [vmem:[%s4] sm:$0x3]
    %v1207 = vperm.slane %v1205, 0
    %v1208 = vperm.slane %v1205, 1
    %v1211 = vadd.f32 %v1197, %v1207
    %v1212 = vadd.f32 %v1198, %v1208
    %v1213 = vadd.f32 %v1199, %v1207
    %v1214 = vadd.f32 %v1200, %v1208
    %v1215 = vadd.f32 %v1201, %v1207
    %v1216 = vadd.f32 %v1202, %v1208
    %v1217 = vadd.f32 %v1203, %v1207
    %v1218 = vadd.f32 %v1204, %v1208
    %v1219 = vmax.f32 %v1211, 0.0
    %v1220 = vmax.f32 %v1212, 0.0
    %v1221 = vmax.f32 %v1213, 0.0
    %v1222 = vmax.f32 %v1214, 0.0
    %v1223 = vmax.f32 %v1215, 0.0
    %v1224 = vmax.f32 %v1216, 0.0
    %v1225 = vmax.f32 %v1217, 0.0
    %v1226 = vmax.f32 %v1218, 0.0
    %v1227 = vpack.c.bf16 %v1221, %v1219
    %v1228 = vpack.c.bf16 %v1222, %v1220
    %v1229 = vpack.c.bf16 %v1225, %v1223
    %v1230 = vpack.c.bf16 %v1226, %v1224
    %v1231 = vld [vmem:[%s5] sm:$0xf]
    %v1232 = vld [vmem:[%s5 + $0x4] sm:$0xf]
    %v1233 = vld [vmem:[%s5 + $0x8] sm:$0xf]
    %v1237 = vunpack.c.l.b16 %v1231
    %v1238 = vunpack.c.l.b16 %v1232
    %v1239 = vunpack.c.l.b16 %v1233
    %v1240 = vpack.c.b16 %v1238, %v1237
    %v1241 = vpack.c.b16 %v1239, %v1239
    %vm1242 = vcmask 203776
    %v1244 = vsel %vm1242, %v1240, 0
    %v1247 = vsel %vm1242, %v1241, 0
    %vm1249 = vcmask 1044480
    %v1250 = vsel %vm459, 4294967295, 65535
    %v1251 = vsel %vm1249, %v1250, 0
    %v1253 = vand.u32 %v1229, %v1251
    %v1256 = vand.u32 %v1230, %v1251
    %1258 = vmatpush.bf16.msra.mxu0 0
    %1259 = vmatpush.bf16.msra.mxu0 0
    %1260 = vmatpush.bf16.msra.mxu0 0
    %1261 = vmatpush.bf16.msra.mxu0 0
    %1262 = vmatpush.bf16.msra.mxu0 0
    %1263 = vmatpush.bf16.msra.mxu0 0
    %1264 = vmatpush.bf16.msra.mxu0 %v1253
    %1265 = vmatpush.bf16.msra.mxu0 %v1227
    %1266 = vmatmul.bf16.gmra.mxu0 %v1244
    %v1267 = vpop.f32.mrf.mxu0
    %v1268 = vadd.f32 0.0, %v1267
    %v1269 = vpop.f32.mrf.mxu0
    %v1270 = vadd.f32 0.0, %v1269
    %1271 = vmatmul.bf16.gmra.mxu0 %v1247
    %v1272 = vpop.f32.mrf.mxu0
    %v1273 = vadd.f32 0.0, %v1272
    %v1274 = vpop.f32.mrf.mxu0
    %1275 = vdwg.mxu0
    %1276 = vmatpush.bf16.msra.mxu0 0
    %1277 = vmatpush.bf16.msra.mxu0 0
    %1278 = vmatpush.bf16.msra.mxu0 0
    %1279 = vmatpush.bf16.msra.mxu0 0
    %1280 = vmatpush.bf16.msra.mxu0 0
    %1281 = vmatpush.bf16.msra.mxu0 0
    %1282 = vmatpush.bf16.msra.mxu0 %v1256
    %1283 = vmatpush.bf16.msra.mxu0 %v1228
    %1284 = vmatmul.bf16.gmra.mxu0 %v1244
    %v1285 = vpop.f32.mrf.mxu0
    %v1286 = vadd.f32 0.0, %v1285
    %v1287 = vpop.f32.mrf.mxu0
    %v1288 = vadd.f32 0.0, %v1287
    %1289 = vmatmul.bf16.gmra.mxu0 %v1247
    %v1290 = vpop.f32.mrf.mxu0
    %v1291 = vadd.f32 0.0, %v1290
    %v1292 = vpop.f32.mrf.mxu0
    %1293 = vdwg.mxu0
    %v1298 = vrot.slane %v1270, 4
    %v1299 = vrot.slane %v1273, 4
    %v1300 = vsel %vm459, %v1298, %v1299
    %v1301 = vrot.slane %v1288, 4
    %v1302 = vrot.slane %v1291, 4
    %v1303 = vsel %vm459, %v1301, %v1302
    %v1308 = vmax.f32 %v1268, %v1300
    %v1309 = vmax.f32 %v1286, %v1303
    %v1310 = vmax.f32 %v1270, %v1299
    %v1311 = vmax.f32 %v1288, %v1302
    %v1312 = vpack.c.bf16 %v1310, %v1308
    %v1313 = vpack.c.bf16 %v1311, %v1309
    %v1314 = vld [vmem:[%s6] sm:$0xff]
    %v1315 = vld [vmem:[%s6 + $0x8] sm:$0xff]
    %v1316 = vld [vmem:[%s6 + $0x10] sm:$0xff]
    %v1317 = vld [vmem:[%s6 + $0x18] sm:$0xff]
    %v1318 = vld [vmem:[%s6 + $0x20] sm:$0xff]
    %v1319 = vld [vmem:[%s6 + $0x28] sm:$0xff]
    %v1320 = vld [vmem:[%s6 + $0x30] sm:$0xff]
    %v1321 = vld [vmem:[%s6 + $0x38] sm:$0xff]
    %v1322 = vld [vmem:[%s6 + $0x40] sm:$0xff]
    %v1323 = vld [vmem:[%s6 + $0x48] sm:$0xff]
    %v1324 = vld [vmem:[%s6 + $0x50] sm:$0xff]
    %v1325 = vld [vmem:[%s6 + $0x58] sm:$0xff]
    %v1326 = vld [vmem:[%s6 + $0x60] sm:$0xff]
    %v1327 = vld [vmem:[%s6 + $0x68] sm:$0xff]
    %v1328 = vld [vmem:[%s6 + $0x70] sm:$0xff]
    %v1329 = vld [vmem:[%s6 + $0x78] sm:$0xff]
    %v1330 = vld [vmem:[%s6 + $0x80] sm:$0xff]
    %v1331 = vld [vmem:[%s6 + $0x88] sm:$0xff]
    %v1332 = vld [vmem:[%s6 + $0x90] sm:$0xff]
    %v1333 = vld [vmem:[%s6 + $0x98] sm:$0xff]
    %v1334 = vld [vmem:[%s6 + $0xa0] sm:$0xff]
    %v1335 = vld [vmem:[%s6 + $0xa8] sm:$0xff]
    %v1336 = vld [vmem:[%s6 + $0xb0] sm:$0xff]
    %v1337 = vld [vmem:[%s6 + $0xb8] sm:$0xff]
    %v1338 = vld [vmem:[%s6 + $0xc0] sm:$0xff]
    %v1364 = vunpack.c.l.b16 %v1314
    %v1365 = vunpack.c.h.b16 %v1314
    %v1366 = vunpack.c.l.b16 %v1315
    %v1367 = vunpack.c.h.b16 %v1315
    %v1368 = vunpack.c.l.b16 %v1316
    %v1369 = vunpack.c.h.b16 %v1316
    %v1370 = vunpack.c.l.b16 %v1317
    %v1371 = vunpack.c.h.b16 %v1317
    %v1372 = vunpack.c.l.b16 %v1318
    %v1373 = vunpack.c.h.b16 %v1318
    %v1374 = vunpack.c.l.b16 %v1319
    %v1375 = vunpack.c.h.b16 %v1319
    %v1376 = vunpack.c.l.b16 %v1320
    %v1377 = vunpack.c.h.b16 %v1320
    %v1378 = vunpack.c.l.b16 %v1321
    %v1379 = vunpack.c.h.b16 %v1321
    %v1380 = vunpack.c.l.b16 %v1322
    %v1381 = vunpack.c.h.b16 %v1322
    %v1382 = vunpack.c.l.b16 %v1323
    %v1383 = vunpack.c.h.b16 %v1323
    %v1384 = vunpack.c.l.b16 %v1324
    %v1385 = vunpack.c.h.b16 %v1324
    %v1386 = vunpack.c.l.b16 %v1325
    %v1387 = vunpack.c.h.b16 %v1325
    %v1388 = vunpack.c.l.b16 %v1326
    %v1389 = vunpack.c.h.b16 %v1326
    %v1390 = vunpack.c.l.b16 %v1327
    %v1391 = vunpack.c.h.b16 %v1327
    %v1392 = vunpack.c.l.b16 %v1328
    %v1393 = vunpack.c.h.b16 %v1328
    %v1394 = vunpack.c.l.b16 %v1329
    %v1395 = vunpack.c.h.b16 %v1329
    %v1396 = vunpack.c.l.b16 %v1330
    %v1397 = vunpack.c.h.b16 %v1330
    %v1398 = vunpack.c.l.b16 %v1331
    %v1399 = vunpack.c.h.b16 %v1331
    %v1400 = vunpack.c.l.b16 %v1332
    %v1401 = vunpack.c.h.b16 %v1332
    %v1402 = vunpack.c.l.b16 %v1333
    %v1403 = vunpack.c.h.b16 %v1333
    %v1404 = vunpack.c.l.b16 %v1334
    %v1405 = vunpack.c.h.b16 %v1334
    %v1406 = vunpack.c.l.b16 %v1335
    %v1407 = vunpack.c.h.b16 %v1335
    %v1408 = vunpack.c.l.b16 %v1336
    %v1409 = vunpack.c.h.b16 %v1336
    %v1410 = vunpack.c.l.b16 %v1337
    %v1411 = vunpack.c.h.b16 %v1337
    %v1412 = vunpack.c.l.b16 %v1338
    %v1413 = vunpack.c.h.b16 %v1338
    %v1414 = vpack.c.b16 %v1366, %v1364
    %v1415 = vpack.c.b16 %v1367, %v1365
    %v1416 = vpack.c.b16 %v1370, %v1368
    %v1417 = vpack.c.b16 %v1371, %v1369
    %v1418 = vpack.c.b16 %v1374, %v1372
    %v1419 = vpack.c.b16 %v1375, %v1373
    %v1420 = vpack.c.b16 %v1378, %v1376
    %v1421 = vpack.c.b16 %v1379, %v1377
    %v1422 = vpack.c.b16 %v1382, %v1380
    %v1423 = vpack.c.b16 %v1383, %v1381
    %v1424 = vpack.c.b16 %v1386, %v1384
    %v1425 = vpack.c.b16 %v1387, %v1385
    %v1426 = vpack.c.b16 %v1390, %v1388
    %v1427 = vpack.c.b16 %v1391, %v1389
    %v1428 = vpack.c.b16 %v1394, %v1392
    %v1429 = vpack.c.b16 %v1395, %v1393
    %v1430 = vpack.c.b16 %v1398, %v1396
    %v1431 = vpack.c.b16 %v1399, %v1397
    %v1432 = vpack.c.b16 %v1402, %v1400
    %v1433 = vpack.c.b16 %v1403, %v1401
    %v1434 = vpack.c.b16 %v1406, %v1404
    %v1435 = vpack.c.b16 %v1407, %v1405
    %v1436 = vpack.c.b16 %v1410, %v1408
    %v1437 = vpack.c.b16 %v1411, %v1409
    %v1438 = vpack.c.b16 %v1412, %v1412
    %v1439 = vpack.c.b16 %v1413, %v1413
    %vm1464 = vcmask 588800
    %v1466 = vsel %vm1464, %v1313, 0
    %v1469 = vsel %vm459, %v1438, 0
    %v1472 = vsel %vm459, %v1439, 0
    %1474 = vmatpush.bf16.msra.mxu0 %v1428
    %1475 = vmatpush.bf16.msra.mxu0 %v1426
    %1476 = vmatpush.bf16.msra.mxu0 %v1424
    %1477 = vmatpush.bf16.msra.mxu0 %v1422
    %1478 = vmatpush.bf16.msra.mxu0 %v1420
    %1479 = vmatpush.bf16.msra.mxu0 %v1418
    %1480 = vmatpush.bf16.msra.mxu0 %v1416
    %1481 = vmatpush.bf16.msra.mxu0 %v1414
    %1482 = vmatmul.bf16.gmra.mxu0 %v1312
    %v1483 = vpop.f32.mrf.mxu0
    %v1484 = vadd.f32 0.0, %v1483
    %v1485 = vpop.f32.mrf.mxu0
    %v1486 = vadd.f32 0.0, %v1485
    %1487 = vdwg.mxu0
    %1488 = vmatpush.bf16.msra.mxu0 0
    %1489 = vmatpush.bf16.msra.mxu0 0
    %1490 = vmatpush.bf16.msra.mxu0 0
    %1491 = vmatpush.bf16.msra.mxu0 %v1469
    %1492 = vmatpush.bf16.msra.mxu0 %v1436
    %1493 = vmatpush.bf16.msra.mxu0 %v1434
    %1494 = vmatpush.bf16.msra.mxu0 %v1432
    %1495 = vmatpush.bf16.msra.mxu0 %v1430
    %1496 = vmatmul.bf16.gmra.mxu0 %v1466
    %v1497 = vpop.f32.mrf.mxu0
    %v1498 = vadd.f32 %v1484, %v1497
    %v1499 = vpop.f32.mrf.mxu0
    %v1500 = vadd.f32 %v1486, %v1499
    %1501 = vdwg.mxu0
    %1502 = vmatpush.bf16.msra.mxu0 %v1429
    %1503 = vmatpush.bf16.msra.mxu0 %v1427
    %1504 = vmatpush.bf16.msra.mxu0 %v1425
    %1505 = vmatpush.bf16.msra.mxu0 %v1423
    %1506 = vmatpush.bf16.msra.mxu0 %v1421
    %1507 = vmatpush.bf16.msra.mxu0 %v1419
    %1508 = vmatpush.bf16.msra.mxu0 %v1417
    %1509 = vmatpush.bf16.msra.mxu0 %v1415
    %1510 = vmatmul.bf16.gmra.mxu0 %v1312
    %v1511 = vpop.f32.mrf.mxu0
    %v1512 = vadd.f32 0.0, %v1511
    %v1513 = vpop.f32.mrf.mxu0
    %v1514 = vadd.f32 0.0, %v1513
    %1515 = vdwg.mxu0
    %1516 = vmatpush.bf16.msra.mxu0 0
    %1517 = vmatpush.bf16.msra.mxu0 0
    %1518 = vmatpush.bf16.msra.mxu0 0
    %1519 = vmatpush.bf16.msra.mxu0 %v1472
    %1520 = vmatpush.bf16.msra.mxu0 %v1437
    %1521 = vmatpush.bf16.msra.mxu0 %v1435
    %1522 = vmatpush.bf16.msra.mxu0 %v1433
    %1523 = vmatpush.bf16.msra.mxu0 %v1431
    %1524 = vmatmul.bf16.gmra.mxu0 %v1466
    %v1525 = vpop.f32.mrf.mxu0
    %v1526 = vadd.f32 %v1512, %v1525
    %v1527 = vpop.f32.mrf.mxu0
    %v1528 = vadd.f32 %v1514, %v1527
    %1529 = vdwg.mxu0
    %1534 = vrot.lane.b32.xlu0 %v1498, 32
    %v1535 = vpop.permute.xlu0 %1534
    %1536 = vrot.lane.b32.xlu0 %v1526, 32
    %v1537 = vpop.permute.xlu0 %1536
    %1538 = vrot.lane.b32.xlu0 %v1500, 32
    %v1539 = vpop.permute.xlu0 %1538
    %1540 = vrot.lane.b32.xlu0 %v1528, 32
    %v1541 = vpop.permute.xlu0 %1540
    %vm1542 = vcmask 261120
    %v1543 = vsel %vm1542, %v1535, %v1537
    %v1544 = vsel %vm1542, %v1539, %v1541
    %v1547 = vmax.f32 %v1498, %v1543
    %v1548 = vmax.f32 %v1500, %v1544
    %v1549 = vpack.c.bf16 %v1547, %v1547
    %v1550 = vpack.c.bf16 %v1548, %v1548
    %v1551 = vld [vmem:[%s7] sm:$0xff]
    %v1552 = vld [vmem:[%s7 + $0x8] sm:$0xff]
    %v1553 = vld [vmem:[%s7 + $0x10] sm:$0xff]
    %v1554 = vld [vmem:[%s7 + $0x18] sm:$0xff]
    %v1555 = vld [vmem:[%s7 + $0x20] sm:$0xff]
    %v1556 = vld [vmem:[%s7 + $0x28] sm:$0xff]
    %v1557 = vld [vmem:[%s7 + $0x30] sm:$0xff]
    %v1558 = vld [vmem:[%s7 + $0x38] sm:$0xff]
    %v1559 = vld [vmem:[%s7 + $0x40] sm:$0xff]
    %v1560 = vld [vmem:[%s7 + $0x48] sm:$0xff]
    %v1561 = vld [vmem:[%s7 + $0x50] sm:$0xff]
    %v1562 = vld [vmem:[%s7 + $0x58] sm:$0xff]
    %s1563 = scalar_lea.vmem %s7, 96
    %v1564 = vld [vmem:[%s1563] sm:$0xff]
    %v1565 = vld [vmem:[%s1563 + $0x8] sm:$0xff]
    %v1566 = vld [vmem:[%s1563 + $0x10] sm:$0xff]
    %v1567 = vld [vmem:[%s1563 + $0x18] sm:$0xff]
    %v1568 = vld [vmem:[%s1563 + $0x20] sm:$0xff]
    %v1569 = vld [vmem:[%s1563 + $0x28] sm:$0xff]
    %v1570 = vld [vmem:[%s1563 + $0x30] sm:$0xff]
    %v1571 = vld [vmem:[%s1563 + $0x38] sm:$0xff]
    %v1572 = vld [vmem:[%s1563 + $0x40] sm:$0xff]
    %v1573 = vld [vmem:[%s1563 + $0x48] sm:$0xff]
    %v1574 = vld [vmem:[%s1563 + $0x50] sm:$0xff]
    %v1575 = vld [vmem:[%s1563 + $0x58] sm:$0xff]
    %v1578 = vunpack.c.l.b16 %v1549
    %v1579 = vunpack.c.l.b16 %v1550
    %v1580 = vpack.c.b16 %v1579, %v1578
    %v1582 = vshrl.u32 %v1580, 16
    %v1584 = vshll.u32 %v1580, 16
    %v1586 = vrot.slane %v1584, 1
    %v1587 = vor.u32 %v1582, %v1586
    %v1600 = vunpack.c.l.b16 %v1564
    %v1601 = vunpack.c.h.b16 %v1564
    %v1602 = vunpack.c.l.b16 %v1565
    %v1603 = vunpack.c.h.b16 %v1565
    %v1604 = vunpack.c.l.b16 %v1566
    %v1605 = vunpack.c.h.b16 %v1566
    %v1606 = vunpack.c.l.b16 %v1567
    %v1607 = vunpack.c.h.b16 %v1567
    %v1608 = vunpack.c.l.b16 %v1568
    %v1609 = vunpack.c.h.b16 %v1568
    %v1610 = vunpack.c.l.b16 %v1569
    %v1611 = vunpack.c.h.b16 %v1569
    %v1612 = vunpack.c.l.b16 %v1570
    %v1613 = vunpack.c.h.b16 %v1570
    %v1614 = vunpack.c.l.b16 %v1571
    %v1615 = vunpack.c.h.b16 %v1571
    %v1616 = vunpack.c.l.b16 %v1572
    %v1617 = vunpack.c.h.b16 %v1572
    %v1618 = vunpack.c.l.b16 %v1573
    %v1619 = vunpack.c.h.b16 %v1573
    %v1620 = vunpack.c.l.b16 %v1574
    %v1621 = vunpack.c.h.b16 %v1574
    %v1622 = vunpack.c.l.b16 %v1575
    %v1623 = vunpack.c.h.b16 %v1575
    %v1624 = vpack.c.b16 %v1602, %v1600
    %v1625 = vpack.c.b16 %v1603, %v1601
    %v1626 = vpack.c.b16 %v1606, %v1604
    %v1627 = vpack.c.b16 %v1607, %v1605
    %v1628 = vpack.c.b16 %v1610, %v1608
    %v1629 = vpack.c.b16 %v1611, %v1609
    %v1630 = vpack.c.b16 %v1614, %v1612
    %v1631 = vpack.c.b16 %v1615, %v1613
    %v1632 = vpack.c.b16 %v1618, %v1616
    %v1633 = vpack.c.b16 %v1619, %v1617
    %v1634 = vpack.c.b16 %v1622, %v1620
    %v1635 = vpack.c.b16 %v1623, %v1621
    %vm1648 = vcmask 785408
    %v1650 = vsel %vm1648, %v1587, 0
    %1652 = vmatpush.bf16.msra.mxu0 0
    %1653 = vmatpush.bf16.msra.mxu0 0
    %1654 = vmatpush.bf16.msra.mxu0 %v1634
    %1655 = vmatpush.bf16.msra.mxu0 %v1632
    %1656 = vmatpush.bf16.msra.mxu0 %v1630
    %1657 = vmatpush.bf16.msra.mxu0 %v1628
    %1658 = vmatpush.bf16.msra.mxu0 %v1626
    %1659 = vmatpush.bf16.msra.mxu0 %v1624
    %1660 = vmatmul.bf16.gmra.mxu0 %v1650
    %v1661 = vpop.f32.mrf.mxu0
    %v1662 = vadd.f32 0.0, %v1661
    %v1663 = vpop.f32.mrf.mxu0
    %v1664 = vadd.f32 0.0, %v1663
    %1665 = vdwg.mxu0
    %1666 = vmatpush.bf16.msra.mxu0 0
    %1667 = vmatpush.bf16.msra.mxu0 0
    %1668 = vmatpush.bf16.msra.mxu0 %v1635
    %1669 = vmatpush.bf16.msra.mxu0 %v1633
    %1670 = vmatpush.bf16.msra.mxu0 %v1631
    %1671 = vmatpush.bf16.msra.mxu0 %v1629
    %1672 = vmatpush.bf16.msra.mxu0 %v1627
    %1673 = vmatpush.bf16.msra.mxu0 %v1625
    %1674 = vmatmul.bf16.gmra.mxu0 %v1650
    %v1675 = vpop.f32.mrf.mxu0
    %v1676 = vadd.f32 0.0, %v1675
    %v1677 = vpop.f32.mrf.mxu0
    %v1678 = vadd.f32 0.0, %v1677
    %1679 = vdwg.mxu0
    %v1692 = vunpack.c.l.b16 %v1551
    %v1693 = vunpack.c.h.b16 %v1551
    %v1694 = vunpack.c.l.b16 %v1552
    %v1695 = vunpack.c.h.b16 %v1552
    %v1696 = vunpack.c.l.b16 %v1553
    %v1697 = vunpack.c.h.b16 %v1553
    %v1698 = vunpack.c.l.b16 %v1554
    %v1699 = vunpack.c.h.b16 %v1554
    %v1700 = vunpack.c.l.b16 %v1555
    %v1701 = vunpack.c.h.b16 %v1555
    %v1702 = vunpack.c.l.b16 %v1556
    %v1703 = vunpack.c.h.b16 %v1556
    %v1704 = vunpack.c.l.b16 %v1557
    %v1705 = vunpack.c.h.b16 %v1557
    %v1706 = vunpack.c.l.b16 %v1558
    %v1707 = vunpack.c.h.b16 %v1558
    %v1708 = vunpack.c.l.b16 %v1559
    %v1709 = vunpack.c.h.b16 %v1559
    %v1710 = vunpack.c.l.b16 %v1560
    %v1711 = vunpack.c.h.b16 %v1560
    %v1712 = vunpack.c.l.b16 %v1561
    %v1713 = vunpack.c.h.b16 %v1561
    %v1714 = vunpack.c.l.b16 %v1562
    %v1715 = vunpack.c.h.b16 %v1562
    %v1716 = vpack.c.b16 %v1694, %v1692
    %v1717 = vpack.c.b16 %v1695, %v1693
    %v1718 = vpack.c.b16 %v1698, %v1696
    %v1719 = vpack.c.b16 %v1699, %v1697
    %v1720 = vpack.c.b16 %v1702, %v1700
    %v1721 = vpack.c.b16 %v1703, %v1701
    %v1722 = vpack.c.b16 %v1706, %v1704
    %v1723 = vpack.c.b16 %v1707, %v1705
    %v1724 = vpack.c.b16 %v1710, %v1708
    %v1725 = vpack.c.b16 %v1711, %v1709
    %v1726 = vpack.c.b16 %v1714, %v1712
    %v1727 = vpack.c.b16 %v1715, %v1713
    %v1740 = vsel %vm1648, %v1580, 0
    %1742 = vmatpush.bf16.msra.mxu0 0
    %1743 = vmatpush.bf16.msra.mxu0 0
    %1744 = vmatpush.bf16.msra.mxu0 %v1726
    %1745 = vmatpush.bf16.msra.mxu0 %v1724
    %1746 = vmatpush.bf16.msra.mxu0 %v1722
    %1747 = vmatpush.bf16.msra.mxu0 %v1720
    %1748 = vmatpush.bf16.msra.mxu0 %v1718
    %1749 = vmatpush.bf16.msra.mxu0 %v1716
    %1750 = vmatmul.bf16.gmra.mxu0 %v1740
    %v1751 = vpop.f32.mrf.mxu0
    %v1752 = vadd.f32 %v1662, %v1751
    %v1753 = vpop.f32.mrf.mxu0
    %v1754 = vadd.f32 %v1664, %v1753
    %1755 = vdwg.mxu0
    %1756 = vmatpush.bf16.msra.mxu0 0
    %1757 = vmatpush.bf16.msra.mxu0 0
    %1758 = vmatpush.bf16.msra.mxu0 %v1727
    %1759 = vmatpush.bf16.msra.mxu0 %v1725
    %1760 = vmatpush.bf16.msra.mxu0 %v1723
    %1761 = vmatpush.bf16.msra.mxu0 %v1721
    %1762 = vmatpush.bf16.msra.mxu0 %v1719
    %1763 = vmatpush.bf16.msra.mxu0 %v1717
    %1764 = vmatmul.bf16.gmra.mxu0 %v1740
    %v1765 = vpop.f32.mrf.mxu0
    %v1766 = vadd.f32 %v1676, %v1765
    %v1767 = vpop.f32.mrf.mxu0
    %v1768 = vadd.f32 %v1678, %v1767
    %1769 = vdwg.mxu0
    %s1770 = scalar_lea.vmem %s7, 192
    %v1771 = vld [vmem:[%s1770] sm:$0xff]
    %v1772 = vld [vmem:[%s1770 + $0x8] sm:$0xff]
    %v1773 = vld [vmem:[%s1770 + $0x10] sm:$0xff]
    %v1774 = vld [vmem:[%s1770 + $0x18] sm:$0xff]
    %v1775 = vld [vmem:[%s1770 + $0x20] sm:$0xff]
    %v1776 = vld [vmem:[%s1770 + $0x28] sm:$0xff]
    %v1777 = vld [vmem:[%s1770 + $0x30] sm:$0xff]
    %v1778 = vld [vmem:[%s1770 + $0x38] sm:$0xff]
    %v1779 = vld [vmem:[%s1770 + $0x40] sm:$0xff]
    %v1780 = vld [vmem:[%s1770 + $0x48] sm:$0xff]
    %v1781 = vld [vmem:[%s1770 + $0x50] sm:$0xff]
    %v1782 = vld [vmem:[%s1770 + $0x58] sm:$0xff]
    %v1783 = vrot.slane %v1580, 1
    %v1796 = vunpack.c.l.b16 %v1771
    %v1797 = vunpack.c.h.b16 %v1771
    %v1798 = vunpack.c.l.b16 %v1772
    %v1799 = vunpack.c.h.b16 %v1772
    %v1800 = vunpack.c.l.b16 %v1773
    %v1801 = vunpack.c.h.b16 %v1773
    %v1802 = vunpack.c.l.b16 %v1774
    %v1803 = vunpack.c.h.b16 %v1774
    %v1804 = vunpack.c.l.b16 %v1775
    %v1805 = vunpack.c.h.b16 %v1775
    %v1806 = vunpack.c.l.b16 %v1776
    %v1807 = vunpack.c.h.b16 %v1776
    %v1808 = vunpack.c.l.b16 %v1777
    %v1809 = vunpack.c.h.b16 %v1777
    %v1810 = vunpack.c.l.b16 %v1778
    %v1811 = vunpack.c.h.b16 %v1778
    %v1812 = vunpack.c.l.b16 %v1779
    %v1813 = vunpack.c.h.b16 %v1779
    %v1814 = vunpack.c.l.b16 %v1780
    %v1815 = vunpack.c.h.b16 %v1780
    %v1816 = vunpack.c.l.b16 %v1781
    %v1817 = vunpack.c.h.b16 %v1781
    %v1818 = vunpack.c.l.b16 %v1782
    %v1819 = vunpack.c.h.b16 %v1782
    %v1820 = vpack.c.b16 %v1798, %v1796
    %v1821 = vpack.c.b16 %v1799, %v1797
    %v1822 = vpack.c.b16 %v1802, %v1800
    %v1823 = vpack.c.b16 %v1803, %v1801
    %v1824 = vpack.c.b16 %v1806, %v1804
    %v1825 = vpack.c.b16 %v1807, %v1805
    %v1826 = vpack.c.b16 %v1810, %v1808
    %v1827 = vpack.c.b16 %v1811, %v1809
    %v1828 = vpack.c.b16 %v1814, %v1812
    %v1829 = vpack.c.b16 %v1815, %v1813
    %v1830 = vpack.c.b16 %v1818, %v1816
    %v1831 = vpack.c.b16 %v1819, %v1817
    %v1845 = vsel %vm1648, %v1783, 0
    %1847 = vmatpush.bf16.msra.mxu0 0
    %1848 = vmatpush.bf16.msra.mxu0 0
    %1849 = vmatpush.bf16.msra.mxu0 %v1830
    %1850 = vmatpush.bf16.msra.mxu0 %v1828
    %1851 = vmatpush.bf16.msra.mxu0 %v1826
    %1852 = vmatpush.bf16.msra.mxu0 %v1824
    %1853 = vmatpush.bf16.msra.mxu0 %v1822
    %1854 = vmatpush.bf16.msra.mxu0 %v1820
    %1855 = vmatmul.bf16.gmra.mxu0 %v1845
    %v1856 = vpop.f32.mrf.mxu0
    %v1857 = vadd.f32 0.0, %v1856
    %v1858 = vpop.f32.mrf.mxu0
    %v1859 = vadd.f32 0.0, %v1858
    %1860 = vdwg.mxu0
    %1861 = vmatpush.bf16.msra.mxu0 0
    %1862 = vmatpush.bf16.msra.mxu0 0
    %1863 = vmatpush.bf16.msra.mxu0 %v1831
    %1864 = vmatpush.bf16.msra.mxu0 %v1829
    %1865 = vmatpush.bf16.msra.mxu0 %v1827
    %1866 = vmatpush.bf16.msra.mxu0 %v1825
    %1867 = vmatpush.bf16.msra.mxu0 %v1823
    %1868 = vmatpush.bf16.msra.mxu0 %v1821
    %1869 = vmatmul.bf16.gmra.mxu0 %v1845
    %v1870 = vpop.f32.mrf.mxu0
    %v1871 = vadd.f32 0.0, %v1870
    %v1872 = vpop.f32.mrf.mxu0
    %v1873 = vadd.f32 0.0, %v1872
    %1874 = vdwg.mxu0
    %v1875 = vadd.f32 %v1752, %v1857
    %v1876 = vadd.f32 %v1766, %v1871
    %v1877 = vadd.f32 %v1754, %v1859
    %v1878 = vadd.f32 %v1768, %v1873
    %s1879 = scalar_lea.vmem %s7, 288
    %v1880 = vld [vmem:[%s1879] sm:$0xff]
    %v1881 = vld [vmem:[%s1879 + $0x8] sm:$0xff]
    %v1882 = vld [vmem:[%s1879 + $0x10] sm:$0xff]
    %v1883 = vld [vmem:[%s1879 + $0x18] sm:$0xff]
    %v1884 = vld [vmem:[%s1879 + $0x20] sm:$0xff]
    %v1885 = vld [vmem:[%s1879 + $0x28] sm:$0xff]
    %v1886 = vld [vmem:[%s1879 + $0x30] sm:$0xff]
    %v1887 = vld [vmem:[%s1879 + $0x38] sm:$0xff]
    %v1888 = vld [vmem:[%s1879 + $0x40] sm:$0xff]
    %v1889 = vld [vmem:[%s1879 + $0x48] sm:$0xff]
    %v1890 = vld [vmem:[%s1879 + $0x50] sm:$0xff]
    %v1891 = vld [vmem:[%s1879 + $0x58] sm:$0xff]
    %v1892 = vrot.slane %v1582, 1
    %v1893 = vrot.slane %v1584, 2
    %v1894 = vor.u32 %v1892, %v1893
    %v1907 = vunpack.c.l.b16 %v1880
    %v1908 = vunpack.c.h.b16 %v1880
    %v1909 = vunpack.c.l.b16 %v1881
    %v1910 = vunpack.c.h.b16 %v1881
    %v1911 = vunpack.c.l.b16 %v1882
    %v1912 = vunpack.c.h.b16 %v1882
    %v1913 = vunpack.c.l.b16 %v1883
    %v1914 = vunpack.c.h.b16 %v1883
    %v1915 = vunpack.c.l.b16 %v1884
    %v1916 = vunpack.c.h.b16 %v1884
    %v1917 = vunpack.c.l.b16 %v1885
    %v1918 = vunpack.c.h.b16 %v1885
    %v1919 = vunpack.c.l.b16 %v1886
    %v1920 = vunpack.c.h.b16 %v1886
    %v1921 = vunpack.c.l.b16 %v1887
    %v1922 = vunpack.c.h.b16 %v1887
    %v1923 = vunpack.c.l.b16 %v1888
    %v1924 = vunpack.c.h.b16 %v1888
    %v1925 = vunpack.c.l.b16 %v1889
    %v1926 = vunpack.c.h.b16 %v1889
    %v1927 = vunpack.c.l.b16 %v1890
    %v1928 = vunpack.c.h.b16 %v1890
    %v1929 = vunpack.c.l.b16 %v1891
    %v1930 = vunpack.c.h.b16 %v1891
    %v1931 = vpack.c.b16 %v1909, %v1907
    %v1932 = vpack.c.b16 %v1910, %v1908
    %v1933 = vpack.c.b16 %v1913, %v1911
    %v1934 = vpack.c.b16 %v1914, %v1912
    %v1935 = vpack.c.b16 %v1917, %v1915
    %v1936 = vpack.c.b16 %v1918, %v1916
    %v1937 = vpack.c.b16 %v1921, %v1919
    %v1938 = vpack.c.b16 %v1922, %v1920
    %v1939 = vpack.c.b16 %v1925, %v1923
    %v1940 = vpack.c.b16 %v1926, %v1924
    %v1941 = vpack.c.b16 %v1929, %v1927
    %v1942 = vpack.c.b16 %v1930, %v1928
    %v1956 = vsel %vm1648, %v1894, 0
    %1958 = vmatpush.bf16.msra.mxu0 0
    %1959 = vmatpush.bf16.msra.mxu0 0
    %1960 = vmatpush.bf16.msra.mxu0 %v1941
    %1961 = vmatpush.bf16.msra.mxu0 %v1939
    %1962 = vmatpush.bf16.msra.mxu0 %v1937
    %1963 = vmatpush.bf16.msra.mxu0 %v1935
    %1964 = vmatpush.bf16.msra.mxu0 %v1933
    %1965 = vmatpush.bf16.msra.mxu0 %v1931
    %1966 = vmatmul.bf16.gmra.mxu0 %v1956
    %v1967 = vpop.f32.mrf.mxu0
    %v1968 = vadd.f32 0.0, %v1967
    %v1969 = vpop.f32.mrf.mxu0
    %v1970 = vadd.f32 0.0, %v1969
    %1971 = vdwg.mxu0
    %1972 = vmatpush.bf16.msra.mxu0 0
    %1973 = vmatpush.bf16.msra.mxu0 0
    %1974 = vmatpush.bf16.msra.mxu0 %v1942
    %1975 = vmatpush.bf16.msra.mxu0 %v1940
    %1976 = vmatpush.bf16.msra.mxu0 %v1938
    %1977 = vmatpush.bf16.msra.mxu0 %v1936
    %1978 = vmatpush.bf16.msra.mxu0 %v1934
    %1979 = vmatpush.bf16.msra.mxu0 %v1932
    %1980 = vmatmul.bf16.gmra.mxu0 %v1956
    %v1981 = vpop.f32.mrf.mxu0
    %v1982 = vadd.f32 0.0, %v1981
    %v1983 = vpop.f32.mrf.mxu0
    %v1984 = vadd.f32 0.0, %v1983
    %1985 = vdwg.mxu0
    %v1986 = vadd.f32 %v1875, %v1968
    %v1987 = vadd.f32 %v1876, %v1982
    %v1988 = vadd.f32 %v1877, %v1970
    %v1989 = vadd.f32 %v1878, %v1984
    %v1990 = vld [vmem:[%s8] sm:$0x3]
    %v1992 = vperm.slane %v1990, 0
    %v1993 = vperm.slane %v1990, 1
    %v1996 = vadd.f32 %v1986, %v1992
    %v1997 = vadd.f32 %v1987, %v1993
    %v1998 = vadd.f32 %v1988, %v1992
    %v1999 = vadd.f32 %v1989, %v1993
    %v2000 = vmax.f32 %v1996, 0.0
    %v2001 = vmax.f32 %v1997, 0.0
    %v2002 = vmax.f32 %v1998, 0.0
    %v2003 = vmax.f32 %v1999, 0.0
    %v2004 = vpack.c.bf16 %v2002, %v2000
    %v2005 = vpack.c.bf16 %v2003, %v2001
    %v2006 = vld [vmem:[%s9] sm:$0xf]
    %vm2007 = vcmask 72704
    %v2009 = vsel %vm2007, %v2006, 0
    %v2012 = vand.u32 %v2004, %v1251
    %v2015 = vand.u32 %v2005, %v1251
    %2017 = vmatpush.bf16.msra.mxu0 0
    %2018 = vmatpush.bf16.msra.mxu0 0
    %2019 = vmatpush.bf16.msra.mxu0 0
    %2020 = vmatpush.bf16.msra.mxu0 0
    %2021 = vmatpush.bf16.msra.mxu0 0
    %2022 = vmatpush.bf16.msra.mxu0 0
    %2023 = vmatpush.bf16.msra.mxu0 0
    %2024 = vmatpush.bf16.msra.mxu0 %v2012
    %2025 = vmatmul.bf16.gmra.mxu0 %v2009
    %v2026 = vpop.f32.mrf.mxu0
    %v2027 = vadd.f32 0.0, %v2026
    %v2028 = vpop.f32.mrf.mxu0
    %2029 = vdwg.mxu0
    %2030 = vmatpush.bf16.msra.mxu0 0
    %2031 = vmatpush.bf16.msra.mxu0 0
    %2032 = vmatpush.bf16.msra.mxu0 0
    %2033 = vmatpush.bf16.msra.mxu0 0
    %2034 = vmatpush.bf16.msra.mxu0 0
    %2035 = vmatpush.bf16.msra.mxu0 0
    %2036 = vmatpush.bf16.msra.mxu0 0
    %2037 = vmatpush.bf16.msra.mxu0 %v2015
    %2038 = vmatmul.bf16.gmra.mxu0 %v2009
    %v2039 = vpop.f32.mrf.mxu0
    %v2040 = vadd.f32 0.0, %v2039
    %v2041 = vpop.f32.mrf.mxu0
    %2042 = vdwg.mxu0
    %v2045 = vrot.slane %v2027, 4
    %v2046 = vrot.slane %v2040, 4
    %v2049 = vmax.f32 %v2027, %v2045
    %v2050 = vmax.f32 %v2040, %v2046
    %v2051 = vpack.c.bf16 %v2049, %v2049
    %v2052 = vpack.c.bf16 %v2050, %v2050
    %v2053 = vld [vmem:[%s10] sm:$0xf]
    %v2054 = vld [vmem:[%s10 + $0x4] sm:$0xf]
    %v2055 = vld [vmem:[%s10 + $0x8] sm:$0xf]
    %v2056 = vld [vmem:[%s10 + $0xc] sm:$0xf]
    %v2057 = vld [vmem:[%s10 + $0x10] sm:$0xf]
    %v2058 = vld [vmem:[%s10 + $0x14] sm:$0xf]
    %v2059 = vld [vmem:[%s10 + $0x18] sm:$0xf]
    %v2060 = vld [vmem:[%s10 + $0x1c] sm:$0xf]
    %v2061 = vld [vmem:[%s10 + $0x20] sm:$0xf]
    %v2062 = vld [vmem:[%s10 + $0x24] sm:$0xf]
    %v2063 = vld [vmem:[%s10 + $0x28] sm:$0xf]
    %v2064 = vld [vmem:[%s10 + $0x2c] sm:$0xf]
    %v2065 = vld [vmem:[%s10 + $0x30] sm:$0xf]
    %v2066 = vld [vmem:[%s10 + $0x34] sm:$0xf]
    %v2067 = vld [vmem:[%s10 + $0x38] sm:$0xf]
    %v2068 = vld [vmem:[%s10 + $0x3c] sm:$0xf]
    %v2069 = vld [vmem:[%s10 + $0x40] sm:$0xf]
    %v2070 = vld [vmem:[%s10 + $0x44] sm:$0xf]
    %v2089 = vunpack.c.l.b16 %v2053
    %v2090 = vunpack.c.l.b16 %v2054
    %v2091 = vunpack.c.l.b16 %v2055
    %v2092 = vunpack.c.l.b16 %v2056
    %v2093 = vunpack.c.l.b16 %v2057
    %v2094 = vunpack.c.l.b16 %v2058
    %v2095 = vunpack.c.l.b16 %v2059
    %v2096 = vunpack.c.l.b16 %v2060
    %v2097 = vunpack.c.l.b16 %v2061
    %v2098 = vunpack.c.l.b16 %v2062
    %v2099 = vunpack.c.l.b16 %v2063
    %v2100 = vunpack.c.l.b16 %v2064
    %v2101 = vunpack.c.l.b16 %v2065
    %v2102 = vunpack.c.l.b16 %v2066
    %v2103 = vunpack.c.l.b16 %v2067
    %v2104 = vunpack.c.l.b16 %v2068
    %v2105 = vunpack.c.l.b16 %v2069
    %v2106 = vunpack.c.l.b16 %v2070
    %v2107 = vpack.c.b16 %v2090, %v2089
    %v2108 = vpack.c.b16 %v2092, %v2091
    %v2109 = vpack.c.b16 %v2094, %v2093
    %v2110 = vpack.c.b16 %v2096, %v2095
    %v2111 = vpack.c.b16 %v2098, %v2097
    %v2112 = vpack.c.b16 %v2100, %v2099
    %v2113 = vpack.c.b16 %v2102, %v2101
    %v2114 = vpack.c.b16 %v2104, %v2103
    %v2115 = vpack.c.b16 %v2106, %v2105
    %vm2125 = vcmask 130048
    %v2127 = vsel %vm2125, %v2052, 0
    %2129 = vmatpush.bf16.msra.mxu0 %v2114
    %2130 = vmatpush.bf16.msra.mxu0 %v2113
    %2131 = vmatpush.bf16.msra.mxu0 %v2112
    %2132 = vmatpush.bf16.msra.mxu0 %v2111
    %2133 = vmatpush.bf16.msra.mxu0 %v2110
    %2134 = vmatpush.bf16.msra.mxu0 %v2109
    %2135 = vmatpush.bf16.msra.mxu0 %v2108
    %2136 = vmatpush.bf16.msra.mxu0 %v2107
    %2137 = vmatmul.bf16.gmra.mxu0 %v2051
    %v2138 = vpop.f32.mrf.mxu0
    %v2139 = vadd.f32 0.0, %v2138
    %v2140 = vpop.f32.mrf.mxu0
    %2141 = vdwg.mxu0
    %2142 = vmatpush.bf16.msra.mxu0 0
    %2143 = vmatpush.bf16.msra.mxu0 0
    %2144 = vmatpush.bf16.msra.mxu0 0
    %2145 = vmatpush.bf16.msra.mxu0 0
    %2146 = vmatpush.bf16.msra.mxu0 0
    %2147 = vmatpush.bf16.msra.mxu0 0
    %2148 = vmatpush.bf16.msra.mxu0 0
    %2149 = vmatpush.bf16.msra.mxu0 %v2115
    %2150 = vmatmul.bf16.gmra.mxu0 %v2127
    %v2151 = vpop.f32.mrf.mxu0
    %v2152 = vadd.f32 %v2139, %v2151
    %v2153 = vpop.f32.mrf.mxu0
    %2154 = vdwg.mxu0
    %2156 = vrot.lane.b32.xlu0 %v2152, 64
    %v2157 = vpop.permute.xlu0 %2156
    %v2159 = vmax.f32 %v2152, %v2157
    %v2160 = vpack.c.bf16 %v2159, %v2159
    %v2161 = vld [vmem:[%s11] sm:$0xf]
    %v2162 = vld [vmem:[%s11 + $0x4] sm:$0xf]
    %v2163 = vld [vmem:[%s11 + $0x8] sm:$0xf]
    %v2164 = vld [vmem:[%s11 + $0xc] sm:$0xf]
    %v2165 = vld [vmem:[%s11 + $0x10] sm:$0xf]
    %v2166 = vld [vmem:[%s11 + $0x14] sm:$0xf]
    %v2167 = vld [vmem:[%s11 + $0x18] sm:$0xf]
    %v2168 = vld [vmem:[%s11 + $0x1c] sm:$0xf]
    %s2169 = scalar_lea.vmem %s11, 32
    %v2170 = vld [vmem:[%s2169] sm:$0xf]
    %v2171 = vld [vmem:[%s2169 + $0x4] sm:$0xf]
    %v2172 = vld [vmem:[%s2169 + $0x8] sm:$0xf]
    %v2173 = vld [vmem:[%s2169 + $0xc] sm:$0xf]
    %v2174 = vld [vmem:[%s2169 + $0x10] sm:$0xf]
    %v2175 = vld [vmem:[%s2169 + $0x14] sm:$0xf]
    %v2176 = vld [vmem:[%s2169 + $0x18] sm:$0xf]
    %v2177 = vld [vmem:[%s2169 + $0x1c] sm:$0xf]
    %v2179 = vunpack.c.l.b16 %v2160
    %v2180 = vpack.c.b16 %v2179, %v2179
    %v2182 = vshrl.u32 %v2180, 16
    %v2192 = vunpack.c.l.b16 %v2170
    %v2193 = vunpack.c.l.b16 %v2171
    %v2194 = vunpack.c.l.b16 %v2172
    %v2195 = vunpack.c.l.b16 %v2173
    %v2196 = vunpack.c.l.b16 %v2174
    %v2197 = vunpack.c.l.b16 %v2175
    %v2198 = vunpack.c.l.b16 %v2176
    %v2199 = vunpack.c.l.b16 %v2177
    %v2200 = vpack.c.b16 %v2193, %v2192
    %v2201 = vpack.c.b16 %v2195, %v2194
    %v2202 = vpack.c.b16 %v2197, %v2196
    %v2203 = vpack.c.b16 %v2199, %v2198
    %vm2208 = vcmask 523264
    %v2210 = vsel %vm2208, %v2182, 0
    %2212 = vmatpush.bf16.msra.mxu0 0
    %2213 = vmatpush.bf16.msra.mxu0 0
    %2214 = vmatpush.bf16.msra.mxu0 0
    %2215 = vmatpush.bf16.msra.mxu0 0
    %2216 = vmatpush.bf16.msra.mxu0 %v2203
    %2217 = vmatpush.bf16.msra.mxu0 %v2202
    %2218 = vmatpush.bf16.msra.mxu0 %v2201
    %2219 = vmatpush.bf16.msra.mxu0 %v2200
    %2220 = vmatmul.bf16.gmra.mxu0 %v2210
    %v2221 = vpop.f32.mrf.mxu0
    %v2222 = vadd.f32 0.0, %v2221
    %v2223 = vpop.f32.mrf.mxu0
    %2224 = vdwg.mxu0
    %v2233 = vunpack.c.l.b16 %v2161
    %v2234 = vunpack.c.l.b16 %v2162
    %v2235 = vunpack.c.l.b16 %v2163
    %v2236 = vunpack.c.l.b16 %v2164
    %v2237 = vunpack.c.l.b16 %v2165
    %v2238 = vunpack.c.l.b16 %v2166
    %v2239 = vunpack.c.l.b16 %v2167
    %v2240 = vunpack.c.l.b16 %v2168
    %v2241 = vpack.c.b16 %v2234, %v2233
    %v2242 = vpack.c.b16 %v2236, %v2235
    %v2243 = vpack.c.b16 %v2238, %v2237
    %v2244 = vpack.c.b16 %v2240, %v2239
    %v2250 = vsel %vm2208, %v2160, 0
    %2252 = vmatpush.bf16.msra.mxu0 0
    %2253 = vmatpush.bf16.msra.mxu0 0
    %2254 = vmatpush.bf16.msra.mxu0 0
    %2255 = vmatpush.bf16.msra.mxu0 0
    %2256 = vmatpush.bf16.msra.mxu0 %v2244
    %2257 = vmatpush.bf16.msra.mxu0 %v2243
    %2258 = vmatpush.bf16.msra.mxu0 %v2242
    %2259 = vmatpush.bf16.msra.mxu0 %v2241
    %2260 = vmatmul.bf16.gmra.mxu0 %v2250
    %v2261 = vpop.f32.mrf.mxu0
    %v2262 = vadd.f32 %v2222, %v2261
    %v2263 = vpop.f32.mrf.mxu0
    %2264 = vdwg.mxu0
    %s2265 = scalar_lea.vmem %s11, 64
    %v2266 = vld [vmem:[%s2265] sm:$0xf]
    %v2267 = vld [vmem:[%s2265 + $0x4] sm:$0xf]
    %v2268 = vld [vmem:[%s2265 + $0x8] sm:$0xf]
    %v2269 = vld [vmem:[%s2265 + $0xc] sm:$0xf]
    %v2270 = vld [vmem:[%s2265 + $0x10] sm:$0xf]
    %v2271 = vld [vmem:[%s2265 + $0x14] sm:$0xf]
    %v2272 = vld [vmem:[%s2265 + $0x18] sm:$0xf]
    %v2273 = vld [vmem:[%s2265 + $0x1c] sm:$0xf]
    %v2274 = vrot.slane %v2180, 1
    %v2283 = vunpack.c.l.b16 %v2266
    %v2284 = vunpack.c.l.b16 %v2267
    %v2285 = vunpack.c.l.b16 %v2268
    %v2286 = vunpack.c.l.b16 %v2269
    %v2287 = vunpack.c.l.b16 %v2270
    %v2288 = vunpack.c.l.b16 %v2271
    %v2289 = vunpack.c.l.b16 %v2272
    %v2290 = vunpack.c.l.b16 %v2273
    %v2291 = vpack.c.b16 %v2284, %v2283
    %v2292 = vpack.c.b16 %v2286, %v2285
    %v2293 = vpack.c.b16 %v2288, %v2287
    %v2294 = vpack.c.b16 %v2290, %v2289
    %v2300 = vsel %vm2208, %v2274, 0
    %2302 = vmatpush.bf16.msra.mxu0 0
    %2303 = vmatpush.bf16.msra.mxu0 0
    %2304 = vmatpush.bf16.msra.mxu0 0
    %2305 = vmatpush.bf16.msra.mxu0 0
    %2306 = vmatpush.bf16.msra.mxu0 %v2294
    %2307 = vmatpush.bf16.msra.mxu0 %v2293
    %2308 = vmatpush.bf16.msra.mxu0 %v2292
    %2309 = vmatpush.bf16.msra.mxu0 %v2291
    %2310 = vmatmul.bf16.gmra.mxu0 %v2300
    %v2311 = vpop.f32.mrf.mxu0
    %v2312 = vadd.f32 0.0, %v2311
    %v2313 = vpop.f32.mrf.mxu0
    %2314 = vdwg.mxu0
    %v2315 = vadd.f32 %v2262, %v2312
    %s2316 = scalar_lea.vmem %s11, 96
    %v2317 = vld [vmem:[%s2316] sm:$0xf]
    %v2318 = vld [vmem:[%s2316 + $0x4] sm:$0xf]
    %v2319 = vld [vmem:[%s2316 + $0x8] sm:$0xf]
    %v2320 = vld [vmem:[%s2316 + $0xc] sm:$0xf]
    %v2321 = vld [vmem:[%s2316 + $0x10] sm:$0xf]
    %v2322 = vld [vmem:[%s2316 + $0x14] sm:$0xf]
    %v2323 = vld [vmem:[%s2316 + $0x18] sm:$0xf]
    %v2324 = vld [vmem:[%s2316 + $0x1c] sm:$0xf]
    %v2325 = vrot.slane %v2182, 1
    %v2334 = vunpack.c.l.b16 %v2317
    %v2335 = vunpack.c.l.b16 %v2318
    %v2336 = vunpack.c.l.b16 %v2319
    %v2337 = vunpack.c.l.b16 %v2320
    %v2338 = vunpack.c.l.b16 %v2321
    %v2339 = vunpack.c.l.b16 %v2322
    %v2340 = vunpack.c.l.b16 %v2323
    %v2341 = vunpack.c.l.b16 %v2324
    %v2342 = vpack.c.b16 %v2335, %v2334
    %v2343 = vpack.c.b16 %v2337, %v2336
    %v2344 = vpack.c.b16 %v2339, %v2338
    %v2345 = vpack.c.b16 %v2341, %v2340
    %v2351 = vsel %vm2208, %v2325, 0
    %2353 = vmatpush.bf16.msra.mxu0 0
    %2354 = vmatpush.bf16.msra.mxu0 0
    %2355 = vmatpush.bf16.msra.mxu0 0
    %2356 = vmatpush.bf16.msra.mxu0 0
    %2357 = vmatpush.bf16.msra.mxu0 %v2345
    %2358 = vmatpush.bf16.msra.mxu0 %v2344
    %2359 = vmatpush.bf16.msra.mxu0 %v2343
    %2360 = vmatpush.bf16.msra.mxu0 %v2342
    %2361 = vmatmul.bf16.gmra.mxu0 %v2351
    %v2362 = vpop.f32.mrf.mxu0
    %v2363 = vadd.f32 0.0, %v2362
    %v2364 = vpop.f32.mrf.mxu0
    %2365 = vdwg.mxu0
    %v2366 = vadd.f32 %v2315, %v2363
    %v2367 = vld [vmem:[%s12] sm:$0x1]
    %v2368 = vadd.f32 %v2366, %v2367
    %v2369 = vmax.f32 %v2368, 0.0
    %v2370 = vpack.c.bf16 %v2369, %v2369
    %v2371 = vld [vmem:[%s13] sm:$0xff]
    %v2372 = vld [vmem:[%s13 + $0x8] sm:$0xf]
    %v2373 = vld [vmem:[%s13 + $0xc] sm:$0xff]
    %v2374 = vld [vmem:[%s13 + $0x14] sm:$0xf]
    %v2375 = vld [vmem:[%s13 + $0x18] sm:$0xff]
    %v2376 = vld [vmem:[%s13 + $0x20] sm:$0xf]
    %v2377 = vld [vmem:[%s13 + $0x24] sm:$0xff]
    %v2378 = vld [vmem:[%s13 + $0x2c] sm:$0xf]
    %v2379 = vld [vmem:[%s14] sm:$0x7]
    %v2388 = vunpack.c.l.b16 %v2371
    %v2389 = vunpack.c.h.b16 %v2371
    %v2390 = vunpack.c.l.b16 %v2372
    %v2391 = vunpack.c.l.b16 %v2373
    %v2392 = vunpack.c.h.b16 %v2373
    %v2393 = vunpack.c.l.b16 %v2374
    %v2394 = vunpack.c.l.b16 %v2375
    %v2395 = vunpack.c.h.b16 %v2375
    %v2396 = vunpack.c.l.b16 %v2376
    %v2397 = vunpack.c.l.b16 %v2377
    %v2398 = vunpack.c.h.b16 %v2377
    %v2399 = vunpack.c.l.b16 %v2378
    %v2400 = vpack.c.b16 %v2391, %v2388
    %v2401 = vpack.c.b16 %v2392, %v2389
    %v2402 = vpack.c.b16 %v2393, %v2390
    %v2403 = vpack.c.b16 %v2397, %v2394
    %v2404 = vpack.c.b16 %v2398, %v2395
    %v2405 = vpack.c.b16 %v2399, %v2396
    %v2413 = vperm.slane %v2379, 0
    %v2414 = vperm.slane %v2379, 1
    %v2415 = vperm.slane %v2379, 2
    %v2420 = vsel %vm1542, %v2370, 0
    %2422 = vmatpush.bf16.msra.mxu0 0
    %2423 = vmatpush.bf16.msra.mxu0 0
    %2424 = vmatpush.bf16.msra.mxu0 0
    %2425 = vmatpush.bf16.msra.mxu0 0
    %2426 = vmatpush.bf16.msra.mxu0 0
    %2427 = vmatpush.bf16.msra.mxu0 0
    %2428 = vmatpush.bf16.msra.mxu0 %v2403
    %2429 = vmatpush.bf16.msra.mxu0 %v2400
    %2430 = vmatmul.bf16.gmra.mxu0 %v2420
    %v2431 = vpop.f32.mrf.mxu0
    %v2432 = vadd.f32 %v2413, %v2431
    %v2433 = vpop.f32.mrf.mxu0
    %2434 = vdwg.mxu0
    %2435 = vmatpush.bf16.msra.mxu0 0
    %2436 = vmatpush.bf16.msra.mxu0 0
    %2437 = vmatpush.bf16.msra.mxu0 0
    %2438 = vmatpush.bf16.msra.mxu0 0
    %2439 = vmatpush.bf16.msra.mxu0 0
    %2440 = vmatpush.bf16.msra.mxu0 0
    %2441 = vmatpush.bf16.msra.mxu0 %v2404
    %2442 = vmatpush.bf16.msra.mxu0 %v2401
    %2443 = vmatmul.bf16.gmra.mxu0 %v2420
    %v2444 = vpop.f32.mrf.mxu0
    %v2445 = vadd.f32 %v2414, %v2444
    %v2446 = vpop.f32.mrf.mxu0
    %2447 = vdwg.mxu0
    %2448 = vmatpush.bf16.msra.mxu0 0
    %2449 = vmatpush.bf16.msra.mxu0 0
    %2450 = vmatpush.bf16.msra.mxu0 0
    %2451 = vmatpush.bf16.msra.mxu0 0
    %2452 = vmatpush.bf16.msra.mxu0 0
    %2453 = vmatpush.bf16.msra.mxu0 0
    %2454 = vmatpush.bf16.msra.mxu0 %v2405
    %2455 = vmatpush.bf16.msra.mxu0 %v2402
    %2456 = vmatmul.bf16.gmra.mxu0 %v2420
    %v2457 = vpop.f32.mrf.mxu0
    %v2458 = vadd.f32 %v2415, %v2457
    %v2459 = vpop.f32.mrf.mxu0
    %2460 = vdwg.mxu0
    %v2461 = vmax.f32 %v2432, 0.0
    %v2462 = vmax.f32 %v2445, 0.0
    %v2463 = vmax.f32 %v2458, 0.0
    %v2464 = vpack.c.bf16 %v2461, %v2461
    %v2465 = vpack.c.bf16 %v2462, %v2462
    %v2466 = vpack.c.bf16 %v2463, %v2463
    %v2467 = vld [vmem:[%s15] sm:$0xff]
    %v2468 = vld [vmem:[%s15 + $0x8] sm:$0xff]
    %v2469 = vld [vmem:[%s15 + $0x10] sm:$0xf]
    %v2470 = vld [vmem:[%s15 + $0x14] sm:$0xff]
    %v2471 = vld [vmem:[%s15 + $0x1c] sm:$0xff]
    %v2472 = vld [vmem:[%s15 + $0x24] sm:$0xf]
    %v2473 = vld [vmem:[%s15 + $0x28] sm:$0xff]
    %v2474 = vld [vmem:[%s15 + $0x30] sm:$0xff]
    %v2475 = vld [vmem:[%s15 + $0x38] sm:$0xf]
    %v2476 = vld [vmem:[%s15 + $0x3c] sm:$0xff]
    %v2477 = vld [vmem:[%s15 + $0x44] sm:$0xff]
    %v2478 = vld [vmem:[%s15 + $0x4c] sm:$0xf]
    %v2479 = vld [vmem:[%s15 + $0x50] sm:$0xff]
    %v2480 = vld [vmem:[%s15 + $0x58] sm:$0xff]
    %v2481 = vld [vmem:[%s15 + $0x60] sm:$0xf]
    %v2482 = vld [vmem:[%s15 + $0x64] sm:$0xff]
    %v2483 = vld [vmem:[%s15 + $0x6c] sm:$0xff]
    %v2484 = vld [vmem:[%s15 + $0x74] sm:$0xf]
    %v2485 = vld [vmem:[%s15 + $0x78] sm:$0xff]
    %v2486 = vld [vmem:[%s15 + $0x80] sm:$0xff]
    %v2487 = vld [vmem:[%s15 + $0x88] sm:$0xf]
    %v2488 = vld [vmem:[%s15 + $0x8c] sm:$0xff]
    %v2489 = vld [vmem:[%s15 + $0x94] sm:$0xff]
    %v2490 = vld [vmem:[%s15 + $0x9c] sm:$0xf]
    %v2491 = vld [vmem:[%s15 + $0xa0] sm:$0xff]
    %v2492 = vld [vmem:[%s15 + $0xa8] sm:$0xff]
    %v2493 = vld [vmem:[%s15 + $0xb0] sm:$0xf]
    %v2494 = vld [vmem:[%s15 + $0xb4] sm:$0xff]
    %v2495 = vld [vmem:[%s15 + $0xbc] sm:$0xff]
    %v2496 = vld [vmem:[%s15 + $0xc4] sm:$0xf]
    %v2497 = vld [vmem:[%s15 + $0xc8] sm:$0xff]
    %v2498 = vld [vmem:[%s15 + $0xd0] sm:$0xff]
    %v2499 = vld [vmem:[%s15 + $0xd8] sm:$0xf]
    %v2500 = vld [vmem:[%s15 + $0xdc] sm:$0xff]
    %v2501 = vld [vmem:[%s15 + $0xe4] sm:$0xff]
    %v2502 = vld [vmem:[%s15 + $0xec] sm:$0xf]
    %v2503 = vld [vmem:[%s15 + $0xf0] sm:$0xff]
    %v2504 = vld [vmem:[%s15 + $0xf8] sm:$0xff]
    %v2505 = vld [vmem:[%s15 + $0x100] sm:$0xf]
    %v2506 = vld [vmem:[%s15 + $0x104] sm:$0xff]
    %v2507 = vld [vmem:[%s15 + $0x10c] sm:$0xff]
    %v2508 = vld [vmem:[%s15 + $0x114] sm:$0xf]
    %v2509 = vld [vmem:[%s15 + $0x118] sm:$0xff]
    %v2510 = vld [vmem:[%s15 + $0x120] sm:$0xff]
    %v2511 = vld [vmem:[%s15 + $0x128] sm:$0xf]
    %v2512 = vld [vmem:[%s15 + $0x12c] sm:$0xff]
    %v2513 = vld [vmem:[%s15 + $0x134] sm:$0xff]
    %v2514 = vld [vmem:[%s15 + $0x13c] sm:$0xf]
    %v2515 = vld [vmem:[%s15 + $0x140] sm:$0xff]
    %v2516 = vld [vmem:[%s15 + $0x148] sm:$0xff]
    %v2517 = vld [vmem:[%s15 + $0x150] sm:$0xf]
    %v2518 = vld [vmem:[%s15 + $0x154] sm:$0xff]
    %v2519 = vld [vmem:[%s15 + $0x15c] sm:$0xff]
    %v2520 = vld [vmem:[%s15 + $0x164] sm:$0xf]
    %v2521 = vld [vmem:[%s15 + $0x168] sm:$0xff]
    %v2522 = vld [vmem:[%s15 + $0x170] sm:$0xff]
    %v2523 = vld [vmem:[%s15 + $0x178] sm:$0xf]
    %v2524 = vld [vmem:[%s15 + $0x17c] sm:$0xff]
    %v2525 = vld [vmem:[%s15 + $0x184] sm:$0xff]
    %v2526 = vld [vmem:[%s15 + $0x18c] sm:$0xf]
    %v2527 = vld [vmem:[%s15 + $0x190] sm:$0xff]
    %v2528 = vld [vmem:[%s15 + $0x198] sm:$0xff]
    %v2529 = vld [vmem:[%s15 + $0x1a0] sm:$0xf]
    %v2530 = vld [vmem:[%s15 + $0x1a4] sm:$0xff]
    %v2531 = vld [vmem:[%s15 + $0x1ac] sm:$0xff]
    %v2532 = vld [vmem:[%s15 + $0x1b4] sm:$0xf]
    %v2533 = vld [vmem:[%s15 + $0x1b8] sm:$0xff]
    %v2534 = vld [vmem:[%s15 + $0x1c0] sm:$0xff]
    %v2535 = vld [vmem:[%s15 + $0x1c8] sm:$0xf]
    %v2536 = vld [vmem:[%s15 + $0x1cc] sm:$0xff]
    %v2537 = vld [vmem:[%s15 + $0x1d4] sm:$0xff]
    %v2538 = vld [vmem:[%s15 + $0x1dc] sm:$0xf]
    %v2539 = vld [vmem:[%s15 + $0x1e0] sm:$0xff]
    %v2540 = vld [vmem:[%s15 + $0x1e8] sm:$0xff]
    %v2541 = vld [vmem:[%s15 + $0x1f0] sm:$0xf]
    %v2542 = vld [vmem:[%s15 + $0x1f4] sm:$0xff]
    %v2543 = vld [vmem:[%s15 + $0x1fc] sm:$0xff]
    %v2544 = vld [vmem:[%s15 + $0x204] sm:$0xf]
    %v2545 = vld [vmem:[%s15 + $0x208] sm:$0xff]
    %v2546 = vld [vmem:[%s15 + $0x210] sm:$0xff]
    %v2547 = vld [vmem:[%s15 + $0x218] sm:$0xf]
    %v2548 = vld [vmem:[%s15 + $0x21c] sm:$0xff]
    %v2549 = vld [vmem:[%s15 + $0x224] sm:$0xff]
    %v2550 = vld [vmem:[%s15 + $0x22c] sm:$0xf]
    %v2551 = vld [vmem:[%s15 + $0x230] sm:$0xff]
    %v2552 = vld [vmem:[%s15 + $0x238] sm:$0xff]
    %v2553 = vld [vmem:[%s15 + $0x240] sm:$0xf]
    %v2554 = vld [vmem:[%s15 + $0x244] sm:$0xff]
    %v2555 = vld [vmem:[%s15 + $0x24c] sm:$0xff]
    %v2556 = vld [vmem:[%s15 + $0x254] sm:$0xf]
    %v2557 = vld [vmem:[%s15 + $0x258] sm:$0xff]
    %v2558 = vld [vmem:[%s15 + $0x260] sm:$0xff]
    %v2559 = vld [vmem:[%s15 + $0x268] sm:$0xf]
    %v2560 = vld [vmem:[%s15 + $0x26c] sm:$0xff]
    %v2561 = vld [vmem:[%s15 + $0x274] sm:$0xff]
    %v2562 = vld [vmem:[%s15 + $0x27c] sm:$0xf]
    %v2563 = vld [vmem:[%s15 + $0x280] sm:$0xff]
    %v2564 = vld [vmem:[%s15 + $0x288] sm:$0xff]
    %v2565 = vld [vmem:[%s15 + $0x290] sm:$0xf]
    %v2566 = vld [vmem:[%s15 + $0x294] sm:$0xff]
    %v2567 = vld [vmem:[%s15 + $0x29c] sm:$0xff]
    %v2568 = vld [vmem:[%s15 + $0x2a4] sm:$0xf]
    %v2569 = vld [vmem:[%s15 + $0x2a8] sm:$0xff]
    %v2570 = vld [vmem:[%s15 + $0x2b0] sm:$0xff]
    %v2571 = vld [vmem:[%s15 + $0x2b8] sm:$0xf]
    %v2572 = vld [vmem:[%s15 + $0x2bc] sm:$0xff]
    %v2573 = vld [vmem:[%s15 + $0x2c4] sm:$0xff]
    %v2574 = vld [vmem:[%s15 + $0x2cc] sm:$0xf]
    %v2575 = vld [vmem:[%s15 + $0x2d0] sm:$0xff]
    %v2576 = vld [vmem:[%s15 + $0x2d8] sm:$0xff]
    %v2577 = vld [vmem:[%s15 + $0x2e0] sm:$0xf]
    %v2578 = vld [vmem:[%s15 + $0x2e4] sm:$0xff]
    %v2579 = vld [vmem:[%s15 + $0x2ec] sm:$0xff]
    %v2580 = vld [vmem:[%s15 + $0x2f4] sm:$0xf]
    %v2581 = vld [vmem:[%s15 + $0x2f8] sm:$0xff]
    %v2582 = vld [vmem:[%s15 + $0x300] sm:$0xff]
    %v2583 = vld [vmem:[%s15 + $0x308] sm:$0xf]
    %v2584 = vld [vmem:[%s15 + $0x30c] sm:$0xff]
    %v2585 = vld [vmem:[%s15 + $0x314] sm:$0xff]
    %v2586 = vld [vmem:[%s15 + $0x31c] sm:$0xf]
    %v2587 = vld [vmem:[%s16] sm:$0x1f]
    %v2708 = vunpack.c.l.b16 %v2467
    %v2709 = vunpack.c.h.b16 %v2467
    %v2710 = vunpack.c.l.b16 %v2468
    %v2711 = vunpack.c.h.b16 %v2468
    %v2712 = vunpack.c.l.b16 %v2469
    %v2713 = vunpack.c.l.b16 %v2470
    %v2714 = vunpack.c.h.b16 %v2470
    %v2715 = vunpack.c.l.b16 %v2471
    %v2716 = vunpack.c.h.b16 %v2471
    %v2717 = vunpack.c.l.b16 %v2472
    %v2718 = vunpack.c.l.b16 %v2473
    %v2719 = vunpack.c.h.b16 %v2473
    %v2720 = vunpack.c.l.b16 %v2474
    %v2721 = vunpack.c.h.b16 %v2474
    %v2722 = vunpack.c.l.b16 %v2475
    %v2723 = vunpack.c.l.b16 %v2476
    %v2724 = vunpack.c.h.b16 %v2476
    %v2725 = vunpack.c.l.b16 %v2477
    %v2726 = vunpack.c.h.b16 %v2477
    %v2727 = vunpack.c.l.b16 %v2478
    %v2728 = vunpack.c.l.b16 %v2479
    %v2729 = vunpack.c.h.b16 %v2479
    %v2730 = vunpack.c.l.b16 %v2480
    %v2731 = vunpack.c.h.b16 %v2480
    %v2732 = vunpack.c.l.b16 %v2481
    %v2733 = vunpack.c.l.b16 %v2482
    %v2734 = vunpack.c.h.b16 %v2482
    %v2735 = vunpack.c.l.b16 %v2483
    %v2736 = vunpack.c.h.b16 %v2483
    %v2737 = vunpack.c.l.b16 %v2484
    %v2738 = vunpack.c.l.b16 %v2485
    %v2739 = vunpack.c.h.b16 %v2485
    %v2740 = vunpack.c.l.b16 %v2486
    %v2741 = vunpack.c.h.b16 %v2486
    %v2742 = vunpack.c.l.b16 %v2487
    %v2743 = vunpack.c.l.b16 %v2488
    %v2744 = vunpack.c.h.b16 %v2488
    %v2745 = vunpack.c.l.b16 %v2489
    %v2746 = vunpack.c.h.b16 %v2489
    %v2747 = vunpack.c.l.b16 %v2490
    %v2748 = vunpack.c.l.b16 %v2491
    %v2749 = vunpack.c.h.b16 %v2491
    %v2750 = vunpack.c.l.b16 %v2492
    %v2751 = vunpack.c.h.b16 %v2492
    %v2752 = vunpack.c.l.b16 %v2493
    %v2753 = vunpack.c.l.b16 %v2494
    %v2754 = vunpack.c.h.b16 %v2494
    %v2755 = vunpack.c.l.b16 %v2495
    %v2756 = vunpack.c.h.b16 %v2495
    %v2757 = vunpack.c.l.b16 %v2496
    %v2758 = vunpack.c.l.b16 %v2497
    %v2759 = vunpack.c.h.b16 %v2497
    %v2760 = vunpack.c.l.b16 %v2498
    %v2761 = vunpack.c.h.b16 %v2498
    %v2762 = vunpack.c.l.b16 %v2499
    %v2763 = vunpack.c.l.b16 %v2500
    %v2764 = vunpack.c.h.b16 %v2500
    %v2765 = vunpack.c.l.b16 %v2501
    %v2766 = vunpack.c.h.b16 %v2501
    %v2767 = vunpack.c.l.b16 %v2502
    %v2768 = vunpack.c.l.b16 %v2503
    %v2769 = vunpack.c.h.b16 %v2503
    %v2770 = vunpack.c.l.b16 %v2504
    %v2771 = vunpack.c.h.b16 %v2504
    %v2772 = vunpack.c.l.b16 %v2505
    %v2773 = vunpack.c.l.b16 %v2506
    %v2774 = vunpack.c.h.b16 %v2506
    %v2775 = vunpack.c.l.b16 %v2507
    %v2776 = vunpack.c.h.b16 %v2507
    %v2777 = vunpack.c.l.b16 %v2508
    %v2778 = vunpack.c.l.b16 %v2509
    %v2779 = vunpack.c.h.b16 %v2509
    %v2780 = vunpack.c.l.b16 %v2510
    %v2781 = vunpack.c.h.b16 %v2510
    %v2782 = vunpack.c.l.b16 %v2511
    %v2783 = vunpack.c.l.b16 %v2512
    %v2784 = vunpack.c.h.b16 %v2512
    %v2785 = vunpack.c.l.b16 %v2513
    %v2786 = vunpack.c.h.b16 %v2513
    %v2787 = vunpack.c.l.b16 %v2514
    %v2788 = vunpack.c.l.b16 %v2515
    %v2789 = vunpack.c.h.b16 %v2515
    %v2790 = vunpack.c.l.b16 %v2516
    %v2791 = vunpack.c.h.b16 %v2516
    %v2792 = vunpack.c.l.b16 %v2517
    %v2793 = vunpack.c.l.b16 %v2518
    %v2794 = vunpack.c.h.b16 %v2518
    %v2795 = vunpack.c.l.b16 %v2519
    %v2796 = vunpack.c.h.b16 %v2519
    %v2797 = vunpack.c.l.b16 %v2520
    %v2798 = vunpack.c.l.b16 %v2521
    %v2799 = vunpack.c.h.b16 %v2521
    %v2800 = vunpack.c.l.b16 %v2522
    %v2801 = vunpack.c.h.b16 %v2522
    %v2802 = vunpack.c.l.b16 %v2523
    %v2803 = vunpack.c.l.b16 %v2524
    %v2804 = vunpack.c.h.b16 %v2524
    %v2805 = vunpack.c.l.b16 %v2525
    %v2806 = vunpack.c.h.b16 %v2525
    %v2807 = vunpack.c.l.b16 %v2526
    %v2808 = vunpack.c.l.b16 %v2527
    %v2809 = vunpack.c.h.b16 %v2527
    %v2810 = vunpack.c.l.b16 %v2528
    %v2811 = vunpack.c.h.b16 %v2528
    %v2812 = vunpack.c.l.b16 %v2529
    %v2813 = vunpack.c.l.b16 %v2530
    %v2814 = vunpack.c.h.b16 %v2530
    %v2815 = vunpack.c.l.b16 %v2531
    %v2816 = vunpack.c.h.b16 %v2531
    %v2817 = vunpack.c.l.b16 %v2532
    %v2818 = vunpack.c.l.b16 %v2533
    %v2819 = vunpack.c.h.b16 %v2533
    %v2820 = vunpack.c.l.b16 %v2534
    %v2821 = vunpack.c.h.b16 %v2534
    %v2822 = vunpack.c.l.b16 %v2535
    %v2823 = vunpack.c.l.b16 %v2536
    %v2824 = vunpack.c.h.b16 %v2536
    %v2825 = vunpack.c.l.b16 %v2537
    %v2826 = vunpack.c.h.b16 %v2537
    %v2827 = vunpack.c.l.b16 %v2538
    %v2828 = vunpack.c.l.b16 %v2539
    %v2829 = vunpack.c.h.b16 %v2539
    %v2830 = vunpack.c.l.b16 %v2540
    %v2831 = vunpack.c.h.b16 %v2540
    %v2832 = vunpack.c.l.b16 %v2541
    %v2833 = vunpack.c.l.b16 %v2542
    %v2834 = vunpack.c.h.b16 %v2542
    %v2835 = vunpack.c.l.b16 %v2543
    %v2836 = vunpack.c.h.b16 %v2543
    %v2837 = vunpack.c.l.b16 %v2544
    %v2838 = vunpack.c.l.b16 %v2545
    %v2839 = vunpack.c.h.b16 %v2545
    %v2840 = vunpack.c.l.b16 %v2546
    %v2841 = vunpack.c.h.b16 %v2546
    %v2842 = vunpack.c.l.b16 %v2547
    %v2843 = vunpack.c.l.b16 %v2548
    %v2844 = vunpack.c.h.b16 %v2548
    %v2845 = vunpack.c.l.b16 %v2549
    %v2846 = vunpack.c.h.b16 %v2549
    %v2847 = vunpack.c.l.b16 %v2550
    %v2848 = vunpack.c.l.b16 %v2551
    %v2849 = vunpack.c.h.b16 %v2551
    %v2850 = vunpack.c.l.b16 %v2552
    %v2851 = vunpack.c.h.b16 %v2552
    %v2852 = vunpack.c.l.b16 %v2553
    %v2853 = vunpack.c.l.b16 %v2554
    %v2854 = vunpack.c.h.b16 %v2554
    %v2855 = vunpack.c.l.b16 %v2555
    %v2856 = vunpack.c.h.b16 %v2555
    %v2857 = vunpack.c.l.b16 %v2556
    %v2858 = vunpack.c.l.b16 %v2557
    %v2859 = vunpack.c.h.b16 %v2557
    %v2860 = vunpack.c.l.b16 %v2558
    %v2861 = vunpack.c.h.b16 %v2558
    %v2862 = vunpack.c.l.b16 %v2559
    %v2863 = vunpack.c.l.b16 %v2560
    %v2864 = vunpack.c.h.b16 %v2560
    %v2865 = vunpack.c.l.b16 %v2561
    %v2866 = vunpack.c.h.b16 %v2561
    %v2867 = vunpack.c.l.b16 %v2562
    %v2868 = vunpack.c.l.b16 %v2563
    %v2869 = vunpack.c.h.b16 %v2563
    %v2870 = vunpack.c.l.b16 %v2564
    %v2871 = vunpack.c.h.b16 %v2564
    %v2872 = vunpack.c.l.b16 %v2565
    %v2873 = vunpack.c.l.b16 %v2566
    %v2874 = vunpack.c.h.b16 %v2566
    %v2875 = vunpack.c.l.b16 %v2567
    %v2876 = vunpack.c.h.b16 %v2567
    %v2877 = vunpack.c.l.b16 %v2568
    %v2878 = vunpack.c.l.b16 %v2569
    %v2879 = vunpack.c.h.b16 %v2569
    %v2880 = vunpack.c.l.b16 %v2570
    %v2881 = vunpack.c.h.b16 %v2570
    %v2882 = vunpack.c.l.b16 %v2571
    %v2883 = vunpack.c.l.b16 %v2572
    %v2884 = vunpack.c.h.b16 %v2572
    %v2885 = vunpack.c.l.b16 %v2573
    %v2886 = vunpack.c.h.b16 %v2573
    %v2887 = vunpack.c.l.b16 %v2574
    %v2888 = vunpack.c.l.b16 %v2575
    %v2889 = vunpack.c.h.b16 %v2575
    %v2890 = vunpack.c.l.b16 %v2576
    %v2891 = vunpack.c.h.b16 %v2576
    %v2892 = vunpack.c.l.b16 %v2577
    %v2893 = vunpack.c.l.b16 %v2578
    %v2894 = vunpack.c.h.b16 %v2578
    %v2895 = vunpack.c.l.b16 %v2579
    %v2896 = vunpack.c.h.b16 %v2579
    %v2897 = vunpack.c.l.b16 %v2580
    %v2898 = vunpack.c.l.b16 %v2581
    %v2899 = vunpack.c.h.b16 %v2581
    %v2900 = vunpack.c.l.b16 %v2582
    %v2901 = vunpack.c.h.b16 %v2582
    %v2902 = vunpack.c.l.b16 %v2583
    %v2903 = vunpack.c.l.b16 %v2584
    %v2904 = vunpack.c.h.b16 %v2584
    %v2905 = vunpack.c.l.b16 %v2585
    %v2906 = vunpack.c.h.b16 %v2585
    %v2907 = vunpack.c.l.b16 %v2586
    %v2908 = vpack.c.b16 %v2713, %v2708
    %v2909 = vpack.c.b16 %v2714, %v2709
    %v2910 = vpack.c.b16 %v2715, %v2710
    %v2911 = vpack.c.b16 %v2716, %v2711
    %v2912 = vpack.c.b16 %v2717, %v2712
    %v2913 = vpack.c.b16 %v2723, %v2718
    %v2914 = vpack.c.b16 %v2724, %v2719
    %v2915 = vpack.c.b16 %v2725, %v2720
    %v2916 = vpack.c.b16 %v2726, %v2721
    %v2917 = vpack.c.b16 %v2727, %v2722
    %v2918 = vpack.c.b16 %v2733, %v2728
    %v2919 = vpack.c.b16 %v2734, %v2729
    %v2920 = vpack.c.b16 %v2735, %v2730
    %v2921 = vpack.c.b16 %v2736, %v2731
    %v2922 = vpack.c.b16 %v2737, %v2732
    %v2923 = vpack.c.b16 %v2743, %v2738
    %v2924 = vpack.c.b16 %v2744, %v2739
    %v2925 = vpack.c.b16 %v2745, %v2740
    %v2926 = vpack.c.b16 %v2746, %v2741
    %v2927 = vpack.c.b16 %v2747, %v2742
    %v2928 = vpack.c.b16 %v2753, %v2748
    %v2929 = vpack.c.b16 %v2754, %v2749
    %v2930 = vpack.c.b16 %v2755, %v2750
    %v2931 = vpack.c.b16 %v2756, %v2751
    %v2932 = vpack.c.b16 %v2757, %v2752
    %v2933 = vpack.c.b16 %v2763, %v2758
    %v2934 = vpack.c.b16 %v2764, %v2759
    %v2935 = vpack.c.b16 %v2765, %v2760
    %v2936 = vpack.c.b16 %v2766, %v2761
    %v2937 = vpack.c.b16 %v2767, %v2762
    %v2938 = vpack.c.b16 %v2773, %v2768
    %v2939 = vpack.c.b16 %v2774, %v2769
    %v2940 = vpack.c.b16 %v2775, %v2770
    %v2941 = vpack.c.b16 %v2776, %v2771
    %v2942 = vpack.c.b16 %v2777, %v2772
    %v2943 = vpack.c.b16 %v2783, %v2778
    %v2944 = vpack.c.b16 %v2784, %v2779
    %v2945 = vpack.c.b16 %v2785, %v2780
    %v2946 = vpack.c.b16 %v2786, %v2781
    %v2947 = vpack.c.b16 %v2787, %v2782
    %v2948 = vpack.c.b16 %v2793, %v2788
    %v2949 = vpack.c.b16 %v2794, %v2789
    %v2950 = vpack.c.b16 %v2795, %v2790
    %v2951 = vpack.c.b16 %v2796, %v2791
    %v2952 = vpack.c.b16 %v2797, %v2792
    %v2953 = vpack.c.b16 %v2803, %v2798
    %v2954 = vpack.c.b16 %v2804, %v2799
    %v2955 = vpack.c.b16 %v2805, %v2800
    %v2956 = vpack.c.b16 %v2806, %v2801
    %v2957 = vpack.c.b16 %v2807, %v2802
    %v2958 = vpack.c.b16 %v2813, %v2808
    %v2959 = vpack.c.b16 %v2814, %v2809
    %v2960 = vpack.c.b16 %v2815, %v2810
    %v2961 = vpack.c.b16 %v2816, %v2811
    %v2962 = vpack.c.b16 %v2817, %v2812
    %v2963 = vpack.c.b16 %v2823, %v2818
    %v2964 = vpack.c.b16 %v2824, %v2819
    %v2965 = vpack.c.b16 %v2825, %v2820
    %v2966 = vpack.c.b16 %v2826, %v2821
    %v2967 = vpack.c.b16 %v2827, %v2822
    %v2968 = vpack.c.b16 %v2833, %v2828
    %v2969 = vpack.c.b16 %v2834, %v2829
    %v2970 = vpack.c.b16 %v2835, %v2830
    %v2971 = vpack.c.b16 %v2836, %v2831
    %v2972 = vpack.c.b16 %v2837, %v2832
    %v2973 = vpack.c.b16 %v2843, %v2838
    %v2974 = vpack.c.b16 %v2844, %v2839
    %v2975 = vpack.c.b16 %v2845, %v2840
    %v2976 = vpack.c.b16 %v2846, %v2841
    %v2977 = vpack.c.b16 %v2847, %v2842
    %v2978 = vpack.c.b16 %v2853, %v2848
    %v2979 = vpack.c.b16 %v2854, %v2849
    %v2980 = vpack.c.b16 %v2855, %v2850
    %v2981 = vpack.c.b16 %v2856, %v2851
    %v2982 = vpack.c.b16 %v2857, %v2852
    %v2983 = vpack.c.b16 %v2863, %v2858
    %v2984 = vpack.c.b16 %v2864, %v2859
    %v2985 = vpack.c.b16 %v2865, %v2860
    %v2986 = vpack.c.b16 %v2866, %v2861
    %v2987 = vpack.c.b16 %v2867, %v2862
    %v2988 = vpack.c.b16 %v2873, %v2868
    %v2989 = vpack.c.b16 %v2874, %v2869
    %v2990 = vpack.c.b16 %v2875, %v2870
    %v2991 = vpack.c.b16 %v2876, %v2871
    %v2992 = vpack.c.b16 %v2877, %v2872
    %v2993 = vpack.c.b16 %v2883, %v2878
    %v2994 = vpack.c.b16 %v2884, %v2879
    %v2995 = vpack.c.b16 %v2885, %v2880
    %v2996 = vpack.c.b16 %v2886, %v2881
    %v2997 = vpack.c.b16 %v2887, %v2882
    %v2998 = vpack.c.b16 %v2893, %v2888
    %v2999 = vpack.c.b16 %v2894, %v2889
    %v3000 = vpack.c.b16 %v2895, %v2890
    %v3001 = vpack.c.b16 %v2896, %v2891
    %v3002 = vpack.c.b16 %v2897, %v2892
    %v3003 = vpack.c.b16 %v2903, %v2898
    %v3004 = vpack.c.b16 %v2904, %v2899
    %v3005 = vpack.c.b16 %v2905, %v2900
    %v3006 = vpack.c.b16 %v2906, %v2901
    %v3007 = vpack.c.b16 %v2907, %v2902
    %v3109 = vperm.slane %v2587, 0
    %v3110 = vperm.slane %v2587, 1
    %v3111 = vperm.slane %v2587, 2
    %v3112 = vperm.slane %v2587, 3
    %v3113 = vperm.slane %v2587, 4
    %v3120 = vsel %vm2208, %v2466, 0
    %3122 = vmatpush.bf16.msra.mxu0 %v2943
    %3123 = vmatpush.bf16.msra.mxu0 %v2938
    %3124 = vmatpush.bf16.msra.mxu0 %v2933
    %3125 = vmatpush.bf16.msra.mxu0 %v2928
    %3126 = vmatpush.bf16.msra.mxu0 %v2923
    %3127 = vmatpush.bf16.msra.mxu0 %v2918
    %3128 = vmatpush.bf16.msra.mxu0 %v2913
    %3129 = vmatpush.bf16.msra.mxu0 %v2908
    %3130 = vmatmul.bf16.gmra.mxu0 %v2464
    %v3131 = vpop.f32.mrf.mxu0
    %v3132 = vadd.f32 %v3109, %v3131
    %v3133 = vpop.f32.mrf.mxu0
    %3134 = vdwg.mxu0
    %3135 = vmatpush.bf16.msra.mxu0 %v2983
    %3136 = vmatpush.bf16.msra.mxu0 %v2978
    %3137 = vmatpush.bf16.msra.mxu0 %v2973
    %3138 = vmatpush.bf16.msra.mxu0 %v2968
    %3139 = vmatpush.bf16.msra.mxu0 %v2963
    %3140 = vmatpush.bf16.msra.mxu0 %v2958
    %3141 = vmatpush.bf16.msra.mxu0 %v2953
    %3142 = vmatpush.bf16.msra.mxu0 %v2948
    %3143 = vmatmul.bf16.gmra.mxu0 %v2465
    %v3144 = vpop.f32.mrf.mxu0
    %v3145 = vadd.f32 %v3132, %v3144
    %v3146 = vpop.f32.mrf.mxu0
    %3147 = vdwg.mxu0
    %3148 = vmatpush.bf16.msra.mxu0 0
    %3149 = vmatpush.bf16.msra.mxu0 0
    %3150 = vmatpush.bf16.msra.mxu0 0
    %3151 = vmatpush.bf16.msra.mxu0 0
    %3152 = vmatpush.bf16.msra.mxu0 %v3003
    %3153 = vmatpush.bf16.msra.mxu0 %v2998
    %3154 = vmatpush.bf16.msra.mxu0 %v2993
    %3155 = vmatpush.bf16.msra.mxu0 %v2988
    %3156 = vmatmul.bf16.gmra.mxu0 %v3120
    %v3157 = vpop.f32.mrf.mxu0
    %v3158 = vadd.f32 %v3145, %v3157
    %v3159 = vpop.f32.mrf.mxu0
    %3160 = vdwg.mxu0
    %3161 = vmatpush.bf16.msra.mxu0 %v2944
    %3162 = vmatpush.bf16.msra.mxu0 %v2939
    %3163 = vmatpush.bf16.msra.mxu0 %v2934
    %3164 = vmatpush.bf16.msra.mxu0 %v2929
    %3165 = vmatpush.bf16.msra.mxu0 %v2924
    %3166 = vmatpush.bf16.msra.mxu0 %v2919
    %3167 = vmatpush.bf16.msra.mxu0 %v2914
    %3168 = vmatpush.bf16.msra.mxu0 %v2909
    %3169 = vmatmul.bf16.gmra.mxu0 %v2464
    %v3170 = vpop.f32.mrf.mxu0
    %v3171 = vadd.f32 %v3110, %v3170
    %v3172 = vpop.f32.mrf.mxu0
    %3173 = vdwg.mxu0
    %3174 = vmatpush.bf16.msra.mxu0 %v2984
    %3175 = vmatpush.bf16.msra.mxu0 %v2979
    %3176 = vmatpush.bf16.msra.mxu0 %v2974
    %3177 = vmatpush.bf16.msra.mxu0 %v2969
    %3178 = vmatpush.bf16.msra.mxu0 %v2964
    %3179 = vmatpush.bf16.msra.mxu0 %v2959
    %3180 = vmatpush.bf16.msra.mxu0 %v2954
    %3181 = vmatpush.bf16.msra.mxu0 %v2949
    %3182 = vmatmul.bf16.gmra.mxu0 %v2465
    %v3183 = vpop.f32.mrf.mxu0
    %v3184 = vadd.f32 %v3171, %v3183
    %v3185 = vpop.f32.mrf.mxu0
    %3186 = vdwg.mxu0
    %3187 = vmatpush.bf16.msra.mxu0 0
    %3188 = vmatpush.bf16.msra.mxu0 0
    %3189 = vmatpush.bf16.msra.mxu0 0
    %3190 = vmatpush.bf16.msra.mxu0 0
    %3191 = vmatpush.bf16.msra.mxu0 %v3004
    %3192 = vmatpush.bf16.msra.mxu0 %v2999
    %3193 = vmatpush.bf16.msra.mxu0 %v2994
    %3194 = vmatpush.bf16.msra.mxu0 %v2989
    %3195 = vmatmul.bf16.gmra.mxu0 %v3120
    %v3196 = vpop.f32.mrf.mxu0
    %v3197 = vadd.f32 %v3184, %v3196
    %v3198 = vpop.f32.mrf.mxu0
    %3199 = vdwg.mxu0
    %3200 = vmatpush.bf16.msra.mxu0 %v2945
    %3201 = vmatpush.bf16.msra.mxu0 %v2940
    %3202 = vmatpush.bf16.msra.mxu0 %v2935
    %3203 = vmatpush.bf16.msra.mxu0 %v2930
    %3204 = vmatpush.bf16.msra.mxu0 %v2925
    %3205 = vmatpush.bf16.msra.mxu0 %v2920
    %3206 = vmatpush.bf16.msra.mxu0 %v2915
    %3207 = vmatpush.bf16.msra.mxu0 %v2910
    %3208 = vmatmul.bf16.gmra.mxu0 %v2464
    %v3209 = vpop.f32.mrf.mxu0
    %v3210 = vadd.f32 %v3111, %v3209
    %v3211 = vpop.f32.mrf.mxu0
    %3212 = vdwg.mxu0
    %3213 = vmatpush.bf16.msra.mxu0 %v2985
    %3214 = vmatpush.bf16.msra.mxu0 %v2980
    %3215 = vmatpush.bf16.msra.mxu0 %v2975
    %3216 = vmatpush.bf16.msra.mxu0 %v2970
    %3217 = vmatpush.bf16.msra.mxu0 %v2965
    %3218 = vmatpush.bf16.msra.mxu0 %v2960
    %3219 = vmatpush.bf16.msra.mxu0 %v2955
    %3220 = vmatpush.bf16.msra.mxu0 %v2950
    %3221 = vmatmul.bf16.gmra.mxu0 %v2465
    %v3222 = vpop.f32.mrf.mxu0
    %v3223 = vadd.f32 %v3210, %v3222
    %v3224 = vpop.f32.mrf.mxu0
    %3225 = vdwg.mxu0
    %3226 = vmatpush.bf16.msra.mxu0 0
    %3227 = vmatpush.bf16.msra.mxu0 0
    %3228 = vmatpush.bf16.msra.mxu0 0
    %3229 = vmatpush.bf16.msra.mxu0 0
    %3230 = vmatpush.bf16.msra.mxu0 %v3005
    %3231 = vmatpush.bf16.msra.mxu0 %v3000
    %3232 = vmatpush.bf16.msra.mxu0 %v2995
    %3233 = vmatpush.bf16.msra.mxu0 %v2990
    %3234 = vmatmul.bf16.gmra.mxu0 %v3120
    %v3235 = vpop.f32.mrf.mxu0
    %v3236 = vadd.f32 %v3223, %v3235
    %v3237 = vpop.f32.mrf.mxu0
    %3238 = vdwg.mxu0
    %3239 = vmatpush.bf16.msra.mxu0 %v2946
    %3240 = vmatpush.bf16.msra.mxu0 %v2941
    %3241 = vmatpush.bf16.msra.mxu0 %v2936
    %3242 = vmatpush.bf16.msra.mxu0 %v2931
    %3243 = vmatpush.bf16.msra.mxu0 %v2926
    %3244 = vmatpush.bf16.msra.mxu0 %v2921
    %3245 = vmatpush.bf16.msra.mxu0 %v2916
    %3246 = vmatpush.bf16.msra.mxu0 %v2911
    %3247 = vmatmul.bf16.gmra.mxu0 %v2464
    %v3248 = vpop.f32.mrf.mxu0
    %v3249 = vadd.f32 %v3112, %v3248
    %v3250 = vpop.f32.mrf.mxu0
    %3251 = vdwg.mxu0
    %3252 = vmatpush.bf16.msra.mxu0 %v2986
    %3253 = vmatpush.bf16.msra.mxu0 %v2981
    %3254 = vmatpush.bf16.msra.mxu0 %v2976
    %3255 = vmatpush.bf16.msra.mxu0 %v2971
    %3256 = vmatpush.bf16.msra.mxu0 %v2966
    %3257 = vmatpush.bf16.msra.mxu0 %v2961
    %3258 = vmatpush.bf16.msra.mxu0 %v2956
    %3259 = vmatpush.bf16.msra.mxu0 %v2951
    %3260 = vmatmul.bf16.gmra.mxu0 %v2465
    %v3261 = vpop.f32.mrf.mxu0
    %v3262 = vadd.f32 %v3249, %v3261
    %v3263 = vpop.f32.mrf.mxu0
    %3264 = vdwg.mxu0
    %3265 = vmatpush.bf16.msra.mxu0 0
    %3266 = vmatpush.bf16.msra.mxu0 0
    %3267 = vmatpush.bf16.msra.mxu0 0
    %3268 = vmatpush.bf16.msra.mxu0 0
    %3269 = vmatpush.bf16.msra.mxu0 %v3006
    %3270 = vmatpush.bf16.msra.mxu0 %v3001
    %3271 = vmatpush.bf16.msra.mxu0 %v2996
    %3272 = vmatpush.bf16.msra.mxu0 %v2991
    %3273 = vmatmul.bf16.gmra.mxu0 %v3120
    %v3274 = vpop.f32.mrf.mxu0
    %v3275 = vadd.f32 %v3262, %v3274
    %v3276 = vpop.f32.mrf.mxu0
    %3277 = vdwg.mxu0
    %3278 = vmatpush.bf16.msra.mxu0 %v2947
    %3279 = vmatpush.bf16.msra.mxu0 %v2942
    %3280 = vmatpush.bf16.msra.mxu0 %v2937
    %3281 = vmatpush.bf16.msra.mxu0 %v2932
    %3282 = vmatpush.bf16.msra.mxu0 %v2927
    %3283 = vmatpush.bf16.msra.mxu0 %v2922
    %3284 = vmatpush.bf16.msra.mxu0 %v2917
    %3285 = vmatpush.bf16.msra.mxu0 %v2912
    %3286 = vmatmul.bf16.gmra.mxu0 %v2464
    %v3287 = vpop.f32.mrf.mxu0
    %v3288 = vadd.f32 %v3113, %v3287
    %v3289 = vpop.f32.mrf.mxu0
    %3290 = vdwg.mxu0
    %3291 = vmatpush.bf16.msra.mxu0 %v2987
    %3292 = vmatpush.bf16.msra.mxu0 %v2982
    %3293 = vmatpush.bf16.msra.mxu0 %v2977
    %3294 = vmatpush.bf16.msra.mxu0 %v2972
    %3295 = vmatpush.bf16.msra.mxu0 %v2967
    %3296 = vmatpush.bf16.msra.mxu0 %v2962
    %3297 = vmatpush.bf16.msra.mxu0 %v2957
    %3298 = vmatpush.bf16.msra.mxu0 %v2952
    %3299 = vmatmul.bf16.gmra.mxu0 %v2465
    %v3300 = vpop.f32.mrf.mxu0
    %v3301 = vadd.f32 %v3288, %v3300
    %v3302 = vpop.f32.mrf.mxu0
    %3303 = vdwg.mxu0
    %3304 = vmatpush.bf16.msra.mxu0 0
    %3305 = vmatpush.bf16.msra.mxu0 0
    %3306 = vmatpush.bf16.msra.mxu0 0
    %3307 = vmatpush.bf16.msra.mxu0 0
    %3308 = vmatpush.bf16.msra.mxu0 %v3007
    %3309 = vmatpush.bf16.msra.mxu0 %v3002
    %3310 = vmatpush.bf16.msra.mxu0 %v2997
    %3311 = vmatpush.bf16.msra.mxu0 %v2992
    %3312 = vmatmul.bf16.gmra.mxu0 %v3120
    %v3313 = vpop.f32.mrf.mxu0
    %v3314 = vadd.f32 %v3301, %v3313
    %v3315 = vpop.f32.mrf.mxu0
    %3316 = vdwg.mxu0
    %v3317 = vmax.f32 %v3158, 0.0
    %v3318 = vmax.f32 %v3197, 0.0
    %v3319 = vmax.f32 %v3236, 0.0
    %v3320 = vmax.f32 %v3275, 0.0
    %v3321 = vmax.f32 %v3314, 0.0
    %v3322 = vpack.c.bf16 %v3317, %v3317
    %v3323 = vpack.c.bf16 %v3318, %v3318
    %v3324 = vpack.c.bf16 %v3319, %v3319
    %v3325 = vpack.c.bf16 %v3320, %v3320
    %v3326 = vpack.c.bf16 %v3321, %v3321
    %v3327 = vld [vmem:[%s17] sm:$0xf]
    %v3328 = vld [vmem:[%s17 + $0x4] sm:$0xf]
    %v3329 = vld [vmem:[%s17 + $0x8] sm:$0xf]
    %v3330 = vld [vmem:[%s17 + $0xc] sm:$0xf]
    %v3331 = vld [vmem:[%s17 + $0x10] sm:$0xf]
    %v3332 = vld [vmem:[%s17 + $0x14] sm:$0xf]
    %v3333 = vld [vmem:[%s17 + $0x18] sm:$0xf]
    %v3334 = vld [vmem:[%s17 + $0x1c] sm:$0xf]
    %v3335 = vld [vmem:[%s17 + $0x20] sm:$0xf]
    %v3336 = vld [vmem:[%s17 + $0x24] sm:$0xf]
    %v3337 = vld [vmem:[%s17 + $0x28] sm:$0xf]
    %v3338 = vld [vmem:[%s17 + $0x2c] sm:$0xf]
    %v3339 = vld [vmem:[%s17 + $0x30] sm:$0xf]
    %v3340 = vld [vmem:[%s17 + $0x34] sm:$0xf]
    %v3341 = vld [vmem:[%s17 + $0x38] sm:$0xf]
    %v3342 = vld [vmem:[%s17 + $0x3c] sm:$0xf]
    %v3343 = vld [vmem:[%s17 + $0x40] sm:$0xf]
    %v3344 = vld [vmem:[%s17 + $0x44] sm:$0xf]
    %v3345 = vld [vmem:[%s17 + $0x48] sm:$0xf]
    %v3346 = vld [vmem:[%s17 + $0x4c] sm:$0xf]
    %v3347 = vld [vmem:[%s17 + $0x50] sm:$0xf]
    %v3348 = vld [vmem:[%s17 + $0x54] sm:$0xf]
    %v3349 = vld [vmem:[%s17 + $0x58] sm:$0xf]
    %v3350 = vld [vmem:[%s17 + $0x5c] sm:$0xf]
    %v3351 = vld [vmem:[%s17 + $0x60] sm:$0xf]
    %v3352 = vld [vmem:[%s17 + $0x64] sm:$0xf]
    %v3353 = vld [vmem:[%s17 + $0x68] sm:$0xf]
    %v3354 = vld [vmem:[%s17 + $0x6c] sm:$0xf]
    %v3355 = vld [vmem:[%s17 + $0x70] sm:$0xf]
    %v3356 = vld [vmem:[%s17 + $0x74] sm:$0xf]
    %v3357 = vld [vmem:[%s17 + $0x78] sm:$0xf]
    %v3358 = vld [vmem:[%s17 + $0x7c] sm:$0xf]
    %v3359 = vld [vmem:[%s17 + $0x80] sm:$0xf]
    %v3360 = vld [vmem:[%s17 + $0x84] sm:$0xf]
    %v3361 = vld [vmem:[%s17 + $0x88] sm:$0xf]
    %v3362 = vld [vmem:[%s17 + $0x8c] sm:$0xf]
    %v3363 = vld [vmem:[%s17 + $0x90] sm:$0xf]
    %v3364 = vld [vmem:[%s17 + $0x94] sm:$0xf]
    %v3365 = vld [vmem:[%s17 + $0x98] sm:$0xf]
    %v3366 = vld [vmem:[%s17 + $0x9c] sm:$0xf]
    %v3367 = vld [vmem:[%s17 + $0xa0] sm:$0xf]
    %v3368 = vld [vmem:[%s17 + $0xa4] sm:$0xf]
    %v3369 = vld [vmem:[%s17 + $0xa8] sm:$0xf]
    %v3370 = vld [vmem:[%s17 + $0xac] sm:$0xf]
    %v3371 = vld [vmem:[%s17 + $0xb0] sm:$0xf]
    %v3372 = vld [vmem:[%s17 + $0xb4] sm:$0xf]
    %v3373 = vld [vmem:[%s17 + $0xb8] sm:$0xf]
    %v3374 = vld [vmem:[%s17 + $0xbc] sm:$0xf]
    %v3375 = vld [vmem:[%s17 + $0xc0] sm:$0xf]
    %v3376 = vld [vmem:[%s17 + $0xc4] sm:$0xf]
    %v3377 = vld [vmem:[%s17 + $0xc8] sm:$0xf]
    %v3378 = vld [vmem:[%s17 + $0xcc] sm:$0xf]
    %v3379 = vld [vmem:[%s17 + $0xd0] sm:$0xf]
    %v3380 = vld [vmem:[%s17 + $0xd4] sm:$0xf]
    %v3381 = vld [vmem:[%s17 + $0xd8] sm:$0xf]
    %v3382 = vld [vmem:[%s17 + $0xdc] sm:$0xf]
    %v3383 = vld [vmem:[%s17 + $0xe0] sm:$0xf]
    %v3384 = vld [vmem:[%s17 + $0xe4] sm:$0xf]
    %v3385 = vld [vmem:[%s17 + $0xe8] sm:$0xf]
    %v3386 = vld [vmem:[%s17 + $0xec] sm:$0xf]
    %v3387 = vld [vmem:[%s17 + $0xf0] sm:$0xf]
    %v3388 = vld [vmem:[%s17 + $0xf4] sm:$0xf]
    %v3389 = vld [vmem:[%s17 + $0xf8] sm:$0xf]
    %v3390 = vld [vmem:[%s17 + $0xfc] sm:$0xf]
    %v3391 = vld [vmem:[%s17 + $0x100] sm:$0xf]
    %v3392 = vld [vmem:[%s17 + $0x104] sm:$0xf]
    %v3393 = vld [vmem:[%s17 + $0x108] sm:$0xf]
    %v3394 = vld [vmem:[%s17 + $0x10c] sm:$0xf]
    %v3395 = vld [vmem:[%s17 + $0x110] sm:$0xf]
    %v3396 = vld [vmem:[%s17 + $0x114] sm:$0xf]
    %v3397 = vld [vmem:[%s17 + $0x118] sm:$0xf]
    %v3398 = vld [vmem:[%s17 + $0x11c] sm:$0xf]
    %v3399 = vld [vmem:[%s17 + $0x120] sm:$0xf]
    %v3400 = vld [vmem:[%s17 + $0x124] sm:$0xf]
    %v3401 = vld [vmem:[%s17 + $0x128] sm:$0xf]
    %v3402 = vld [vmem:[%s17 + $0x12c] sm:$0xf]
    %v3403 = vld [vmem:[%s17 + $0x130] sm:$0xf]
    %v3404 = vld [vmem:[%s17 + $0x134] sm:$0xf]
    %v3405 = vld [vmem:[%s17 + $0x138] sm:$0xf]
    %v3406 = vld [vmem:[%s17 + $0x13c] sm:$0xf]
    %v3407 = vld [vmem:[%s18] sm:$0x1]
    %v3488 = vunpack.c.l.b16 %v3327
    %v3489 = vunpack.c.l.b16 %v3328
    %v3490 = vunpack.c.l.b16 %v3329
    %v3491 = vunpack.c.l.b16 %v3330
    %v3492 = vunpack.c.l.b16 %v3331
    %v3493 = vunpack.c.l.b16 %v3332
    %v3494 = vunpack.c.l.b16 %v3333
    %v3495 = vunpack.c.l.b16 %v3334
    %v3496 = vunpack.c.l.b16 %v3335
    %v3497 = vunpack.c.l.b16 %v3336
    %v3498 = vunpack.c.l.b16 %v3337
    %v3499 = vunpack.c.l.b16 %v3338
    %v3500 = vunpack.c.l.b16 %v3339
    %v3501 = vunpack.c.l.b16 %v3340
    %v3502 = vunpack.c.l.b16 %v3341
    %v3503 = vunpack.c.l.b16 %v3342
    %v3504 = vunpack.c.l.b16 %v3343
    %v3505 = vunpack.c.l.b16 %v3344
    %v3506 = vunpack.c.l.b16 %v3345
    %v3507 = vunpack.c.l.b16 %v3346
    %v3508 = vunpack.c.l.b16 %v3347
    %v3509 = vunpack.c.l.b16 %v3348
    %v3510 = vunpack.c.l.b16 %v3349
    %v3511 = vunpack.c.l.b16 %v3350
    %v3512 = vunpack.c.l.b16 %v3351
    %v3513 = vunpack.c.l.b16 %v3352
    %v3514 = vunpack.c.l.b16 %v3353
    %v3515 = vunpack.c.l.b16 %v3354
    %v3516 = vunpack.c.l.b16 %v3355
    %v3517 = vunpack.c.l.b16 %v3356
    %v3518 = vunpack.c.l.b16 %v3357
    %v3519 = vunpack.c.l.b16 %v3358
    %v3520 = vunpack.c.l.b16 %v3359
    %v3521 = vunpack.c.l.b16 %v3360
    %v3522 = vunpack.c.l.b16 %v3361
    %v3523 = vunpack.c.l.b16 %v3362
    %v3524 = vunpack.c.l.b16 %v3363
    %v3525 = vunpack.c.l.b16 %v3364
    %v3526 = vunpack.c.l.b16 %v3365
    %v3527 = vunpack.c.l.b16 %v3366
    %v3528 = vunpack.c.l.b16 %v3367
    %v3529 = vunpack.c.l.b16 %v3368
    %v3530 = vunpack.c.l.b16 %v3369
    %v3531 = vunpack.c.l.b16 %v3370
    %v3532 = vunpack.c.l.b16 %v3371
    %v3533 = vunpack.c.l.b16 %v3372
    %v3534 = vunpack.c.l.b16 %v3373
    %v3535 = vunpack.c.l.b16 %v3374
    %v3536 = vunpack.c.l.b16 %v3375
    %v3537 = vunpack.c.l.b16 %v3376
    %v3538 = vunpack.c.l.b16 %v3377
    %v3539 = vunpack.c.l.b16 %v3378
    %v3540 = vunpack.c.l.b16 %v3379
    %v3541 = vunpack.c.l.b16 %v3380
    %v3542 = vunpack.c.l.b16 %v3381
    %v3543 = vunpack.c.l.b16 %v3382
    %v3544 = vunpack.c.l.b16 %v3383
    %v3545 = vunpack.c.l.b16 %v3384
    %v3546 = vunpack.c.l.b16 %v3385
    %v3547 = vunpack.c.l.b16 %v3386
    %v3548 = vunpack.c.l.b16 %v3387
    %v3549 = vunpack.c.l.b16 %v3388
    %v3550 = vunpack.c.l.b16 %v3389
    %v3551 = vunpack.c.l.b16 %v3390
    %v3552 = vunpack.c.l.b16 %v3391
    %v3553 = vunpack.c.l.b16 %v3392
    %v3554 = vunpack.c.l.b16 %v3393
    %v3555 = vunpack.c.l.b16 %v3394
    %v3556 = vunpack.c.l.b16 %v3395
    %v3557 = vunpack.c.l.b16 %v3396
    %v3558 = vunpack.c.l.b16 %v3397
    %v3559 = vunpack.c.l.b16 %v3398
    %v3560 = vunpack.c.l.b16 %v3399
    %v3561 = vunpack.c.l.b16 %v3400
    %v3562 = vunpack.c.l.b16 %v3401
    %v3563 = vunpack.c.l.b16 %v3402
    %v3564 = vunpack.c.l.b16 %v3403
    %v3565 = vunpack.c.l.b16 %v3404
    %v3566 = vunpack.c.l.b16 %v3405
    %v3567 = vunpack.c.l.b16 %v3406
    %v3568 = vpack.c.b16 %v3489, %v3488
    %v3569 = vpack.c.b16 %v3491, %v3490
    %v3570 = vpack.c.b16 %v3493, %v3492
    %v3571 = vpack.c.b16 %v3495, %v3494
    %v3572 = vpack.c.b16 %v3497, %v3496
    %v3573 = vpack.c.b16 %v3499, %v3498
    %v3574 = vpack.c.b16 %v3501, %v3500
    %v3575 = vpack.c.b16 %v3503, %v3502
    %v3576 = vpack.c.b16 %v3505, %v3504
    %v3577 = vpack.c.b16 %v3507, %v3506
    %v3578 = vpack.c.b16 %v3509, %v3508
    %v3579 = vpack.c.b16 %v3511, %v3510
    %v3580 = vpack.c.b16 %v3513, %v3512
    %v3581 = vpack.c.b16 %v3515, %v3514
    %v3582 = vpack.c.b16 %v3517, %v3516
    %v3583 = vpack.c.b16 %v3519, %v3518
    %v3584 = vpack.c.b16 %v3521, %v3520
    %v3585 = vpack.c.b16 %v3523, %v3522
    %v3586 = vpack.c.b16 %v3525, %v3524
    %v3587 = vpack.c.b16 %v3527, %v3526
    %v3588 = vpack.c.b16 %v3529, %v3528
    %v3589 = vpack.c.b16 %v3531, %v3530
    %v3590 = vpack.c.b16 %v3533, %v3532
    %v3591 = vpack.c.b16 %v3535, %v3534
    %v3592 = vpack.c.b16 %v3537, %v3536
    %v3593 = vpack.c.b16 %v3539, %v3538
    %v3594 = vpack.c.b16 %v3541, %v3540
    %v3595 = vpack.c.b16 %v3543, %v3542
    %v3596 = vpack.c.b16 %v3545, %v3544
    %v3597 = vpack.c.b16 %v3547, %v3546
    %v3598 = vpack.c.b16 %v3549, %v3548
    %v3599 = vpack.c.b16 %v3551, %v3550
    %v3600 = vpack.c.b16 %v3553, %v3552
    %v3601 = vpack.c.b16 %v3555, %v3554
    %v3602 = vpack.c.b16 %v3557, %v3556
    %v3603 = vpack.c.b16 %v3559, %v3558
    %v3604 = vpack.c.b16 %v3561, %v3560
    %v3605 = vpack.c.b16 %v3563, %v3562
    %v3606 = vpack.c.b16 %v3565, %v3564
    %v3607 = vpack.c.b16 %v3567, %v3566
    %3648 = vmatpush.bf16.msra.mxu0 %v3575
    %3649 = vmatpush.bf16.msra.mxu0 %v3574
    %3650 = vmatpush.bf16.msra.mxu0 %v3573
    %3651 = vmatpush.bf16.msra.mxu0 %v3572
    %3652 = vmatpush.bf16.msra.mxu0 %v3571
    %3653 = vmatpush.bf16.msra.mxu0 %v3570
    %3654 = vmatpush.bf16.msra.mxu0 %v3569
    %3655 = vmatpush.bf16.msra.mxu0 %v3568
    %3656 = vmatmul.bf16.gmra.mxu0 %v3322
    %v3657 = vpop.f32.mrf.mxu0
    %v3658 = vadd.f32 %v3407, %v3657
    %v3659 = vpop.f32.mrf.mxu0
    %3660 = vdwg.mxu0
    %3661 = vmatpush.bf16.msra.mxu0 %v3583
    %3662 = vmatpush.bf16.msra.mxu0 %v3582
    %3663 = vmatpush.bf16.msra.mxu0 %v3581
    %3664 = vmatpush.bf16.msra.mxu0 %v3580
    %3665 = vmatpush.bf16.msra.mxu0 %v3579
    %3666 = vmatpush.bf16.msra.mxu0 %v3578
    %3667 = vmatpush.bf16.msra.mxu0 %v3577
    %3668 = vmatpush.bf16.msra.mxu0 %v3576
    %3669 = vmatmul.bf16.gmra.mxu0 %v3323
    %v3670 = vpop.f32.mrf.mxu0
    %v3671 = vadd.f32 %v3658, %v3670
    %v3672 = vpop.f32.mrf.mxu0
    %3673 = vdwg.mxu0
    %3674 = vmatpush.bf16.msra.mxu0 %v3591
    %3675 = vmatpush.bf16.msra.mxu0 %v3590
    %3676 = vmatpush.bf16.msra.mxu0 %v3589
    %3677 = vmatpush.bf16.msra.mxu0 %v3588
    %3678 = vmatpush.bf16.msra.mxu0 %v3587
    %3679 = vmatpush.bf16.msra.mxu0 %v3586
    %3680 = vmatpush.bf16.msra.mxu0 %v3585
    %3681 = vmatpush.bf16.msra.mxu0 %v3584
    %3682 = vmatmul.bf16.gmra.mxu0 %v3324
    %v3683 = vpop.f32.mrf.mxu0
    %v3684 = vadd.f32 %v3671, %v3683
    %v3685 = vpop.f32.mrf.mxu0
    %3686 = vdwg.mxu0
    %3687 = vmatpush.bf16.msra.mxu0 %v3599
    %3688 = vmatpush.bf16.msra.mxu0 %v3598
    %3689 = vmatpush.bf16.msra.mxu0 %v3597
    %3690 = vmatpush.bf16.msra.mxu0 %v3596
    %3691 = vmatpush.bf16.msra.mxu0 %v3595
    %3692 = vmatpush.bf16.msra.mxu0 %v3594
    %3693 = vmatpush.bf16.msra.mxu0 %v3593
    %3694 = vmatpush.bf16.msra.mxu0 %v3592
    %3695 = vmatmul.bf16.gmra.mxu0 %v3325
    %v3696 = vpop.f32.mrf.mxu0
    %v3697 = vadd.f32 %v3684, %v3696
    %v3698 = vpop.f32.mrf.mxu0
    %3699 = vdwg.mxu0
    %3700 = vmatpush.bf16.msra.mxu0 %v3607
    %3701 = vmatpush.bf16.msra.mxu0 %v3606
    %3702 = vmatpush.bf16.msra.mxu0 %v3605
    %3703 = vmatpush.bf16.msra.mxu0 %v3604
    %3704 = vmatpush.bf16.msra.mxu0 %v3603
    %3705 = vmatpush.bf16.msra.mxu0 %v3602
    %3706 = vmatpush.bf16.msra.mxu0 %v3601
    %3707 = vmatpush.bf16.msra.mxu0 %v3600
    %3708 = vmatmul.bf16.gmra.mxu0 %v3326
    %v3709 = vpop.f32.mrf.mxu0
    %v3710 = vadd.f32 %v3697, %v3709
    %v3711 = vpop.f32.mrf.mxu0
    %3712 = vdwg.mxu0
    %vm3713 = vcmask 73728
    %v3714 = vsel %vm3713, %v3710, -inf
    %3715 = vmax.xlane.f32.xlu0 %v3714
    %v3716 = vpop.xlane.xlu0 %3715
    %v3717 = vsub.f32 %v3710, %v3716
    %v3718 = vmul.f32 %v3717, 1.442695
    %v3719 = vpow.pop %v3718
    %v3720 = vsel %vm3713, %v3719, 0.0
    %3721 = vadd.xlane.f32.xlu0 %v3720
    %v3722 = vpop.xlane.xlu0 %3721
    %v3723 = vrcp.pop %v3722
    %v3724 = vmul.f32 %v3722, %v3723
    %v3725 = vsub.f32 1.0, %v3724
    %v3726 = vmul.f32 %v3723, %v3725
    %v3727 = vadd.f32 %v3723, %v3726
    %vm3728 = vweird.f32 %v3722
    %vm3729 = vweird.f32 %v3723
    %vm3730 = vmor %vm3728, %vm3729
    %v3731 = vsel %vm3730, %v3723, %v3727
    %v3732 = vand.u32 2147483647, %v3722
    %vm3733 = vcmp.eq.f32.partialorder %v3732, 8.507059e+37
    %v3734 = vand.u32 %v3722, 2147483648
    %v3735 = vor.u32 1.1754944e-38, %v3734
    %v3736 = vsel %vm3733, %v3735, %v3731
    %v3737 = vmul.f32 %v3719, %v3736
    %3738 = vst.msk [vmem:[#allocation2] sm:$0x1] %vm3713, %v3737
    // Predicated region
    $region78: #{inference_net.1} parent=1 // pred_check
      _
    $region79: #{inference_net.1} parent=1 // pred_check_branch
      %3740 = sbr.rel (0) target = $region81
    $region80: #{inference_net.1} parent=1 // pred_region
      %3742 = vsyncadd [#allocation3], 0
      %s3744 = sshll.u32 [#allocation2], 4
      %s3745 = int_to_ptr.vmem [resolvable:$true] %s3744
      %s3746 = sshll.u32 %s19, 4
      %s3747 = int_to_ptr.hbm [resolvable:$true] %s3746
      %3749 = dma.vmem_to_hbm [thread:$0]  %s3745, 16, %s3747, [#allocation3]
    $region81: #{inference_net.1} parent=1 // pred_fallthru
      _
    // Predicated region
    $region82: #{inference_net.1} parent=1 // pred_check
      _
    $region83: #{inference_net.1} parent=1 // pred_check_branch
      %3751 = sbr.rel (0) target = $region85
    $region84: #{inference_net.1} parent=1 // pred_region
      %3753 = dma.done [#allocation3], 16
    $region85: #{inference_net.1} parent=1 // pred_fallthru
      _
    %3754 = vsyncpa [#allocation3], 1

</llo_original>
